<compile_context>
chip_gen: v6e
topology: v6e:2x2x1
jax: 0.10.0
libtpu: 0.0.40
codegen_flags: <defaults>
</compile_context>

<pallas_src>
import functools

import jax
import jax.numpy as jnp
from jax.experimental import pallas as pl
from jax.experimental.pallas import tpu as pltpu

_EXPANSION = 4
_EPS = 1e-5
_SLACK = 8  # slack rows at each end of the stage-1 scratch (cover the +-1 taps)


# ---------------------------------------------------------------------------
# Fully fused Bottleneck kernel: one (image, row-block) per grid step
# ---------------------------------------------------------------------------
def _bottleneck_kernel(x_ref, w1_ref, b1_ref, w2_ref, b2_ref, w3_ref, b3_ref,
                       o_ref, y1_ref, *, W, R, Cmid, num_rb):
    r = pl.program_id(1)
    M = R * W  # rows of this output block (flattened over (R, W))

    # ---- Stage 1: 1x1 conv (BN scale folded into w1) + bias + ReLU for the
    #      R interior rows and the two halo rows of this row block.  Scratch
    #      data row d corresponds to image row (r*R - 1 + d//W).
    def conv1_rows(x_start, nrows):
        xa = x_ref[0, pl.ds(x_start, nrows), :]              # bf16
        y = jnp.dot(xa, w1_ref[...], preferred_element_type=jnp.float32)
        return jnp.maximum(y + b1_ref[...], 0.0)

    base_x = r * M
    if (M % 8) == 0:
        base_x = pl.multiple_of(base_x, 8)
    x_rows = x_ref[0, pl.ds(base_x, M), :]                    # reused for residual
    y1_int = jnp.dot(x_rows, w1_ref[...], preferred_element_type=jnp.float32)
    y1_ref[_SLACK + W:_SLACK + W + M, :] = jnp.maximum(y1_int + b1_ref[...], 0.0)

    # top halo row (image row r*R - 1): zero at the image boundary
    @pl.when(r == 0)
    def _():
        y1_ref[_SLACK:_SLACK + W, :] = jnp.zeros((W, Cmid), jnp.float32)

    @pl.when(r > 0)
    def _():
        top_x = (r * R - 1) * W
        if (W % 8) == 0:
            top_x = pl.multiple_of(top_x, 8)
        y1_ref[_SLACK:_SLACK + W, :] = conv1_rows(top_x, W)

    # bottom halo row (image row r*R + R): zero at the image boundary
    @pl.when(r == num_rb - 1)
    def _():
        y1_ref[_SLACK + W + M:_SLACK + (R + 2) * W, :] = \
            jnp.zeros((W, Cmid), jnp.float32)

    @pl.when(r < num_rb - 1)
    def _():
        bot_x = (r * R + R) * W
        if (W % 8) == 0:
            bot_x = pl.multiple_of(bot_x, 8)
        y1_ref[_SLACK + W + M:_SLACK + (R + 2) * W, :] = conv1_rows(bot_x, W)

    # ---- Stage 2: 3x3 conv (stride 1, pad 1) + bias + ReLU.
    #      One aligned slab load per dy; the dx=+-1 taps are static sublane
    #      shifts (slices) of the slab, masked at the image's left/right edge.
    wcol = jax.lax.broadcasted_iota(jnp.int32, (M, 1), 0) % W
    not_first = wcol != 0
    not_last = wcol != (W - 1)

    acc = jnp.zeros((M, Cmid), jnp.float32)
    for dy in range(3):
        ext = y1_ref[dy * W: dy * W + M + 2 * _SLACK, :]      # aligned static slab
        left = jnp.where(not_first, ext[_SLACK - 1:_SLACK - 1 + M, :], 0.0)
        center = ext[_SLACK:_SLACK + M, :]
        right = jnp.where(not_last, ext[_SLACK + 1:_SLACK + 1 + M, :], 0.0)
        for dx, tap in ((0, left), (1, center), (2, right)):
            acc += jnp.dot(tap.astype(jnp.bfloat16), w2_ref[dy, dx],
                           preferred_element_type=jnp.float32)
    y2 = jnp.maximum(acc + b2_ref[...], 0.0)

    # ---- Stage 3: 1x1 conv + bias + residual add (f32) + ReLU.
    y3 = jnp.dot(y2.astype(jnp.bfloat16), w3_ref[...],
                 preferred_element_type=jnp.float32) + b3_ref[...]
    identity = x_rows.astype(jnp.float32)
    o_ref[0] = jnp.maximum(y3 + identity, 0.0).astype(o_ref.dtype)


def _pick_row_block(H, W):
    """Smallest divisor R of H with R*W >= 256 and 8-aligned blocks, else H."""
    for R in range(1, H + 1):
        if H % R == 0 and (R * W) % 8 == 0 and R * W >= 256:
            return R
    return H


def bottleneck_fused(x_nhwc, kp):
    N, H, W, Cin = x_nhwc.shape
    Cmid = kp["w1"].shape[1]
    Cout = kp["w3"].shape[1]
    assert Cout == Cin, "identity shortcut needs Cin == out_channel*expansion"

    R = _pick_row_block(H, W)
    num_rb = H // R
    M = R * W

    # Spatial dims flattened (free, layout-preserving); bf16 kernel I/O.
    x2 = x_nhwc.reshape(N, H * W, Cin).astype(jnp.bfloat16)

    kernel = functools.partial(_bottleneck_kernel, W=W, R=R, Cmid=Cmid,
                               num_rb=num_rb)

    # VMEM budget: double-buffered in/out blocks + weights + scratch + headroom,
    # capped generation-aware (v5e/v6e 128 MiB, v7x 64 MiB physical).
    x_blk = H * W * Cin * 2
    o_blk = M * Cout * 2
    w_bytes = (Cin * Cmid + 9 * Cmid * Cmid + Cmid * Cout) * 2 \
        + (2 * Cmid + Cout) * 4
    scratch_b = ((R + 2) * W + 2 * _SLACK) * Cmid * 4
    budget = 2 * (x_blk + o_blk) + w_bytes + scratch_b + (16 << 20)
    try:
        cap = int(getattr(pltpu.get_tpu_info(), "vmem_capacity_bytes", 64 << 20))
    except Exception:  # pragma: no cover - conservative fallback
        cap = 64 << 20
    vmem_limit = int(min(max(budget, 32 << 20), (cap * 3) // 4))

    out = pl.pallas_call(
        kernel,
        out_shape=jax.ShapeDtypeStruct((N, H * W, Cout), jnp.bfloat16),
        grid=(N, num_rb),
        in_specs=[
            # image block: index constant in r -> DMAed only when n changes;
            # also supplies the residual and the halo rows for stage 1.
            pl.BlockSpec((1, H * W, Cin), lambda n, r: (n, 0, 0)),
            pl.BlockSpec((Cin, Cmid), lambda n, r: (0, 0)),
            pl.BlockSpec((1, Cmid), lambda n, r: (0, 0)),
            pl.BlockSpec((3, 3, Cmid, Cmid), lambda n, r: (0, 0, 0, 0)),
            pl.BlockSpec((1, Cmid), lambda n, r: (0, 0)),
            pl.BlockSpec((Cmid, Cout), lambda n, r: (0, 0)),
            pl.BlockSpec((1, Cout), lambda n, r: (0, 0)),
        ],
        out_specs=pl.BlockSpec((1, M, Cout), lambda n, r: (n, r, 0)),
        scratch_shapes=[
            pltpu.VMEM((2 * _SLACK + (R + 2) * W, Cmid), jnp.float32),
        ],
        compiler_params=pltpu.CompilerParams(
            dimension_semantics=("parallel", "parallel"),
            vmem_limit_bytes=vmem_limit),
    )(x2, kp["w1"], kp["b1"], kp["w2"], kp["b2"], kp["w3"], kp["b3"])
    return out.reshape(N, H, W, Cout)


# ---------------------------------------------------------------------------
# Parameters: raw (matching the nn.Module) + BN-folded kernel params
# ---------------------------------------------------------------------------
def init_bottleneck_params(key, in_channel, out_channel, groups=1,
                           width_per_group=64):
    width = int(out_channel * (width_per_group / 64.0)) * groups
    c3 = out_channel * _EXPANSION
    ks = jax.random.split(key, 15)
    # conv weights stored transposed for NHWC matmuls:
    #   PyTorch conv1 (width,Cin,1,1) -> (Cin,width); conv2 -> HWIO; conv3 -> (width,c3)
    w1 = jax.random.normal(ks[0], (in_channel, width), jnp.float32) * 0.1
    w2 = jax.random.normal(ks[1], (3, 3, width, width), jnp.float32) * 0.1
    w3 = jax.random.normal(ks[2], (width, c3), jnp.float32) * 0.1

    def bn(i, c):
        return dict(
            gamma=1.0 + 0.1 * jax.random.normal(ks[i], (c,), jnp.float32),
            beta=0.05 * jax.random.normal(ks[i + 1], (c,), jnp.float32),
            mean=0.1 * jax.random.normal(ks[i + 2], (c,), jnp.float32),
            var=0.5 + 0.1 * jnp.abs(jax.random.normal(ks[i + 3], (c,),
                                                      jnp.float32)))

    return dict(w1=w1, w2=w2, w3=w3,
                bn1=bn(3, width), bn2=bn(7, width), bn3=bn(11, c3))


def fold_params_for_kernel(p):
    """Fold BN scale into the conv weights (bf16 for the MXU); biases stay f32."""
    def fold(w, bnp):
        scale = bnp["gamma"] / jnp.sqrt(bnp["var"] + _EPS)
        bias = bnp["beta"] - bnp["mean"] * scale
        wf = (w * scale).astype(jnp.bfloat16)  # scale broadcasts over out-channel axis
        return wf, bias.reshape(1, -1).astype(jnp.float32)

    w1f, b1 = fold(p["w1"], p["bn1"])
    w2f, b2 = fold(p["w2"], p["bn2"])
    w3f, b3 = fold(p["w3"], p["bn3"])
    return dict(w1=w1f, b1=b1, w2=w2f, b2=b2, w3=w3f, b3=b3)


def bottleneck_forward(x_nchw, kernel_params):
    # NCHW in/out to match the PyTorch module; NHWC (bf16) inside.
    x = jnp.transpose(x_nchw, (0, 2, 3, 1)).astype(jnp.float32)
    out = bottleneck_fused(x, kernel_params)
    return jnp.transpose(out, (0, 3, 1, 2)).astype(jnp.float32)


# ---------------------------------------------------------------------------
# Pure-JAX reference (un-folded BN, f32 HIGHEST) for correctness check
# ---------------------------------------------------------------------------
def bottleneck_reference(x_nchw, p):
    x = jnp.transpose(x_nchw, (0, 2, 3, 1)).astype(jnp.float32)
    hi = jax.lax.Precision.HIGHEST

    def bn(y, bnp):
        scale = bnp["gamma"] / jnp.sqrt(bnp["var"] + _EPS)
        return (y - bnp["mean"]) * scale + bnp["beta"]

    y = jnp.einsum("nhwc,cd->nhwd", x, p["w1"], precision=hi)
    y = jnp.maximum(bn(y, p["bn1"]), 0.0)
    y = jax.lax.conv_general_dilated(
        y, p["w2"], window_strides=(1, 1), padding="SAME",
        dimension_numbers=("NHWC", "HWIO", "NHWC"), precision=hi)
    y = jnp.maximum(bn(y, p["bn2"]), 0.0)
    y = jnp.einsum("nhwc,cd->nhwd", y, p["w3"], precision=hi)
    y = jnp.maximum(bn(y, p["bn3"]) + x, 0.0)
    return jnp.transpose(y, (0, 3, 1, 2))


if __name__ == "__main__":
    key = jax.random.PRNGKey(0)
    k_x, k_p = jax.random.split(key)

    # Bottleneck(in_channel=16, out_channel=4): width=4, out ch = 16 == in_channel
    # so the identity shortcut adds directly (downsample=None case).
    in_channel, out_channel = 16, 4
    N, H, W = 2, 16, 16

    x = jax.random.normal(k_x, (N, in_channel, H, W), jnp.float32)
    raw_params = init_bottleneck_params(k_p, in_channel, out_channel)
    kparams = fold_params_for_kernel(raw_params)

    out = jax.block_until_ready(bottleneck_forward(x, kparams))
    ref = jax.block_until_ready(bottleneck_reference(x, raw_params))

    assert out.shape == (N, out_channel * _EXPANSION, H, W), out.shape
    max_err = float(jnp.max(jnp.abs(out - ref)))
    assert jnp.allclose(out, ref, rtol=2e-2, atol=2e-2), max_err

    print("KERNEL_OK")
</pallas_src>

<mosaic_0001>
module attributes {stable_mosaic.version = 11 : i64} {
  func.func @_bottleneck_kernel(%arg0: i32, %arg1: i32, %arg2: memref<1x256x16xbf16, #tpu.memory_space<vmem>>, %arg3: memref<16x4xbf16, #tpu.memory_space<vmem>>, %arg4: memref<1x4xf32, #tpu.memory_space<vmem>>, %arg5: memref<3x3x4x4xbf16, #tpu.memory_space<vmem>>, %arg6: memref<1x4xf32, #tpu.memory_space<vmem>>, %arg7: memref<4x16xbf16, #tpu.memory_space<vmem>>, %arg8: memref<1x16xf32, #tpu.memory_space<vmem>>, %arg9: memref<1x256x16xbf16, #tpu.memory_space<vmem>>, %arg10: memref<304x4xf32, #tpu.memory_space<vmem>>) attributes {dimension_semantics = [#tpu.dimension_semantics<parallel>, #tpu.dimension_semantics<parallel>], iteration_bounds = array<i64: 2, 1>, scalar_prefetch = 0 : i64, scratch_operands = 1 : i64, tpu.core_type = #tpu.core_type<tc>, window_params = [{transform_indices = @transform_0, window_bounds = array<i64: 1, 256, 16>}, {pipeline_mode = #tpu.pipeline_mode<synchronous>, transform_indices = @transform_1, window_bounds = array<i64: 16, 4>}, {pipeline_mode = #tpu.pipeline_mode<synchronous>, transform_indices = @transform_2, window_bounds = array<i64: 1, 4>}, {pipeline_mode = #tpu.pipeline_mode<synchronous>, transform_indices = @transform_3, window_bounds = array<i64: 3, 3, 4, 4>}, {pipeline_mode = #tpu.pipeline_mode<synchronous>, transform_indices = @transform_4, window_bounds = array<i64: 1, 4>}, {pipeline_mode = #tpu.pipeline_mode<synchronous>, transform_indices = @transform_5, window_bounds = array<i64: 4, 16>}, {pipeline_mode = #tpu.pipeline_mode<synchronous>, transform_indices = @transform_6, window_bounds = array<i64: 1, 16>}, {transform_indices = @transform_7, window_bounds = array<i64: 1, 256, 16>}]} {
    %c256_i32 = arith.constant 256 : i32
    %0 = arith.muli %arg1, %c256_i32 : i32
    %1 = tpu.assume_multiple %0, 8 : i32
    %c0 = arith.constant 0 : index
    %2 = arith.index_cast %1 : i32 to index
    %c0_0 = arith.constant 0 : index
    %3 = vector.load %arg2[%c0, %2, %c0_0] : memref<1x256x16xbf16, #tpu.memory_space<vmem>>, vector<1x256x16xbf16>
    %4 = vector.shape_cast %3 : vector<1x256x16xbf16> to vector<256x16xbf16>
    %c0_1 = arith.constant 0 : index
    %c0_2 = arith.constant 0 : index
    %5 = vector.load %arg3[%c0_1, %c0_2] : memref<16x4xbf16, #tpu.memory_space<vmem>>, vector<16x4xbf16>
    %cst = arith.constant dense<0.000000e+00> : vector<256x4xf32>
    %6 = tpu.matmul %4, %5, %cst {dimension_numbers = #tpu.dot_dimension_numbers<[1], [0], [0], [1], [0, 0, 1, 1], [], []>} : vector<256x16xbf16>, vector<16x4xbf16>, vector<256x4xf32> -> vector<256x4xf32>
    %c0_3 = arith.constant 0 : index
    %c0_4 = arith.constant 0 : index
    %7 = vector.load %arg4[%c0_3, %c0_4] : memref<1x4xf32, #tpu.memory_space<vmem>>, vector<1x4xf32>
    %8 = vector.broadcast %7 : vector<1x4xf32> to vector<256x4xf32>
    %9 = arith.addf %6, %8 : vector<256x4xf32>
    %cst_5 = arith.constant 0.000000e+00 : f32
    %10 = vector.broadcast %cst_5 : f32 to vector<256x4xf32>
    %11 = arith.maximumf %9, %10 : vector<256x4xf32>
    %c24 = arith.constant 24 : index
    %c0_6 = arith.constant 0 : index
    %12 = vector.load %arg10[%c24, %c0_6] : memref<304x4xf32, #tpu.memory_space<vmem>>, vector<256x4xf32>
    tpu.vector_store %arg10[%c24, %c0_6], %11 {strides = array<i32>} : memref<304x4xf32, #tpu.memory_space<vmem>>, vector<256x4xf32>,
    %c0_i32 = arith.constant 0 : i32
    %13 = arith.cmpi eq, %arg1, %c0_i32 : i32
    %14 = arith.extui %13 : i1 to i32
    %c0_i32_7 = arith.constant 0 : i32
    %15 = arith.cmpi ne, %14, %c0_i32_7 : i32
    scf.if %15 {
      %cst_85 = arith.constant 0.000000e+00 : f32
      %147 = vector.broadcast %cst_85 : f32 to vector<16x4xf32>
      %c8 = arith.constant 8 : index
      %c0_86 = arith.constant 0 : index
      %148 = vector.load %arg10[%c8, %c0_86] : memref<304x4xf32, #tpu.memory_space<vmem>>, vector<16x4xf32>
      tpu.vector_store %arg10[%c8, %c0_86], %147 {strides = array<i32>} : memref<304x4xf32, #tpu.memory_space<vmem>>, vector<16x4xf32>,
    } else {
    }
    %c0_i32_8 = arith.constant 0 : i32
    %16 = arith.cmpi sgt, %arg1, %c0_i32_8 : i32
    %17 = arith.extui %16 : i1 to i32
    %c0_i32_9 = arith.constant 0 : i32
    %18 = arith.cmpi ne, %17, %c0_i32_9 : i32
    scf.if %18 {
      %c16_i32_85 = arith.constant 16 : i32
      %147 = arith.muli %arg1, %c16_i32_85 : i32
      %c1_i32_86 = arith.constant 1 : i32
      %148 = arith.subi %147, %c1_i32_86 : i32
      %c16_i32_87 = arith.constant 16 : i32
      %149 = arith.muli %148, %c16_i32_87 : i32
      %150 = tpu.assume_multiple %149, 8 : i32
      %c0_88 = arith.constant 0 : index
      %151 = arith.index_cast %150 : i32 to index
      %c0_89 = arith.constant 0 : index
      %152 = vector.load %arg2[%c0_88, %151, %c0_89] : memref<1x256x16xbf16, #tpu.memory_space<vmem>>, vector<1x16x16xbf16>
      %153 = vector.shape_cast %152 : vector<1x16x16xbf16> to vector<16x16xbf16>
      %c0_90 = arith.constant 0 : index
      %c0_91 = arith.constant 0 : index
      %154 = vector.load %arg3[%c0_90, %c0_91] : memref<16x4xbf16, #tpu.memory_space<vmem>>, vector<16x4xbf16>
      %cst_92 = arith.constant dense<0.000000e+00> : vector<16x4xf32>
      %155 = tpu.matmul %153, %154, %cst_92 {dimension_numbers = #tpu.dot_dimension_numbers<[1], [0], [0], [1], [0, 0, 1, 1], [], []>} : vector<16x16xbf16>, vector<16x4xbf16>, vector<16x4xf32> -> vector<16x4xf32>
      %c0_93 = arith.constant 0 : index
      %c0_94 = arith.constant 0 : index
      %156 = vector.load %arg4[%c0_93, %c0_94] : memref<1x4xf32, #tpu.memory_space<vmem>>, vector<1x4xf32>
      %157 = vector.broadcast %156 : vector<1x4xf32> to vector<16x4xf32>
      %158 = arith.addf %155, %157 : vector<16x4xf32>
      %cst_95 = arith.constant 0.000000e+00 : f32
      %159 = vector.broadcast %cst_95 : f32 to vector<16x4xf32>
      %160 = arith.maximumf %158, %159 : vector<16x4xf32>
      %c8 = arith.constant 8 : index
      %c0_96 = arith.constant 0 : index
      %161 = vector.load %arg10[%c8, %c0_96] : memref<304x4xf32, #tpu.memory_space<vmem>>, vector<16x4xf32>
      tpu.vector_store %arg10[%c8, %c0_96], %160 {strides = array<i32>} : memref<304x4xf32, #tpu.memory_space<vmem>>, vector<16x4xf32>,
    } else {
    }
    %c0_i32_10 = arith.constant 0 : i32
    %19 = arith.cmpi eq, %arg1, %c0_i32_10 : i32
    %20 = arith.extui %19 : i1 to i32
    %c0_i32_11 = arith.constant 0 : i32
    %21 = arith.cmpi ne, %20, %c0_i32_11 : i32
    scf.if %21 {
      %cst_85 = arith.constant 0.000000e+00 : f32
      %147 = vector.broadcast %cst_85 : f32 to vector<16x4xf32>
      %c280 = arith.constant 280 : index
      %c0_86 = arith.constant 0 : index
      %148 = vector.load %arg10[%c280, %c0_86] : memref<304x4xf32, #tpu.memory_space<vmem>>, vector<16x4xf32>
      tpu.vector_store %arg10[%c280, %c0_86], %147 {strides = array<i32>} : memref<304x4xf32, #tpu.memory_space<vmem>>, vector<16x4xf32>,
    } else {
    }
    %c0_i32_12 = arith.constant 0 : i32
    %22 = arith.cmpi slt, %arg1, %c0_i32_12 : i32
    %23 = arith.extui %22 : i1 to i32
    %c0_i32_13 = arith.constant 0 : i32
    %24 = arith.cmpi ne, %23, %c0_i32_13 : i32
    scf.if %24 {
      %c16_i32_85 = arith.constant 16 : i32
      %147 = arith.muli %arg1, %c16_i32_85 : i32
      %c16_i32_86 = arith.constant 16 : i32
      %148 = arith.addi %147, %c16_i32_86 : i32
      %c16_i32_87 = arith.constant 16 : i32
      %149 = arith.muli %148, %c16_i32_87 : i32
      %150 = tpu.assume_multiple %149, 8 : i32
      %c0_88 = arith.constant 0 : index
      %151 = arith.index_cast %150 : i32 to index
      %c0_89 = arith.constant 0 : index
      %152 = vector.load %arg2[%c0_88, %151, %c0_89] : memref<1x256x16xbf16, #tpu.memory_space<vmem>>, vector<1x16x16xbf16>
      %153 = vector.shape_cast %152 : vector<1x16x16xbf16> to vector<16x16xbf16>
      %c0_90 = arith.constant 0 : index
      %c0_91 = arith.constant 0 : index
      %154 = vector.load %arg3[%c0_90, %c0_91] : memref<16x4xbf16, #tpu.memory_space<vmem>>, vector<16x4xbf16>
      %cst_92 = arith.constant dense<0.000000e+00> : vector<16x4xf32>
      %155 = tpu.matmul %153, %154, %cst_92 {dimension_numbers = #tpu.dot_dimension_numbers<[1], [0], [0], [1], [0, 0, 1, 1], [], []>} : vector<16x16xbf16>, vector<16x4xbf16>, vector<16x4xf32> -> vector<16x4xf32>
      %c0_93 = arith.constant 0 : index
      %c0_94 = arith.constant 0 : index
      %156 = vector.load %arg4[%c0_93, %c0_94] : memref<1x4xf32, #tpu.memory_space<vmem>>, vector<1x4xf32>
      %157 = vector.broadcast %156 : vector<1x4xf32> to vector<16x4xf32>
      %158 = arith.addf %155, %157 : vector<16x4xf32>
      %cst_95 = arith.constant 0.000000e+00 : f32
      %159 = vector.broadcast %cst_95 : f32 to vector<16x4xf32>
      %160 = arith.maximumf %158, %159 : vector<16x4xf32>
      %c280 = arith.constant 280 : index
      %c0_96 = arith.constant 0 : index
      %161 = vector.load %arg10[%c280, %c0_96] : memref<304x4xf32, #tpu.memory_space<vmem>>, vector<16x4xf32>
      tpu.vector_store %arg10[%c280, %c0_96], %160 {strides = array<i32>} : memref<304x4xf32, #tpu.memory_space<vmem>>, vector<16x4xf32>,
    } else {
    }
    %25 = tpu.iota {dimensions = array<i32: 0>} : vector<256x1xi32>
    %c16_i32 = arith.constant 16 : i32
    %c0_i32_14 = arith.constant 0 : i32
    %26 = arith.cmpi eq, %c16_i32, %c0_i32_14 : i32
    %c1_i32 = arith.constant 1 : i32
    %27 = arith.select %26, %c1_i32, %c16_i32 : i32
    %28 = vector.broadcast %27 : i32 to vector<256x1xi32>
    %29 = arith.remsi %25, %28 : vector<256x1xi32>
    %c0_i32_15 = arith.constant 0 : i32
    %30 = vector.broadcast %c0_i32_15 : i32 to vector<256x1xi32>
    %31 = arith.cmpi ne, %29, %30 : vector<256x1xi32>
    %c0_i32_16 = arith.constant 0 : i32
    %32 = vector.broadcast %c0_i32_16 : i32 to vector<256x1xi32>
    %33 = arith.cmpi slt, %29, %32 : vector<256x1xi32>
    %c0_i32_17 = arith.constant 0 : i32
    %34 = arith.cmpi slt, %27, %c0_i32_17 : i32
    %35 = vector.broadcast %34 : i1 to vector<256x1xi1>
    %36 = vector.broadcast %35 : vector<256x1xi1> to vector<256x1xi1>
    %37 = arith.xori %33, %36 : vector<256x1xi1>
    %38 = arith.andi %37, %31 : vector<256x1xi1>
    %39 = vector.broadcast %27 : i32 to vector<256x1xi32>
    %40 = arith.addi %29, %39 : vector<256x1xi32>
    %41 = arith.select %38, %40, %29 : vector<256x1xi1>, vector<256x1xi32>
    %c0_i32_18 = arith.constant 0 : i32
    %42 = vector.broadcast %c0_i32_18 : i32 to vector<256x1xi32>
    %43 = arith.cmpi ne, %41, %42 : vector<256x1xi32>
    %c15_i32 = arith.constant 15 : i32
    %44 = vector.broadcast %c15_i32 : i32 to vector<256x1xi32>
    %45 = arith.cmpi ne, %41, %44 : vector<256x1xi32>
    %cst_19 = arith.constant 0.000000e+00 : f32
    %46 = vector.broadcast %cst_19 : f32 to vector<256x4xf32>
    %c0_20 = arith.constant 0 : index
    %c0_21 = arith.constant 0 : index
    %47 = vector.load %arg10[%c0_20, %c0_21] : memref<304x4xf32, #tpu.memory_space<vmem>>, vector<272x4xf32>
    %48 = vector.extract_strided_slice %47 {offsets = [7, 0], sizes = [256, 4], strides = [1, 1]} : vector<272x4xf32> to vector<256x4xf32>
    %cst_22 = arith.constant 0.000000e+00 : f32
    %49 = vector.shape_cast %43 : vector<256x1xi1> to vector<256x1xi1>
    %50 = vector.broadcast %49 : vector<256x1xi1> to vector<256x4xi1>
    %51 = vector.broadcast %cst_22 : f32 to vector<256x4xf32>
    %52 = arith.select %50, %48, %51 : vector<256x4xi1>, vector<256x4xf32>
    %53 = vector.extract_strided_slice %47 {offsets = [8, 0], sizes = [256, 4], strides = [1, 1]} : vector<272x4xf32> to vector<256x4xf32>
    %54 = vector.extract_strided_slice %47 {offsets = [9, 0], sizes = [256, 4], strides = [1, 1]} : vector<272x4xf32> to vector<256x4xf32>
    %cst_23 = arith.constant 0.000000e+00 : f32
    %55 = vector.shape_cast %45 : vector<256x1xi1> to vector<256x1xi1>
    %56 = vector.broadcast %55 : vector<256x1xi1> to vector<256x4xi1>
    %57 = vector.broadcast %cst_23 : f32 to vector<256x4xf32>
    %58 = arith.select %56, %54, %57 : vector<256x4xi1>, vector<256x4xf32>
    %59 = arith.truncf %52 : vector<256x4xf32> to vector<256x4xbf16>
    %c0_24 = arith.constant 0 : index
    %c0_25 = arith.constant 0 : index
    %c0_26 = arith.constant 0 : index
    %c0_27 = arith.constant 0 : index
    %60 = vector.load %arg5[%c0_24, %c0_25, %c0_26, %c0_27] : memref<3x3x4x4xbf16, #tpu.memory_space<vmem>>, vector<1x1x4x4xbf16>
    %61 = vector.shape_cast %60 : vector<1x1x4x4xbf16> to vector<4x4xbf16>
    %cst_28 = arith.constant dense<0.000000e+00> : vector<256x4xf32>
    %62 = tpu.matmul %59, %61, %cst_28 {dimension_numbers = #tpu.dot_dimension_numbers<[1], [0], [0], [1], [0, 0, 1, 1], [], []>} : vector<256x4xbf16>, vector<4x4xbf16>, vector<256x4xf32> -> vector<256x4xf32>
    %63 = arith.addf %46, %62 : vector<256x4xf32>
    %64 = arith.truncf %53 : vector<256x4xf32> to vector<256x4xbf16>
    %c0_29 = arith.constant 0 : index
    %c1 = arith.constant 1 : index
    %c0_30 = arith.constant 0 : index
    %c0_31 = arith.constant 0 : index
    %65 = vector.load %arg5[%c0_29, %c1, %c0_30, %c0_31] : memref<3x3x4x4xbf16, #tpu.memory_space<vmem>>, vector<1x1x4x4xbf16>
    %66 = vector.shape_cast %65 : vector<1x1x4x4xbf16> to vector<4x4xbf16>
    %cst_32 = arith.constant dense<0.000000e+00> : vector<256x4xf32>
    %67 = tpu.matmul %64, %66, %cst_32 {dimension_numbers = #tpu.dot_dimension_numbers<[1], [0], [0], [1], [0, 0, 1, 1], [], []>} : vector<256x4xbf16>, vector<4x4xbf16>, vector<256x4xf32> -> vector<256x4xf32>
    %68 = arith.addf %63, %67 : vector<256x4xf32>
    %69 = arith.truncf %58 : vector<256x4xf32> to vector<256x4xbf16>
    %c0_33 = arith.constant 0 : index
    %c2 = arith.constant 2 : index
    %c0_34 = arith.constant 0 : index
    %c0_35 = arith.constant 0 : index
    %70 = vector.load %arg5[%c0_33, %c2, %c0_34, %c0_35] : memref<3x3x4x4xbf16, #tpu.memory_space<vmem>>, vector<1x1x4x4xbf16>
    %71 = vector.shape_cast %70 : vector<1x1x4x4xbf16> to vector<4x4xbf16>
    %cst_36 = arith.constant dense<0.000000e+00> : vector<256x4xf32>
    %72 = tpu.matmul %69, %71, %cst_36 {dimension_numbers = #tpu.dot_dimension_numbers<[1], [0], [0], [1], [0, 0, 1, 1], [], []>} : vector<256x4xbf16>, vector<4x4xbf16>, vector<256x4xf32> -> vector<256x4xf32>
    %73 = arith.addf %68, %72 : vector<256x4xf32>
    %c16 = arith.constant 16 : index
    %c0_37 = arith.constant 0 : index
    %74 = vector.load %arg10[%c16, %c0_37] : memref<304x4xf32, #tpu.memory_space<vmem>>, vector<272x4xf32>
    %75 = vector.extract_strided_slice %74 {offsets = [7, 0], sizes = [256, 4], strides = [1, 1]} : vector<272x4xf32> to vector<256x4xf32>
    %cst_38 = arith.constant 0.000000e+00 : f32
    %76 = vector.shape_cast %43 : vector<256x1xi1> to vector<256x1xi1>
    %77 = vector.broadcast %76 : vector<256x1xi1> to vector<256x4xi1>
    %78 = vector.broadcast %cst_38 : f32 to vector<256x4xf32>
    %79 = arith.select %77, %75, %78 : vector<256x4xi1>, vector<256x4xf32>
    %80 = vector.extract_strided_slice %74 {offsets = [8, 0], sizes = [256, 4], strides = [1, 1]} : vector<272x4xf32> to vector<256x4xf32>
    %81 = vector.extract_strided_slice %74 {offsets = [9, 0], sizes = [256, 4], strides = [1, 1]} : vector<272x4xf32> to vector<256x4xf32>
    %cst_39 = arith.constant 0.000000e+00 : f32
    %82 = vector.shape_cast %45 : vector<256x1xi1> to vector<256x1xi1>
    %83 = vector.broadcast %82 : vector<256x1xi1> to vector<256x4xi1>
    %84 = vector.broadcast %cst_39 : f32 to vector<256x4xf32>
    %85 = arith.select %83, %81, %84 : vector<256x4xi1>, vector<256x4xf32>
    %86 = arith.truncf %79 : vector<256x4xf32> to vector<256x4xbf16>
    %c1_40 = arith.constant 1 : index
    %c0_41 = arith.constant 0 : index
    %c0_42 = arith.constant 0 : index
    %c0_43 = arith.constant 0 : index
    %87 = vector.load %arg5[%c1_40, %c0_41, %c0_42, %c0_43] : memref<3x3x4x4xbf16, #tpu.memory_space<vmem>>, vector<1x1x4x4xbf16>
    %88 = vector.shape_cast %87 : vector<1x1x4x4xbf16> to vector<4x4xbf16>
    %cst_44 = arith.constant dense<0.000000e+00> : vector<256x4xf32>
    %89 = tpu.matmul %86, %88, %cst_44 {dimension_numbers = #tpu.dot_dimension_numbers<[1], [0], [0], [1], [0, 0, 1, 1], [], []>} : vector<256x4xbf16>, vector<4x4xbf16>, vector<256x4xf32> -> vector<256x4xf32>
    %90 = arith.addf %73, %89 : vector<256x4xf32>
    %91 = arith.truncf %80 : vector<256x4xf32> to vector<256x4xbf16>
    %c1_45 = arith.constant 1 : index
    %c1_46 = arith.constant 1 : index
    %c0_47 = arith.constant 0 : index
    %c0_48 = arith.constant 0 : index
    %92 = vector.load %arg5[%c1_45, %c1_46, %c0_47, %c0_48] : memref<3x3x4x4xbf16, #tpu.memory_space<vmem>>, vector<1x1x4x4xbf16>
    %93 = vector.shape_cast %92 : vector<1x1x4x4xbf16> to vector<4x4xbf16>
    %cst_49 = arith.constant dense<0.000000e+00> : vector<256x4xf32>
    %94 = tpu.matmul %91, %93, %cst_49 {dimension_numbers = #tpu.dot_dimension_numbers<[1], [0], [0], [1], [0, 0, 1, 1], [], []>} : vector<256x4xbf16>, vector<4x4xbf16>, vector<256x4xf32> -> vector<256x4xf32>
    %95 = arith.addf %90, %94 : vector<256x4xf32>
    %96 = arith.truncf %85 : vector<256x4xf32> to vector<256x4xbf16>
    %c1_50 = arith.constant 1 : index
    %c2_51 = arith.constant 2 : index
    %c0_52 = arith.constant 0 : index
    %c0_53 = arith.constant 0 : index
    %97 = vector.load %arg5[%c1_50, %c2_51, %c0_52, %c0_53] : memref<3x3x4x4xbf16, #tpu.memory_space<vmem>>, vector<1x1x4x4xbf16>
    %98 = vector.shape_cast %97 : vector<1x1x4x4xbf16> to vector<4x4xbf16>
    %cst_54 = arith.constant dense<0.000000e+00> : vector<256x4xf32>
    %99 = tpu.matmul %96, %98, %cst_54 {dimension_numbers = #tpu.dot_dimension_numbers<[1], [0], [0], [1], [0, 0, 1, 1], [], []>} : vector<256x4xbf16>, vector<4x4xbf16>, vector<256x4xf32> -> vector<256x4xf32>
    %100 = arith.addf %95, %99 : vector<256x4xf32>
    %c32 = arith.constant 32 : index
    %c0_55 = arith.constant 0 : index
    %101 = vector.load %arg10[%c32, %c0_55] : memref<304x4xf32, #tpu.memory_space<vmem>>, vector<272x4xf32>
    %102 = vector.extract_strided_slice %101 {offsets = [7, 0], sizes = [256, 4], strides = [1, 1]} : vector<272x4xf32> to vector<256x4xf32>
    %cst_56 = arith.constant 0.000000e+00 : f32
    %103 = vector.shape_cast %43 : vector<256x1xi1> to vector<256x1xi1>
    %104 = vector.broadcast %103 : vector<256x1xi1> to vector<256x4xi1>
    %105 = vector.broadcast %cst_56 : f32 to vector<256x4xf32>
    %106 = arith.select %104, %102, %105 : vector<256x4xi1>, vector<256x4xf32>
    %107 = vector.extract_strided_slice %101 {offsets = [8, 0], sizes = [256, 4], strides = [1, 1]} : vector<272x4xf32> to vector<256x4xf32>
    %108 = vector.extract_strided_slice %101 {offsets = [9, 0], sizes = [256, 4], strides = [1, 1]} : vector<272x4xf32> to vector<256x4xf32>
    %cst_57 = arith.constant 0.000000e+00 : f32
    %109 = vector.shape_cast %45 : vector<256x1xi1> to vector<256x1xi1>
    %110 = vector.broadcast %109 : vector<256x1xi1> to vector<256x4xi1>
    %111 = vector.broadcast %cst_57 : f32 to vector<256x4xf32>
    %112 = arith.select %110, %108, %111 : vector<256x4xi1>, vector<256x4xf32>
    %113 = arith.truncf %106 : vector<256x4xf32> to vector<256x4xbf16>
    %c2_58 = arith.constant 2 : index
    %c0_59 = arith.constant 0 : index
    %c0_60 = arith.constant 0 : index
    %c0_61 = arith.constant 0 : index
    %114 = vector.load %arg5[%c2_58, %c0_59, %c0_60, %c0_61] : memref<3x3x4x4xbf16, #tpu.memory_space<vmem>>, vector<1x1x4x4xbf16>
    %115 = vector.shape_cast %114 : vector<1x1x4x4xbf16> to vector<4x4xbf16>
    %cst_62 = arith.constant dense<0.000000e+00> : vector<256x4xf32>
    %116 = tpu.matmul %113, %115, %cst_62 {dimension_numbers = #tpu.dot_dimension_numbers<[1], [0], [0], [1], [0, 0, 1, 1], [], []>} : vector<256x4xbf16>, vector<4x4xbf16>, vector<256x4xf32> -> vector<256x4xf32>
    %117 = arith.addf %100, %116 : vector<256x4xf32>
    %118 = arith.truncf %107 : vector<256x4xf32> to vector<256x4xbf16>
    %c2_63 = arith.constant 2 : index
    %c1_64 = arith.constant 1 : index
    %c0_65 = arith.constant 0 : index
    %c0_66 = arith.constant 0 : index
    %119 = vector.load %arg5[%c2_63, %c1_64, %c0_65, %c0_66] : memref<3x3x4x4xbf16, #tpu.memory_space<vmem>>, vector<1x1x4x4xbf16>
    %120 = vector.shape_cast %119 : vector<1x1x4x4xbf16> to vector<4x4xbf16>
    %cst_67 = arith.constant dense<0.000000e+00> : vector<256x4xf32>
    %121 = tpu.matmul %118, %120, %cst_67 {dimension_numbers = #tpu.dot_dimension_numbers<[1], [0], [0], [1], [0, 0, 1, 1], [], []>} : vector<256x4xbf16>, vector<4x4xbf16>, vector<256x4xf32> -> vector<256x4xf32>
    %122 = arith.addf %117, %121 : vector<256x4xf32>
    %123 = arith.truncf %112 : vector<256x4xf32> to vector<256x4xbf16>
    %c2_68 = arith.constant 2 : index
    %c2_69 = arith.constant 2 : index
    %c0_70 = arith.constant 0 : index
    %c0_71 = arith.constant 0 : index
    %124 = vector.load %arg5[%c2_68, %c2_69, %c0_70, %c0_71] : memref<3x3x4x4xbf16, #tpu.memory_space<vmem>>, vector<1x1x4x4xbf16>
    %125 = vector.shape_cast %124 : vector<1x1x4x4xbf16> to vector<4x4xbf16>
    %cst_72 = arith.constant dense<0.000000e+00> : vector<256x4xf32>
    %126 = tpu.matmul %123, %125, %cst_72 {dimension_numbers = #tpu.dot_dimension_numbers<[1], [0], [0], [1], [0, 0, 1, 1], [], []>} : vector<256x4xbf16>, vector<4x4xbf16>, vector<256x4xf32> -> vector<256x4xf32>
    %127 = arith.addf %122, %126 : vector<256x4xf32>
    %c0_73 = arith.constant 0 : index
    %c0_74 = arith.constant 0 : index
    %128 = vector.load %arg6[%c0_73, %c0_74] : memref<1x4xf32, #tpu.memory_space<vmem>>, vector<1x4xf32>
    %129 = vector.broadcast %128 : vector<1x4xf32> to vector<256x4xf32>
    %130 = arith.addf %127, %129 : vector<256x4xf32>
    %cst_75 = arith.constant 0.000000e+00 : f32
    %131 = vector.broadcast %cst_75 : f32 to vector<256x4xf32>
    %132 = arith.maximumf %130, %131 : vector<256x4xf32>
    %133 = arith.truncf %132 : vector<256x4xf32> to vector<256x4xbf16>
    %c0_76 = arith.constant 0 : index
    %c0_77 = arith.constant 0 : index
    %134 = vector.load %arg7[%c0_76, %c0_77] : memref<4x16xbf16, #tpu.memory_space<vmem>>, vector<4x16xbf16>
    %cst_78 = arith.constant dense<0.000000e+00> : vector<256x16xf32>
    %135 = tpu.matmul %133, %134, %cst_78 {dimension_numbers = #tpu.dot_dimension_numbers<[1], [0], [0], [1], [0, 0, 1, 1], [], []>} : vector<256x4xbf16>, vector<4x16xbf16>, vector<256x16xf32> -> vector<256x16xf32>
    %c0_79 = arith.constant 0 : index
    %c0_80 = arith.constant 0 : index
    %136 = vector.load %arg8[%c0_79, %c0_80] : memref<1x16xf32, #tpu.memory_space<vmem>>, vector<1x16xf32>
    %137 = vector.broadcast %136 : vector<1x16xf32> to vector<256x16xf32>
    %138 = arith.addf %135, %137 : vector<256x16xf32>
    %139 = arith.extf %4 : vector<256x16xbf16> to vector<256x16xf32>
    %140 = arith.addf %138, %139 : vector<256x16xf32>
    %cst_81 = arith.constant 0.000000e+00 : f32
    %141 = vector.broadcast %cst_81 : f32 to vector<256x16xf32>
    %142 = arith.maximumf %140, %141 : vector<256x16xf32>
    %143 = arith.truncf %142 : vector<256x16xf32> to vector<256x16xbf16>
    %c0_82 = arith.constant 0 : index
    %c0_83 = arith.constant 0 : index
    %c0_84 = arith.constant 0 : index
    %144 = vector.load %arg9[%c0_82, %c0_83, %c0_84] : memref<1x256x16xbf16, #tpu.memory_space<vmem>>, vector<1x256x16xbf16>
    %145 = vector.shape_cast %144 : vector<1x256x16xbf16> to vector<256x16xbf16>
    %146 = vector.shape_cast %143 : vector<256x16xbf16> to vector<1x256x16xbf16>
    tpu.vector_store %arg9[%c0_82, %c0_83, %c0_84], %146 {strides = array<i32>} : memref<1x256x16xbf16, #tpu.memory_space<vmem>>, vector<1x256x16xbf16>,
    return
  }
  func.func @transform_0(%arg0: i32, %arg1: i32) -> (i32, i32, i32) {
    %c0_i32 = arith.constant 0 : i32
    %c0_i32_0 = arith.constant 0 : i32
    %c0_i32_1 = arith.constant 0 : i32
    return %arg0, %c0_i32, %c0_i32_0 : i32, i32, i32
  }
  func.func @transform_1(%arg0: i32, %arg1: i32) -> (i32, i32) {
    %c0_i32 = arith.constant 0 : i32
    %c0_i32_0 = arith.constant 0 : i32
    %c0_i32_1 = arith.constant 0 : i32
    return %c0_i32, %c0_i32_0 : i32, i32
  }
  func.func @transform_2(%arg0: i32, %arg1: i32) -> (i32, i32) {
    %c0_i32 = arith.constant 0 : i32
    %c0_i32_0 = arith.constant 0 : i32
    %c0_i32_1 = arith.constant 0 : i32
    return %c0_i32, %c0_i32_0 : i32, i32
  }
  func.func @transform_3(%arg0: i32, %arg1: i32) -> (i32, i32, i32, i32) {
    %c0_i32 = arith.constant 0 : i32
    %c0_i32_0 = arith.constant 0 : i32
    %c0_i32_1 = arith.constant 0 : i32
    %c0_i32_2 = arith.constant 0 : i32
    %c0_i32_3 = arith.constant 0 : i32
    return %c0_i32, %c0_i32_0, %c0_i32_1, %c0_i32_2 : i32, i32, i32, i32
  }
  func.func @transform_4(%arg0: i32, %arg1: i32) -> (i32, i32) {
    %c0_i32 = arith.constant 0 : i32
    %c0_i32_0 = arith.constant 0 : i32
    %c0_i32_1 = arith.constant 0 : i32
    return %c0_i32, %c0_i32_0 : i32, i32
  }
  func.func @transform_5(%arg0: i32, %arg1: i32) -> (i32, i32) {
    %c0_i32 = arith.constant 0 : i32
    %c0_i32_0 = arith.constant 0 : i32
    %c0_i32_1 = arith.constant 0 : i32
    return %c0_i32, %c0_i32_0 : i32, i32
  }
  func.func @transform_6(%arg0: i32, %arg1: i32) -> (i32, i32) {
    %c0_i32 = arith.constant 0 : i32
    %c0_i32_0 = arith.constant 0 : i32
    %c0_i32_1 = arith.constant 0 : i32
    return %c0_i32, %c0_i32_0 : i32, i32
  }
  func.func @transform_7(%arg0: i32, %arg1: i32) -> (i32, i32, i32) {
    %c0_i32 = arith.constant 0 : i32
    %c0_i32_0 = arith.constant 0 : i32
    return %arg0, %arg1, %c0_i32 : i32, i32, i32
  }
}

</mosaic_0001>

<llo_original>
// kernel: tpu_custom_call.1
$region0: #{tpu_custom_call.1}
  #allocation0 [shape = 'u32[]', space=smem, size = 0x4, offset = 0x4, fixed_abs, tag = 'smem constant byte address 0x4 - core index']
  #allocation1 [shape = 'u32[144,128]{1,0:T(1,128)}', space=vmem, size = 0x12000, scoped, tag = 'internal scratch']
  #allocation2 [shape = 'f32[304,4]{1,0:T(8,128)}', space=vmem, size = 0x26000, scoped, tag = 'scratch operand']
  %s0 = inlined_call_operand.vmem [shape: bf16[2,256,16], index: 0, kind: input, shape index: {}]
  %s1 = inlined_call_operand.vmem [shape: bf16[16,4], index: 1, kind: input, shape index: {}]
  %s2 = inlined_call_operand.vmem [shape: f32[1,4], index: 2, kind: input, shape index: {}]
  %s3 = inlined_call_operand.vmem [shape: bf16[3,3,4,4], index: 3, kind: input, shape index: {}]
  %s4 = inlined_call_operand.vmem [shape: f32[1,4], index: 4, kind: input, shape index: {}]
  %s5 = inlined_call_operand.vmem [shape: bf16[4,16], index: 5, kind: input, shape index: {}]
  %s6 = inlined_call_operand.vmem [shape: f32[1,16], index: 6, kind: input, shape index: {}]
  %s7 = inlined_call_operand.vmem [shape: bf16[2,256,16], index: 7, kind: output, shape index: {}]
  %s8 = sld [smem:[#allocation0]]
  $region77: #{tpu_custom_call.1} parent=0
    _
  %s10 = ssub.s32 1, %s8
  %s11 = scalar_select 0, %s10, %s8
  loop: start=0, step=1, limit=4
  $region2: #{tpu_custom_call.1} parent=0 // loop_pre_header
    _
  $region3: #{tpu_custom_call.1} parent=0 // loop_header
    %s13 = sphi 0, %s17
    %p14 = scmp.ge.s32.totalorder %s13, 4
    %s20 = sphi 0, %s32
    %s21 = sphi 0, %s28
    %s22 = sphi 0, %s20
    %s23 = sphi 0, %s21
    %s24 = sphi 0, %s22
    %s25 = sphi 0, %s23
    %s35 = sphi 0, %s37
    %s38 = sphi 0, %s35
    %s39 = sphi 0, %s38
    %s55 = sphi 0, %s39
    %s59 = sphi 0, %s59
    %s61 = sphi 0, %s59
    %s62 = sphi 0, %s61
    %s76 = sphi 0, %s62
    %s80 = sphi 0, %s80
    %s82 = sphi 0, %s80
    %s83 = sphi 0, %s82
    %s97 = sphi 0, %s83
    %s101 = sphi 0, %s101
    %s103 = sphi 0, %s101
    %s104 = sphi 0, %s103
    %s118 = sphi 0, %s104
    %s122 = sphi 0, %s122
    %s124 = sphi 0, %s122
    %s125 = sphi 0, %s124
    %s139 = sphi 0, %s125
    %s143 = sphi 0, %s143
    %s145 = sphi 0, %s143
    %s146 = sphi 0, %s145
    %s160 = sphi 0, %s146
    %s164 = sphi 0, %s164
    %s166 = sphi 0, %s164
    %s167 = sphi 0, %s166
    %s181 = sphi 0, %s167
    %s189 = sphi 0, %s191
    %s192 = sphi 0, %s189
    %s193 = sphi 0, %s192
    %s209 = sphi 0, %s193
  $region4: #{tpu_custom_call.1} parent=0 // loop_header_branch
    %16 = sbr.rel (%p14) target = $region8
  $region5: #{tpu_custom_call.1} parent=0 // loop_body
    %s18 = ssub.s32 %s13, 1
    %s19 = ssub.s32 %s13, 2
    %s26 = sadd.s32 1, %s21
    %p27 = scmp.ge.s32.totalorder %s26, 1
    %s28 = scalar_select %p27, 0, %s26
    %s29 = sadd.s32 1, %s20
    %s30 = scalar_select %p27, %s29, %s20
    %p31 = scmp.ge.s32.totalorder %s30, 2
    %s32 = scalar_select %p31, 0, %s30
    %s33 = ssub.s32 %s20, %s32
    %p34 = scmp.eq.s32.totalorder %s33, 0
    %s36 = sadd.s32 %s35, 1
    %s37 = scalar_select %p34, %s35, %s36
    %p40 = pneg %p34
    %p41 = scmp.eq.s32.totalorder %s13, 1
    %p42 = por %p40, %p41
    %p43 = scmp.ne.s32.totalorder %s35, %s38
    %p44 = scmp.eq.s32.totalorder %s13, 0
    %p45 = por %p43, %p44
    %p46 = scmp.ne.s32.totalorder %s35, %s38
    %p47 = scmp.eq.s32.totalorder %s18, 1
    %p48 = por %p46, %p47
    %p49 = scmp.ne.s32.totalorder %s38, %s39
    %p50 = scmp.eq.s32.totalorder %s18, 0
    %p51 = por %p49, %p50
    %p52 = scmp.ne.s32.totalorder %s38, %s39
    %p53 = scmp.eq.s32.totalorder %s19, 1
    %p54 = por %p52, %p53
    %p56 = scmp.ne.s32.totalorder %s39, %s55
    %p57 = scmp.eq.s32.totalorder %s19, 0
    %p58 = por %p56, %p57
    %s60 = sadd.s32 %s59, 1
    %p63 = scmp.eq.s32.totalorder %s13, 1
    %p64 = scmp.ne.s32.totalorder %s59, %s61
    %p65 = scmp.eq.s32.totalorder %s13, 0
    %p66 = por %p64, %p65
    %p67 = scmp.ne.s32.totalorder %s59, %s61
    %p68 = scmp.eq.s32.totalorder %s18, 1
    %p69 = por %p67, %p68
    %p70 = scmp.ne.s32.totalorder %s61, %s62
    %p71 = scmp.eq.s32.totalorder %s18, 0
    %p72 = por %p70, %p71
    %p73 = scmp.ne.s32.totalorder %s61, %s62
    %p74 = scmp.eq.s32.totalorder %s19, 1
    %p75 = por %p73, %p74
    %p77 = scmp.ne.s32.totalorder %s62, %s76
    %p78 = scmp.eq.s32.totalorder %s19, 0
    %p79 = por %p77, %p78
    %s81 = sadd.s32 %s80, 1
    %p84 = scmp.eq.s32.totalorder %s13, 1
    %p85 = scmp.ne.s32.totalorder %s80, %s82
    %p86 = scmp.eq.s32.totalorder %s13, 0
    %p87 = por %p85, %p86
    %p88 = scmp.ne.s32.totalorder %s80, %s82
    %p89 = scmp.eq.s32.totalorder %s18, 1
    %p90 = por %p88, %p89
    %p91 = scmp.ne.s32.totalorder %s82, %s83
    %p92 = scmp.eq.s32.totalorder %s18, 0
    %p93 = por %p91, %p92
    %p94 = scmp.ne.s32.totalorder %s82, %s83
    %p95 = scmp.eq.s32.totalorder %s19, 1
    %p96 = por %p94, %p95
    %p98 = scmp.ne.s32.totalorder %s83, %s97
    %p99 = scmp.eq.s32.totalorder %s19, 0
    %p100 = por %p98, %p99
    %s102 = sadd.s32 %s101, 1
    %p105 = scmp.eq.s32.totalorder %s13, 1
    %p106 = scmp.ne.s32.totalorder %s101, %s103
    %p107 = scmp.eq.s32.totalorder %s13, 0
    %p108 = por %p106, %p107
    %p109 = scmp.ne.s32.totalorder %s101, %s103
    %p110 = scmp.eq.s32.totalorder %s18, 1
    %p111 = por %p109, %p110
    %p112 = scmp.ne.s32.totalorder %s103, %s104
    %p113 = scmp.eq.s32.totalorder %s18, 0
    %p114 = por %p112, %p113
    %p115 = scmp.ne.s32.totalorder %s103, %s104
    %p116 = scmp.eq.s32.totalorder %s19, 1
    %p117 = por %p115, %p116
    %p119 = scmp.ne.s32.totalorder %s104, %s118
    %p120 = scmp.eq.s32.totalorder %s19, 0
    %p121 = por %p119, %p120
    %s123 = sadd.s32 %s122, 1
    %p126 = scmp.eq.s32.totalorder %s13, 1
    %p127 = scmp.ne.s32.totalorder %s122, %s124
    %p128 = scmp.eq.s32.totalorder %s13, 0
    %p129 = por %p127, %p128
    %p130 = scmp.ne.s32.totalorder %s122, %s124
    %p131 = scmp.eq.s32.totalorder %s18, 1
    %p132 = por %p130, %p131
    %p133 = scmp.ne.s32.totalorder %s124, %s125
    %p134 = scmp.eq.s32.totalorder %s18, 0
    %p135 = por %p133, %p134
    %p136 = scmp.ne.s32.totalorder %s124, %s125
    %p137 = scmp.eq.s32.totalorder %s19, 1
    %p138 = por %p136, %p137
    %p140 = scmp.ne.s32.totalorder %s125, %s139
    %p141 = scmp.eq.s32.totalorder %s19, 0
    %p142 = por %p140, %p141
    %s144 = sadd.s32 %s143, 1
    %p147 = scmp.eq.s32.totalorder %s13, 1
    %p148 = scmp.ne.s32.totalorder %s143, %s145
    %p149 = scmp.eq.s32.totalorder %s13, 0
    %p150 = por %p148, %p149
    %p151 = scmp.ne.s32.totalorder %s143, %s145
    %p152 = scmp.eq.s32.totalorder %s18, 1
    %p153 = por %p151, %p152
    %p154 = scmp.ne.s32.totalorder %s145, %s146
    %p155 = scmp.eq.s32.totalorder %s18, 0
    %p156 = por %p154, %p155
    %p157 = scmp.ne.s32.totalorder %s145, %s146
    %p158 = scmp.eq.s32.totalorder %s19, 1
    %p159 = por %p157, %p158
    %p161 = scmp.ne.s32.totalorder %s146, %s160
    %p162 = scmp.eq.s32.totalorder %s19, 0
    %p163 = por %p161, %p162
    %s165 = sadd.s32 %s164, 1
    %p168 = scmp.eq.s32.totalorder %s13, 1
    %p169 = scmp.ne.s32.totalorder %s164, %s166
    %p170 = scmp.eq.s32.totalorder %s13, 0
    %p171 = por %p169, %p170
    %p172 = scmp.ne.s32.totalorder %s164, %s166
    %p173 = scmp.eq.s32.totalorder %s18, 1
    %p174 = por %p172, %p173
    %p175 = scmp.ne.s32.totalorder %s166, %s167
    %p176 = scmp.eq.s32.totalorder %s18, 0
    %p177 = por %p175, %p176
    %p178 = scmp.ne.s32.totalorder %s166, %s167
    %p179 = scmp.eq.s32.totalorder %s19, 1
    %p180 = por %p178, %p179
    %p182 = scmp.ne.s32.totalorder %s167, %s181
    %p183 = scmp.eq.s32.totalorder %s19, 0
    %p184 = por %p182, %p183
    %s185 = ssub.s32 %s20, %s32
    %s186 = ssub.s32 %s21, %s28
    %s187 = sor.u32 %s185, %s186
    %p188 = scmp.eq.s32.totalorder %s187, 0
    %s190 = sadd.s32 %s189, 1
    %s191 = scalar_select %p188, %s189, %s190
    %p194 = pneg %p188
    %p195 = scmp.eq.s32.totalorder %s13, 1
    %p196 = por %p194, %p195
    %p197 = scmp.ne.s32.totalorder %s189, %s192
    %p198 = scmp.eq.s32.totalorder %s13, 0
    %p199 = por %p197, %p198
    %p200 = scmp.ne.s32.totalorder %s189, %s192
    %p201 = scmp.eq.s32.totalorder %s18, 1
    %p202 = por %p200, %p201
    %p203 = scmp.ne.s32.totalorder %s192, %s193
    %p204 = scmp.eq.s32.totalorder %s18, 0
    %p205 = por %p203, %p204
    %p206 = scmp.ne.s32.totalorder %s192, %s193
    %p207 = scmp.eq.s32.totalorder %s19, 1
    %p208 = por %p206, %p207
    %p210 = scmp.ne.s32.totalorder %s193, %s209
    %p211 = scmp.eq.s32.totalorder %s19, 0
    %p212 = por %p210, %p211
    %p213 = scmp.le.s32.totalorder 1, %s13
    %p214 = scmp.lt.s32.totalorder %s13, 3
    %p215 = pnand %p213, %p214
    %p216 = pneg %p215
    // Predicated region
    $region9: #{tpu_custom_call.1} parent=5 // pred_check
      _
    $region10: #{tpu_custom_call.1} parent=5 // pred_check_branch
      %218 = sbr.rel (%p215) target = $region12
    $region11: #{tpu_custom_call.1} parent=5 // pred_region
      %s219 = ssub.s32 %s13, 1
      // Predicated region
      $region13: #{tpu_custom_call.1} parent=11 // pred_check
        %p220 = pneg %p72
      $region14: #{tpu_custom_call.1} parent=11 // pred_check_branch
        %222 = sbr.rel (%p220) target = $region16
      $region15: #{tpu_custom_call.1} parent=11 // pred_region
        _
      $region16: #{tpu_custom_call.1} parent=11 // pred_fallthru
        _
      // Predicated region
      $region17: #{tpu_custom_call.1} parent=11 // pred_check
        %p223 = pneg %p93
      $region18: #{tpu_custom_call.1} parent=11 // pred_check_branch
        %225 = sbr.rel (%p223) target = $region20
      $region19: #{tpu_custom_call.1} parent=11 // pred_region
        _
      $region20: #{tpu_custom_call.1} parent=11 // pred_fallthru
        _
      // Predicated region
      $region21: #{tpu_custom_call.1} parent=11 // pred_check
        %p226 = pneg %p114
      $region22: #{tpu_custom_call.1} parent=11 // pred_check_branch
        %228 = sbr.rel (%p226) target = $region24
      $region23: #{tpu_custom_call.1} parent=11 // pred_region
        _
      $region24: #{tpu_custom_call.1} parent=11 // pred_fallthru
        _
      // Predicated region
      $region25: #{tpu_custom_call.1} parent=11 // pred_check
        %p229 = pneg %p135
      $region26: #{tpu_custom_call.1} parent=11 // pred_check_branch
        %231 = sbr.rel (%p229) target = $region28
      $region27: #{tpu_custom_call.1} parent=11 // pred_region
        _
      $region28: #{tpu_custom_call.1} parent=11 // pred_fallthru
        _
      // Predicated region
      $region29: #{tpu_custom_call.1} parent=11 // pred_check
        %p232 = pneg %p156
      $region30: #{tpu_custom_call.1} parent=11 // pred_check_branch
        %234 = sbr.rel (%p232) target = $region32
      $region31: #{tpu_custom_call.1} parent=11 // pred_region
        _
      $region32: #{tpu_custom_call.1} parent=11 // pred_fallthru
        _
      // Predicated region
      $region33: #{tpu_custom_call.1} parent=11 // pred_check
        %p235 = pneg %p177
      $region34: #{tpu_custom_call.1} parent=11 // pred_check_branch
        %237 = sbr.rel (%p235) target = $region36
      $region35: #{tpu_custom_call.1} parent=11 // pred_region
        _
      $region36: #{tpu_custom_call.1} parent=11 // pred_fallthru
        _
    $region12: #{tpu_custom_call.1} parent=5 // pred_fallthru
      _
    %p238 = scmp.lt.s32.totalorder %s13, 2
    // Predicated region
    $region37: #{tpu_custom_call.1} parent=5 // pred_check
      %p239 = pneg %p238
    $region38: #{tpu_custom_call.1} parent=5 // pred_check_branch
      %241 = sbr.rel (%p239) target = $region40
    $region39: #{tpu_custom_call.1} parent=5 // pred_region
      // Predicated region
      $region41: #{tpu_custom_call.1} parent=39 // pred_check
        %p242 = pneg %p45
      $region42: #{tpu_custom_call.1} parent=39 // pred_check_branch
        %244 = sbr.rel (%p242) target = $region44
      $region43: #{tpu_custom_call.1} parent=39 // pred_region
        %p245 = scmp.lt.s32.totalorder %s20, 1
        %s246 = scalar_select %p245, %s20, 1
        %s247 = smul.addr %s246, 32
        %s248 = smul.addr %s247, 4
        %s249 = scalar_lea.vmem %s0, %s248
      $region44: #{tpu_custom_call.1} parent=39 // pred_fallthru
        _
    $region40: #{tpu_custom_call.1} parent=5 // pred_fallthru
      _
    %p250 = scmp.le.s32.totalorder 1, %s13
    %p251 = scmp.lt.s32.totalorder %s13, 3
    %p252 = pnand %p250, %p251
    %p253 = pneg %p252
    // Predicated region
    $region45: #{tpu_custom_call.1} parent=5 // pred_check
      _
    $region46: #{tpu_custom_call.1} parent=5 // pred_check_branch
      %255 = sbr.rel (%p252) target = $region48
    $region47: #{tpu_custom_call.1} parent=5 // pred_region
      %s256 = ssub.s32 %s13, 1
      %p257 = scmp.lt.s32.totalorder %s22, 1
      %s258 = scalar_select %p257, %s22, 1
      %s259 = smul.addr %s258, 32
      %s260 = smul.addr %s259, 4
      %s261 = scalar_lea.vmem %s0, %s260
      %p262 = pneg %p51
      %p263 = pneg %p48
      %p264 = pneg %p72
      %p265 = pneg %p69
      %p266 = pneg %p93
      %p267 = pneg %p90
      %p268 = pneg %p114
      %p269 = pneg %p111
      %p270 = pneg %p135
      %p271 = pneg %p132
      %p272 = pneg %p156
      %p273 = pneg %p153
      %p274 = pneg %p177
      %p275 = pneg %p174
      %p276 = pneg %p205
      %p277 = pneg %p202
      %s278 = smul.u32 32, %s23
      %p279 = scmp.lt.s32.totalorder %s22, 1
      %s280 = scalar_select %p279, %s22, 1
      %p281 = scmp.lt.s32.totalorder %s278, 31
      %s282 = scalar_select %p281, %s278, 31
      %s283 = smul.addr %s280, 32
      %s284 = sadd.s32 %s282, %s283
      %s285 = smul.addr %s284, 4
      %s286 = scalar_lea.vmem %s7, %s285
      %p287 = scmp.lt.s32.totalorder %s22, 1
      %s288 = scalar_select %p287, %s22, 1
      %s289 = smul.addr %s288, 32
      %s290 = smul.addr %s289, 4
      %s291 = scalar_lea.vmem %s0, %s290
      %s292 = smul.u32 32, %s23
      %p293 = scmp.lt.s32.totalorder %s22, 1
      %s294 = scalar_select %p293, %s22, 1
      %p295 = scmp.lt.s32.totalorder %s292, 31
      %s296 = scalar_select %p295, %s292, 31
      %s297 = smul.addr %s294, 32
      %s298 = sadd.s32 %s296, %s297
      %s299 = smul.addr %s298, 4
      %s300 = scalar_lea.vmem %s7, %s299
      %s301 = smul.u32 32, %s23
      %s303 = smul.u32 %s23, 256
      %s304 = sshra.s32 %s303, 3
      %s305 = sand.u32 %s303, 7
      %s306 = smul.addr %s304, 4
      %s307 = scalar_lea.vmem %s291, %s306
      %v308 = vld [vmem:[%s307] sm:$0xf]
      %v309 = vld [vmem:[%s307 + $0x4] sm:$0xf]
      %v310 = vld [vmem:[%s307 + $0x8] sm:$0xf]
      %v311 = vld [vmem:[%s307 + $0xc] sm:$0xf]
      %v312 = vld [vmem:[%s307 + $0x10] sm:$0xf]
      %v313 = vld [vmem:[%s307 + $0x14] sm:$0xf]
      %v314 = vld [vmem:[%s307 + $0x18] sm:$0xf]
      %v315 = vld [vmem:[%s307 + $0x1c] sm:$0xf]
      %v316 = vld [vmem:[%s307 + $0x20] sm:$0xf]
      %v317 = vld [vmem:[%s307 + $0x24] sm:$0xf]
      %v318 = vld [vmem:[%s307 + $0x28] sm:$0xf]
      %v319 = vld [vmem:[%s307 + $0x2c] sm:$0xf]
      %v320 = vld [vmem:[%s307 + $0x30] sm:$0xf]
      %v321 = vld [vmem:[%s307 + $0x34] sm:$0xf]
      %v322 = vld [vmem:[%s307 + $0x38] sm:$0xf]
      %v323 = vld [vmem:[%s307 + $0x3c] sm:$0xf]
      %v324 = vld [vmem:[%s307 + $0x40] sm:$0xf]
      %v325 = vld [vmem:[%s307 + $0x44] sm:$0xf]
      %v326 = vld [vmem:[%s307 + $0x48] sm:$0xf]
      %v327 = vld [vmem:[%s307 + $0x4c] sm:$0xf]
      %v328 = vld [vmem:[%s307 + $0x50] sm:$0xf]
      %v329 = vld [vmem:[%s307 + $0x54] sm:$0xf]
      %v330 = vld [vmem:[%s307 + $0x58] sm:$0xf]
      %v331 = vld [vmem:[%s307 + $0x5c] sm:$0xf]
      %v332 = vld [vmem:[%s307 + $0x60] sm:$0xf]
      %v333 = vld [vmem:[%s307 + $0x64] sm:$0xf]
      %v334 = vld [vmem:[%s307 + $0x68] sm:$0xf]
      %v335 = vld [vmem:[%s307 + $0x6c] sm:$0xf]
      %v336 = vld [vmem:[%s307 + $0x70] sm:$0xf]
      %v337 = vld [vmem:[%s307 + $0x74] sm:$0xf]
      %v338 = vld [vmem:[%s307 + $0x78] sm:$0xf]
      %v339 = vld [vmem:[%s307 + $0x7c] sm:$0xf]
      %v340 = vld [vmem:[%s1] sm:$0xf]
      %v341 = vld [vmem:[%s1 + $0x4] sm:$0xf]
      %v342 = vld [vmem:[%s2] sm:$0x1]
      %v344 = vlaneseq
      %v345 = vshrl.u32 %v344, 7
      %v346 = vsub.s32 0, %v345
      %v347 = vrot.slane %v342, %v346
      %v381 = vunpack.c.l.b16 %v308
      %v382 = vunpack.c.l.b16 %v309
      %v383 = vunpack.c.l.b16 %v310
      %v384 = vunpack.c.l.b16 %v311
      %v385 = vunpack.c.l.b16 %v312
      %v386 = vunpack.c.l.b16 %v313
      %v387 = vunpack.c.l.b16 %v314
      %v388 = vunpack.c.l.b16 %v315
      %v389 = vunpack.c.l.b16 %v316
      %v390 = vunpack.c.l.b16 %v317
      %v391 = vunpack.c.l.b16 %v318
      %v392 = vunpack.c.l.b16 %v319
      %v393 = vunpack.c.l.b16 %v320
      %v394 = vunpack.c.l.b16 %v321
      %v395 = vunpack.c.l.b16 %v322
      %v396 = vunpack.c.l.b16 %v323
      %v397 = vunpack.c.l.b16 %v324
      %v398 = vunpack.c.l.b16 %v325
      %v399 = vunpack.c.l.b16 %v326
      %v400 = vunpack.c.l.b16 %v327
      %v401 = vunpack.c.l.b16 %v328
      %v402 = vunpack.c.l.b16 %v329
      %v403 = vunpack.c.l.b16 %v330
      %v404 = vunpack.c.l.b16 %v331
      %v405 = vunpack.c.l.b16 %v332
      %v406 = vunpack.c.l.b16 %v333
      %v407 = vunpack.c.l.b16 %v334
      %v408 = vunpack.c.l.b16 %v335
      %v409 = vunpack.c.l.b16 %v336
      %v410 = vunpack.c.l.b16 %v337
      %v411 = vunpack.c.l.b16 %v338
      %v412 = vunpack.c.l.b16 %v339
      %v413 = vpack.c.b16 %v382, %v381
      %v414 = vpack.c.b16 %v384, %v383
      %v415 = vpack.c.b16 %v386, %v385
      %v416 = vpack.c.b16 %v388, %v387
      %v417 = vpack.c.b16 %v390, %v389
      %v418 = vpack.c.b16 %v392, %v391
      %v419 = vpack.c.b16 %v394, %v393
      %v420 = vpack.c.b16 %v396, %v395
      %v421 = vpack.c.b16 %v398, %v397
      %v422 = vpack.c.b16 %v400, %v399
      %v423 = vpack.c.b16 %v402, %v401
      %v424 = vpack.c.b16 %v404, %v403
      %v425 = vpack.c.b16 %v406, %v405
      %v426 = vpack.c.b16 %v408, %v407
      %v427 = vpack.c.b16 %v410, %v409
      %v428 = vpack.c.b16 %v412, %v411
      %v431 = vunpack.c.l.b16 %v340
      %v432 = vunpack.c.l.b16 %v341
      %v433 = vpack.c.b16 %v432, %v431
      %vm435 = vcmask 130048
      %v437 = vsel %vm435, %v413, 0
      %v440 = vsel %vm435, %v414, 0
      %v443 = vsel %vm435, %v415, 0
      %v446 = vsel %vm435, %v416, 0
      %v449 = vsel %vm435, %v417, 0
      %v452 = vsel %vm435, %v418, 0
      %v455 = vsel %vm435, %v419, 0
      %v458 = vsel %vm435, %v420, 0
      %v461 = vsel %vm435, %v421, 0
      %v464 = vsel %vm435, %v422, 0
      %v467 = vsel %vm435, %v423, 0
      %v470 = vsel %vm435, %v424, 0
      %v473 = vsel %vm435, %v425, 0
      %v476 = vsel %vm435, %v426, 0
      %v479 = vsel %vm435, %v427, 0
      %v482 = vsel %vm435, %v428, 0
      %484 = vmatprep.subr.bf16.mxu0 0
      %485 = vmatpush1.bf16.msra.mxu0 0
      %486 = vmatprep.subr.bf16.mxu0 0
      %487 = vmatpush1.bf16.msra.mxu0 0
      %488 = vmatprep.subr.bf16.mxu0 0
      %489 = vmatpush1.bf16.msra.mxu0 0
      %490 = vmatprep.subr.bf16.mxu0 0
      %491 = vmatpush1.bf16.msra.mxu0 0
      %492 = vmatprep.subr.bf16.mxu0 0
      %493 = vmatpush1.bf16.msra.mxu0 0
      %494 = vmatprep.subr.bf16.mxu0 0
      %495 = vmatpush1.bf16.msra.mxu0 0
      %496 = vmatprep.subr.bf16.mxu0 0
      %497 = vmatpush1.bf16.msra.mxu0 0
      %498 = vmatprep.subr.bf16.mxu0 0
      %499 = vmatpush1.bf16.msra.mxu0 %v433
      %500 = vmatprep.subr.bf16.mxu0 0
      %501 = vmatpush2.bf16.msra.mxu0 0
      %502 = vmatprep.subr.bf16.mxu0 0
      %503 = vmatpush2.bf16.msra.mxu0 0
      %504 = vmatprep.subr.bf16.mxu0 0
      %505 = vmatpush2.bf16.msra.mxu0 0
      %506 = vmatprep.subr.bf16.mxu0 0
      %507 = vmatpush2.bf16.msra.mxu0 0
      %508 = vmatprep.subr.bf16.mxu0 0
      %509 = vmatpush2.bf16.msra.mxu0 0
      %510 = vmatprep.subr.bf16.mxu0 0
      %511 = vmatpush2.bf16.msra.mxu0 0
      %512 = vmatprep.subr.bf16.mxu0 0
      %513 = vmatpush2.bf16.msra.mxu0 0
      %514 = vmatprep.subr.bf16.mxu0 0
      %515 = vmatpush2.bf16.msra.mxu0 0
      %516 = vmatprep.mubr.bf16.mxu0 0
      %517 = vmatmul.mubr.bf16.gmra.mxu0 %v437
      %v518 = vpop.f32.mrf.mxu0
      %v519 = vadd.f32 %v347, %v518
      %v520 = vpop.f32.mrf.mxu0
      %v521 = vpop.f32.mrf.mxu0
      %v522 = vadd.f32 %v347, %v521
      %v523 = vpop.f32.mrf.mxu0
      %524 = vmatprep.mubr.bf16.mxu0 0
      %525 = vmatmul.mubr.bf16.gmra.mxu0 %v440
      %v526 = vpop.f32.mrf.mxu0
      %v527 = vadd.f32 %v347, %v526
      %v528 = vpop.f32.mrf.mxu0
      %v529 = vpop.f32.mrf.mxu0
      %v530 = vadd.f32 %v347, %v529
      %v531 = vpop.f32.mrf.mxu0
      %532 = vmatprep.mubr.bf16.mxu0 0
      %533 = vmatmul.mubr.bf16.gmra.mxu0 %v443
      %v534 = vpop.f32.mrf.mxu0
      %v535 = vadd.f32 %v347, %v534
      %v536 = vpop.f32.mrf.mxu0
      %v537 = vpop.f32.mrf.mxu0
      %v538 = vadd.f32 %v347, %v537
      %v539 = vpop.f32.mrf.mxu0
      %540 = vmatprep.mubr.bf16.mxu0 0
      %541 = vmatmul.mubr.bf16.gmra.mxu0 %v446
      %v542 = vpop.f32.mrf.mxu0
      %v543 = vadd.f32 %v347, %v542
      %v544 = vpop.f32.mrf.mxu0
      %v545 = vpop.f32.mrf.mxu0
      %v546 = vadd.f32 %v347, %v545
      %v547 = vpop.f32.mrf.mxu0
      %548 = vmatprep.mubr.bf16.mxu0 0
      %549 = vmatmul.mubr.bf16.gmra.mxu0 %v449
      %v550 = vpop.f32.mrf.mxu0
      %v551 = vadd.f32 %v347, %v550
      %v552 = vpop.f32.mrf.mxu0
      %v553 = vpop.f32.mrf.mxu0
      %v554 = vadd.f32 %v347, %v553
      %v555 = vpop.f32.mrf.mxu0
      %556 = vmatprep.mubr.bf16.mxu0 0
      %557 = vmatmul.mubr.bf16.gmra.mxu0 %v452
      %v558 = vpop.f32.mrf.mxu0
      %v559 = vadd.f32 %v347, %v558
      %v560 = vpop.f32.mrf.mxu0
      %v561 = vpop.f32.mrf.mxu0
      %v562 = vadd.f32 %v347, %v561
      %v563 = vpop.f32.mrf.mxu0
      %564 = vmatprep.mubr.bf16.mxu0 0
      %565 = vmatmul.mubr.bf16.gmra.mxu0 %v455
      %v566 = vpop.f32.mrf.mxu0
      %v567 = vadd.f32 %v347, %v566
      %v568 = vpop.f32.mrf.mxu0
      %v569 = vpop.f32.mrf.mxu0
      %v570 = vadd.f32 %v347, %v569
      %v571 = vpop.f32.mrf.mxu0
      %572 = vmatprep.mubr.bf16.mxu0 0
      %573 = vmatmul.mubr.bf16.gmra.mxu0 %v458
      %v574 = vpop.f32.mrf.mxu0
      %v575 = vadd.f32 %v347, %v574
      %v576 = vpop.f32.mrf.mxu0
      %v577 = vpop.f32.mrf.mxu0
      %v578 = vadd.f32 %v347, %v577
      %v579 = vpop.f32.mrf.mxu0
      %580 = vmatprep.mubr.bf16.mxu0 0
      %581 = vmatmul.mubr.bf16.gmra.mxu0 %v461
      %v582 = vpop.f32.mrf.mxu0
      %v583 = vadd.f32 %v347, %v582
      %v584 = vpop.f32.mrf.mxu0
      %v585 = vpop.f32.mrf.mxu0
      %v586 = vadd.f32 %v347, %v585
      %v587 = vpop.f32.mrf.mxu0
      %588 = vmatprep.mubr.bf16.mxu0 0
      %589 = vmatmul.mubr.bf16.gmra.mxu0 %v464
      %v590 = vpop.f32.mrf.mxu0
      %v591 = vadd.f32 %v347, %v590
      %v592 = vpop.f32.mrf.mxu0
      %v593 = vpop.f32.mrf.mxu0
      %v594 = vadd.f32 %v347, %v593
      %v595 = vpop.f32.mrf.mxu0
      %596 = vmatprep.mubr.bf16.mxu0 0
      %597 = vmatmul.mubr.bf16.gmra.mxu0 %v467
      %v598 = vpop.f32.mrf.mxu0
      %v599 = vadd.f32 %v347, %v598
      %v600 = vpop.f32.mrf.mxu0
      %v601 = vpop.f32.mrf.mxu0
      %v602 = vadd.f32 %v347, %v601
      %v603 = vpop.f32.mrf.mxu0
      %604 = vmatprep.mubr.bf16.mxu0 0
      %605 = vmatmul.mubr.bf16.gmra.mxu0 %v470
      %v606 = vpop.f32.mrf.mxu0
      %v607 = vadd.f32 %v347, %v606
      %v608 = vpop.f32.mrf.mxu0
      %v609 = vpop.f32.mrf.mxu0
      %v610 = vadd.f32 %v347, %v609
      %v611 = vpop.f32.mrf.mxu0
      %612 = vmatprep.mubr.bf16.mxu0 0
      %613 = vmatmul.mubr.bf16.gmra.mxu0 %v473
      %v614 = vpop.f32.mrf.mxu0
      %v615 = vadd.f32 %v347, %v614
      %v616 = vpop.f32.mrf.mxu0
      %v617 = vpop.f32.mrf.mxu0
      %v618 = vadd.f32 %v347, %v617
      %v619 = vpop.f32.mrf.mxu0
      %620 = vmatprep.mubr.bf16.mxu0 0
      %621 = vmatmul.mubr.bf16.gmra.mxu0 %v476
      %v622 = vpop.f32.mrf.mxu0
      %v623 = vadd.f32 %v347, %v622
      %v624 = vpop.f32.mrf.mxu0
      %v625 = vpop.f32.mrf.mxu0
      %v626 = vadd.f32 %v347, %v625
      %v627 = vpop.f32.mrf.mxu0
      %628 = vmatprep.mubr.bf16.mxu0 0
      %629 = vmatmul.mubr.bf16.gmra.mxu0 %v479
      %v630 = vpop.f32.mrf.mxu0
      %v631 = vadd.f32 %v347, %v630
      %v632 = vpop.f32.mrf.mxu0
      %v633 = vpop.f32.mrf.mxu0
      %v634 = vadd.f32 %v347, %v633
      %v635 = vpop.f32.mrf.mxu0
      %636 = vmatprep.mubr.bf16.mxu0 0
      %637 = vmatmul.mubr.bf16.gmra.mxu0 %v482
      %v638 = vpop.f32.mrf.mxu0
      %v639 = vadd.f32 %v347, %v638
      %v640 = vpop.f32.mrf.mxu0
      %v641 = vpop.f32.mrf.mxu0
      %v642 = vadd.f32 %v347, %v641
      %v643 = vpop.f32.mrf.mxu0
      %644 = vdwg.mxu0
      %v645 = vmax.f32 %v519, 0.0
      %v646 = vmax.f32 %v522, 0.0
      %v647 = vmax.f32 %v527, 0.0
      %v648 = vmax.f32 %v530, 0.0
      %v649 = vmax.f32 %v535, 0.0
      %v650 = vmax.f32 %v538, 0.0
      %v651 = vmax.f32 %v543, 0.0
      %v652 = vmax.f32 %v546, 0.0
      %v653 = vmax.f32 %v551, 0.0
      %v654 = vmax.f32 %v554, 0.0
      %v655 = vmax.f32 %v559, 0.0
      %v656 = vmax.f32 %v562, 0.0
      %v657 = vmax.f32 %v567, 0.0
      %v658 = vmax.f32 %v570, 0.0
      %v659 = vmax.f32 %v575, 0.0
      %v660 = vmax.f32 %v578, 0.0
      %v661 = vmax.f32 %v583, 0.0
      %v662 = vmax.f32 %v586, 0.0
      %v663 = vmax.f32 %v591, 0.0
      %v664 = vmax.f32 %v594, 0.0
      %v665 = vmax.f32 %v599, 0.0
      %v666 = vmax.f32 %v602, 0.0
      %v667 = vmax.f32 %v607, 0.0
      %v668 = vmax.f32 %v610, 0.0
      %v669 = vmax.f32 %v615, 0.0
      %v670 = vmax.f32 %v618, 0.0
      %v671 = vmax.f32 %v623, 0.0
      %v672 = vmax.f32 %v626, 0.0
      %v673 = vmax.f32 %v631, 0.0
      %v674 = vmax.f32 %v634, 0.0
      %v675 = vmax.f32 %v639, 0.0
      %v676 = vmax.f32 %v642, 0.0
      %vm677 = vcmask 31744
      %678 = vst.msk [vmem:[#allocation2 + $0x18] sm:$0xff] %vm677, %v645
      %679 = vst.msk [vmem:[#allocation2 + $0x20] sm:$0xff] %vm677, %v646
      %680 = vst.msk [vmem:[#allocation2 + $0x28] sm:$0xff] %vm677, %v647
      %681 = vst.msk [vmem:[#allocation2 + $0x30] sm:$0xff] %vm677, %v648
      %682 = vst.msk [vmem:[#allocation2 + $0x38] sm:$0xff] %vm677, %v649
      %683 = vst.msk [vmem:[#allocation2 + $0x40] sm:$0xff] %vm677, %v650
      %684 = vst.msk [vmem:[#allocation2 + $0x48] sm:$0xff] %vm677, %v651
      %685 = vst.msk [vmem:[#allocation2 + $0x50] sm:$0xff] %vm677, %v652
      %686 = vst.msk [vmem:[#allocation2 + $0x58] sm:$0xff] %vm677, %v653
      %687 = vst.msk [vmem:[#allocation2 + $0x60] sm:$0xff] %vm677, %v654
      %688 = vst.msk [vmem:[#allocation2 + $0x68] sm:$0xff] %vm677, %v655
      %689 = vst.msk [vmem:[#allocation2 + $0x70] sm:$0xff] %vm677, %v656
      %690 = vst.msk [vmem:[#allocation2 + $0x78] sm:$0xff] %vm677, %v657
      %691 = vst.msk [vmem:[#allocation2 + $0x80] sm:$0xff] %vm677, %v658
      %692 = vst.msk [vmem:[#allocation2 + $0x88] sm:$0xff] %vm677, %v659
      %693 = vst.msk [vmem:[#allocation2 + $0x90] sm:$0xff] %vm677, %v660
      %694 = vst.msk [vmem:[#allocation2 + $0x98] sm:$0xff] %vm677, %v661
      %695 = vst.msk [vmem:[#allocation2 + $0xa0] sm:$0xff] %vm677, %v662
      %696 = vst.msk [vmem:[#allocation2 + $0xa8] sm:$0xff] %vm677, %v663
      %697 = vst.msk [vmem:[#allocation2 + $0xb0] sm:$0xff] %vm677, %v664
      %698 = vst.msk [vmem:[#allocation2 + $0xb8] sm:$0xff] %vm677, %v665
      %699 = vst.msk [vmem:[#allocation2 + $0xc0] sm:$0xff] %vm677, %v666
      %700 = vst.msk [vmem:[#allocation2 + $0xc8] sm:$0xff] %vm677, %v667
      %701 = vst.msk [vmem:[#allocation2 + $0xd0] sm:$0xff] %vm677, %v668
      %702 = vst.msk [vmem:[#allocation2 + $0xd8] sm:$0xff] %vm677, %v669
      %703 = vst.msk [vmem:[#allocation2 + $0xe0] sm:$0xff] %vm677, %v670
      %704 = vst.msk [vmem:[#allocation2 + $0xe8] sm:$0xff] %vm677, %v671
      %705 = vst.msk [vmem:[#allocation2 + $0xf0] sm:$0xff] %vm677, %v672
      %706 = vst.msk [vmem:[#allocation2 + $0xf8] sm:$0xff] %vm677, %v673
      %707 = vst.msk [vmem:[#allocation2 + $0x100] sm:$0xff] %vm677, %v674
      %708 = vst.msk [vmem:[#allocation2 + $0x108] sm:$0xff] %vm677, %v675
      %709 = vst.msk [vmem:[#allocation2 + $0x110] sm:$0xff] %vm677, %v676
      %p710 = scmp.eq.s32.totalorder %s23, 0
      // Predicated region
      $region49: #{tpu_custom_call.1} parent=47 // pred_check
        %p711 = pneg %p710
      $region50: #{tpu_custom_call.1} parent=47 // pred_check_branch
        %713 = sbr.rel (%p711) target = $region52
      $region51: #{tpu_custom_call.1} parent=47 // pred_region
        %714 = vst.msk [vmem:[#allocation2 + $0x8] sm:$0xff] %vm677, 0.0
        %715 = vst.msk [vmem:[#allocation2 + $0x10] sm:$0xff] %vm677, 0.0
      $region52: #{tpu_custom_call.1} parent=47 // pred_fallthru
        _
      %p716 = scmp.gt.s32.totalorder %s23, 0
      // Predicated region
      $region53: #{tpu_custom_call.1} parent=47 // pred_check
        %p717 = pneg %p716
      $region54: #{tpu_custom_call.1} parent=47 // pred_check_branch
        %719 = sbr.rel (%p717) target = $region56
      $region55: #{tpu_custom_call.1} parent=47 // pred_region
        %s720 = smul.u32 %s23, 16
        %s721 = ssub.s32 %s720, 1
        %s722 = smul.u32 %s721, 16
        %s723 = sshra.s32 %s722, 3
        %s724 = sand.u32 %s722, 7
        %s725 = smul.addr %s723, 4
        %s726 = scalar_lea.vmem %s291, %s725
        %v727 = vld [vmem:[%s726] sm:$0xf]
        %v728 = vld [vmem:[%s726 + $0x4] sm:$0xf]
        %v729 = vld [vmem:[%s1] sm:$0xf]
        %v730 = vld [vmem:[%s1 + $0x4] sm:$0xf]
        %v731 = vld [vmem:[%s2] sm:$0x1]
        %v733 = vlaneseq
        %v734 = vshrl.u32 %v733, 7
        %v735 = vsub.s32 0, %v734
        %v736 = vrot.slane %v731, %v735
        %v740 = vunpack.c.l.b16 %v727
        %v741 = vunpack.c.l.b16 %v728
        %v742 = vpack.c.b16 %v741, %v740
        %v745 = vunpack.c.l.b16 %v729
        %v746 = vunpack.c.l.b16 %v730
        %v747 = vpack.c.b16 %v746, %v745
        %v750 = vsel %vm435, %v742, 0
        %752 = vmatprep.subr.bf16.mxu0 0
        %753 = vmatpush1.bf16.msra.mxu0 0
        %754 = vmatprep.subr.bf16.mxu0 0
        %755 = vmatpush1.bf16.msra.mxu0 0
        %756 = vmatprep.subr.bf16.mxu0 0
        %757 = vmatpush1.bf16.msra.mxu0 0
        %758 = vmatprep.subr.bf16.mxu0 0
        %759 = vmatpush1.bf16.msra.mxu0 0
        %760 = vmatprep.subr.bf16.mxu0 0
        %761 = vmatpush1.bf16.msra.mxu0 0
        %762 = vmatprep.subr.bf16.mxu0 0
        %763 = vmatpush1.bf16.msra.mxu0 0
        %764 = vmatprep.subr.bf16.mxu0 0
        %765 = vmatpush1.bf16.msra.mxu0 0
        %766 = vmatprep.subr.bf16.mxu0 0
        %767 = vmatpush1.bf16.msra.mxu0 %v747
        %768 = vmatprep.subr.bf16.mxu0 0
        %769 = vmatpush2.bf16.msra.mxu0 0
        %770 = vmatprep.subr.bf16.mxu0 0
        %771 = vmatpush2.bf16.msra.mxu0 0
        %772 = vmatprep.subr.bf16.mxu0 0
        %773 = vmatpush2.bf16.msra.mxu0 0
        %774 = vmatprep.subr.bf16.mxu0 0
        %775 = vmatpush2.bf16.msra.mxu0 0
        %776 = vmatprep.subr.bf16.mxu0 0
        %777 = vmatpush2.bf16.msra.mxu0 0
        %778 = vmatprep.subr.bf16.mxu0 0
        %779 = vmatpush2.bf16.msra.mxu0 0
        %780 = vmatprep.subr.bf16.mxu0 0
        %781 = vmatpush2.bf16.msra.mxu0 0
        %782 = vmatprep.subr.bf16.mxu0 0
        %783 = vmatpush2.bf16.msra.mxu0 0
        %784 = vmatprep.mubr.bf16.mxu0 0
        %785 = vmatmul.mubr.bf16.gmra.mxu0 %v750
        %v786 = vpop.f32.mrf.mxu0
        %v787 = vadd.f32 %v736, %v786
        %v788 = vpop.f32.mrf.mxu0
        %v789 = vpop.f32.mrf.mxu0
        %v790 = vadd.f32 %v736, %v789
        %v791 = vpop.f32.mrf.mxu0
        %792 = vdwg.mxu0
        %v793 = vmax.f32 %v787, 0.0
        %v794 = vmax.f32 %v790, 0.0
        %795 = vst.msk [vmem:[#allocation2 + $0x8] sm:$0xff] %vm677, %v793
        %796 = vst.msk [vmem:[#allocation2 + $0x10] sm:$0xff] %vm677, %v794
      $region56: #{tpu_custom_call.1} parent=47 // pred_fallthru
        _
      // Predicated region
      $region57: #{tpu_custom_call.1} parent=47 // pred_check
        %p797 = pneg %p710
      $region58: #{tpu_custom_call.1} parent=47 // pred_check_branch
        %799 = sbr.rel (%p797) target = $region60
      $region59: #{tpu_custom_call.1} parent=47 // pred_region
        %800 = vst.msk [vmem:[#allocation2 + $0x118] sm:$0xff] %vm677, 0.0
        %801 = vst.msk [vmem:[#allocation2 + $0x120] sm:$0xff] %vm677, 0.0
      $region60: #{tpu_custom_call.1} parent=47 // pred_fallthru
        _
      %p802 = scmp.lt.s32.totalorder %s23, 0
      // Predicated region
      $region61: #{tpu_custom_call.1} parent=47 // pred_check
        %p803 = pneg %p802
      $region62: #{tpu_custom_call.1} parent=47 // pred_check_branch
        %805 = sbr.rel (%p803) target = $region64
      $region63: #{tpu_custom_call.1} parent=47 // pred_region
        %s806 = smul.u32 %s23, 16
        %s807 = sadd.s32 %s806, 16
        %s808 = smul.u32 %s807, 16
        %s809 = sshra.s32 %s808, 3
        %s810 = sand.u32 %s808, 7
        %s811 = smul.addr %s809, 4
        %s812 = scalar_lea.vmem %s291, %s811
        %v813 = vld [vmem:[%s812] sm:$0xf]
        %v814 = vld [vmem:[%s812 + $0x4] sm:$0xf]
        %v815 = vld [vmem:[%s1] sm:$0xf]
        %v816 = vld [vmem:[%s1 + $0x4] sm:$0xf]
        %v817 = vld [vmem:[%s2] sm:$0x1]
        %v819 = vlaneseq
        %v820 = vshrl.u32 %v819, 7
        %v821 = vsub.s32 0, %v820
        %v822 = vrot.slane %v817, %v821
        %v826 = vunpack.c.l.b16 %v813
        %v827 = vunpack.c.l.b16 %v814
        %v828 = vpack.c.b16 %v827, %v826
        %v831 = vunpack.c.l.b16 %v815
        %v832 = vunpack.c.l.b16 %v816
        %v833 = vpack.c.b16 %v832, %v831
        %v836 = vsel %vm435, %v828, 0
        %838 = vmatprep.subr.bf16.mxu0 0
        %839 = vmatpush1.bf16.msra.mxu0 0
        %840 = vmatprep.subr.bf16.mxu0 0
        %841 = vmatpush1.bf16.msra.mxu0 0
        %842 = vmatprep.subr.bf16.mxu0 0
        %843 = vmatpush1.bf16.msra.mxu0 0
        %844 = vmatprep.subr.bf16.mxu0 0
        %845 = vmatpush1.bf16.msra.mxu0 0
        %846 = vmatprep.subr.bf16.mxu0 0
        %847 = vmatpush1.bf16.msra.mxu0 0
        %848 = vmatprep.subr.bf16.mxu0 0
        %849 = vmatpush1.bf16.msra.mxu0 0
        %850 = vmatprep.subr.bf16.mxu0 0
        %851 = vmatpush1.bf16.msra.mxu0 0
        %852 = vmatprep.subr.bf16.mxu0 0
        %853 = vmatpush1.bf16.msra.mxu0 %v833
        %854 = vmatprep.subr.bf16.mxu0 0
        %855 = vmatpush2.bf16.msra.mxu0 0
        %856 = vmatprep.subr.bf16.mxu0 0
        %857 = vmatpush2.bf16.msra.mxu0 0
        %858 = vmatprep.subr.bf16.mxu0 0
        %859 = vmatpush2.bf16.msra.mxu0 0
        %860 = vmatprep.subr.bf16.mxu0 0
        %861 = vmatpush2.bf16.msra.mxu0 0
        %862 = vmatprep.subr.bf16.mxu0 0
        %863 = vmatpush2.bf16.msra.mxu0 0
        %864 = vmatprep.subr.bf16.mxu0 0
        %865 = vmatpush2.bf16.msra.mxu0 0
        %866 = vmatprep.subr.bf16.mxu0 0
        %867 = vmatpush2.bf16.msra.mxu0 0
        %868 = vmatprep.subr.bf16.mxu0 0
        %869 = vmatpush2.bf16.msra.mxu0 0
        %870 = vmatprep.mubr.bf16.mxu0 0
        %871 = vmatmul.mubr.bf16.gmra.mxu0 %v836
        %v872 = vpop.f32.mrf.mxu0
        %v873 = vadd.f32 %v822, %v872
        %v874 = vpop.f32.mrf.mxu0
        %v875 = vpop.f32.mrf.mxu0
        %v876 = vadd.f32 %v822, %v875
        %v877 = vpop.f32.mrf.mxu0
        %878 = vdwg.mxu0
        %v879 = vmax.f32 %v873, 0.0
        %v880 = vmax.f32 %v876, 0.0
        %881 = vst.msk [vmem:[#allocation2 + $0x118] sm:$0xff] %vm677, %v879
        %882 = vst.msk [vmem:[#allocation2 + $0x120] sm:$0xff] %vm677, %v880
      $region64: #{tpu_custom_call.1} parent=47 // pred_fallthru
        _
      %v883 = vlaneseq
      %v884 = vshrl.u32 %v883, 7
      %v885 = vadd.s32 %v884, 8
      %v886 = vadd.s32 %v884, 16
      %v887 = vadd.s32 %v884, 24
      %v888 = vadd.s32 %v884, 32
      %v889 = vadd.s32 %v884, 40
      %v890 = vadd.s32 %v884, 48
      %v891 = vadd.s32 %v884, 56
      %v892 = vadd.s32 %v884, 64
      %v893 = vadd.s32 %v884, 72
      %v894 = vadd.s32 %v884, 80
      %v895 = vadd.s32 %v884, 88
      %v896 = vadd.s32 %v884, 96
      %v897 = vadd.s32 %v884, 104
      %v898 = vadd.s32 %v884, 112
      %v899 = vadd.s32 %v884, 120
      %v900 = vadd.s32 %v884, 128
      %v901 = vadd.s32 %v884, 136
      %v902 = vadd.s32 %v884, 144
      %v903 = vadd.s32 %v884, 152
      %v904 = vadd.s32 %v884, 160
      %v905 = vadd.s32 %v884, 168
      %v906 = vadd.s32 %v884, 176
      %v907 = vadd.s32 %v884, 184
      %v908 = vadd.s32 %v884, 192
      %v909 = vadd.s32 %v884, 200
      %v910 = vadd.s32 %v884, 208
      %v911 = vadd.s32 %v884, 216
      %v912 = vadd.s32 %v884, 224
      %v913 = vadd.s32 %v884, 232
      %v914 = vadd.s32 %v884, 240
      %v915 = vadd.s32 %v884, 248
      %vm916 = vcmp.lt.s32.totalorder %v884, 0
      %v917 = vsub.s32 0, %v884
      %v918 = vsel %vm916, %v917, %v884
      %v919 = vshrl.u32 %v918, 4
      %v920 = vand.u32 %v918, 15
      %v921 = vsub.s32 0, %v920
      %v922 = vsel %vm916, %v921, %v920
      %vm923 = vcmp.lt.s32.totalorder %v885, 0
      %v924 = vsub.s32 0, %v885
      %v925 = vsel %vm923, %v924, %v885
      %v926 = vshrl.u32 %v925, 4
      %v927 = vand.u32 %v925, 15
      %v928 = vsub.s32 0, %v927
      %v929 = vsel %vm923, %v928, %v927
      %vm930 = vcmp.lt.s32.totalorder %v886, 0
      %v931 = vsub.s32 0, %v886
      %v932 = vsel %vm930, %v931, %v886
      %v933 = vshrl.u32 %v932, 4
      %v934 = vand.u32 %v932, 15
      %v935 = vsub.s32 0, %v934
      %v936 = vsel %vm930, %v935, %v934
      %vm937 = vcmp.lt.s32.totalorder %v887, 0
      %v938 = vsub.s32 0, %v887
      %v939 = vsel %vm937, %v938, %v887
      %v940 = vshrl.u32 %v939, 4
      %v941 = vand.u32 %v939, 15
      %v942 = vsub.s32 0, %v941
      %v943 = vsel %vm937, %v942, %v941
      %vm944 = vcmp.lt.s32.totalorder %v888, 0
      %v945 = vsub.s32 0, %v888
      %v946 = vsel %vm944, %v945, %v888
      %v947 = vshrl.u32 %v946, 4
      %v948 = vand.u32 %v946, 15
      %v949 = vsub.s32 0, %v948
      %v950 = vsel %vm944, %v949, %v948
      %vm951 = vcmp.lt.s32.totalorder %v889, 0
      %v952 = vsub.s32 0, %v889
      %v953 = vsel %vm951, %v952, %v889
      %v954 = vshrl.u32 %v953, 4
      %v955 = vand.u32 %v953, 15
      %v956 = vsub.s32 0, %v955
      %v957 = vsel %vm951, %v956, %v955
      %vm958 = vcmp.lt.s32.totalorder %v890, 0
      %v959 = vsub.s32 0, %v890
      %v960 = vsel %vm958, %v959, %v890
      %v961 = vshrl.u32 %v960, 4
      %v962 = vand.u32 %v960, 15
      %v963 = vsub.s32 0, %v962
      %v964 = vsel %vm958, %v963, %v962
      %vm965 = vcmp.lt.s32.totalorder %v891, 0
      %v966 = vsub.s32 0, %v891
      %v967 = vsel %vm965, %v966, %v891
      %v968 = vshrl.u32 %v967, 4
      %v969 = vand.u32 %v967, 15
      %v970 = vsub.s32 0, %v969
      %v971 = vsel %vm965, %v970, %v969
      %vm972 = vcmp.lt.s32.totalorder %v892, 0
      %v973 = vsub.s32 0, %v892
      %v974 = vsel %vm972, %v973, %v892
      %v975 = vshrl.u32 %v974, 4
      %v976 = vand.u32 %v974, 15
      %v977 = vsub.s32 0, %v976
      %v978 = vsel %vm972, %v977, %v976
      %vm979 = vcmp.lt.s32.totalorder %v893, 0
      %v980 = vsub.s32 0, %v893
      %v981 = vsel %vm979, %v980, %v893
      %v982 = vshrl.u32 %v981, 4
      %v983 = vand.u32 %v981, 15
      %v984 = vsub.s32 0, %v983
      %v985 = vsel %vm979, %v984, %v983
      %vm986 = vcmp.lt.s32.totalorder %v894, 0
      %v987 = vsub.s32 0, %v894
      %v988 = vsel %vm986, %v987, %v894
      %v989 = vshrl.u32 %v988, 4
      %v990 = vand.u32 %v988, 15
      %v991 = vsub.s32 0, %v990
      %v992 = vsel %vm986, %v991, %v990
      %vm993 = vcmp.lt.s32.totalorder %v895, 0
      %v994 = vsub.s32 0, %v895
      %v995 = vsel %vm993, %v994, %v895
      %v996 = vshrl.u32 %v995, 4
      %v997 = vand.u32 %v995, 15
      %v998 = vsub.s32 0, %v997
      %v999 = vsel %vm993, %v998, %v997
      %vm1000 = vcmp.lt.s32.totalorder %v896, 0
      %v1001 = vsub.s32 0, %v896
      %v1002 = vsel %vm1000, %v1001, %v896
      %v1003 = vshrl.u32 %v1002, 4
      %v1004 = vand.u32 %v1002, 15
      %v1005 = vsub.s32 0, %v1004
      %v1006 = vsel %vm1000, %v1005, %v1004
      %vm1007 = vcmp.lt.s32.totalorder %v897, 0
      %v1008 = vsub.s32 0, %v897
      %v1009 = vsel %vm1007, %v1008, %v897
      %v1010 = vshrl.u32 %v1009, 4
      %v1011 = vand.u32 %v1009, 15
      %v1012 = vsub.s32 0, %v1011
      %v1013 = vsel %vm1007, %v1012, %v1011
      %vm1014 = vcmp.lt.s32.totalorder %v898, 0
      %v1015 = vsub.s32 0, %v898
      %v1016 = vsel %vm1014, %v1015, %v898
      %v1017 = vshrl.u32 %v1016, 4
      %v1018 = vand.u32 %v1016, 15
      %v1019 = vsub.s32 0, %v1018
      %v1020 = vsel %vm1014, %v1019, %v1018
      %vm1021 = vcmp.lt.s32.totalorder %v899, 0
      %v1022 = vsub.s32 0, %v899
      %v1023 = vsel %vm1021, %v1022, %v899
      %v1024 = vshrl.u32 %v1023, 4
      %v1025 = vand.u32 %v1023, 15
      %v1026 = vsub.s32 0, %v1025
      %v1027 = vsel %vm1021, %v1026, %v1025
      %vm1028 = vcmp.lt.s32.totalorder %v900, 0
      %v1029 = vsub.s32 0, %v900
      %v1030 = vsel %vm1028, %v1029, %v900
      %v1031 = vshrl.u32 %v1030, 4
      %v1032 = vand.u32 %v1030, 15
      %v1033 = vsub.s32 0, %v1032
      %v1034 = vsel %vm1028, %v1033, %v1032
      %vm1035 = vcmp.lt.s32.totalorder %v901, 0
      %v1036 = vsub.s32 0, %v901
      %v1037 = vsel %vm1035, %v1036, %v901
      %v1038 = vshrl.u32 %v1037, 4
      %v1039 = vand.u32 %v1037, 15
      %v1040 = vsub.s32 0, %v1039
      %v1041 = vsel %vm1035, %v1040, %v1039
      %vm1042 = vcmp.lt.s32.totalorder %v902, 0
      %v1043 = vsub.s32 0, %v902
      %v1044 = vsel %vm1042, %v1043, %v902
      %v1045 = vshrl.u32 %v1044, 4
      %v1046 = vand.u32 %v1044, 15
      %v1047 = vsub.s32 0, %v1046
      %v1048 = vsel %vm1042, %v1047, %v1046
      %vm1049 = vcmp.lt.s32.totalorder %v903, 0
      %v1050 = vsub.s32 0, %v903
      %v1051 = vsel %vm1049, %v1050, %v903
      %v1052 = vshrl.u32 %v1051, 4
      %v1053 = vand.u32 %v1051, 15
      %v1054 = vsub.s32 0, %v1053
      %v1055 = vsel %vm1049, %v1054, %v1053
      %vm1056 = vcmp.lt.s32.totalorder %v904, 0
      %v1057 = vsub.s32 0, %v904
      %v1058 = vsel %vm1056, %v1057, %v904
      %v1059 = vshrl.u32 %v1058, 4
      %v1060 = vand.u32 %v1058, 15
      %v1061 = vsub.s32 0, %v1060
      %v1062 = vsel %vm1056, %v1061, %v1060
      %vm1063 = vcmp.lt.s32.totalorder %v905, 0
      %v1064 = vsub.s32 0, %v905
      %v1065 = vsel %vm1063, %v1064, %v905
      %v1066 = vshrl.u32 %v1065, 4
      %v1067 = vand.u32 %v1065, 15
      %v1068 = vsub.s32 0, %v1067
      %v1069 = vsel %vm1063, %v1068, %v1067
      %vm1070 = vcmp.lt.s32.totalorder %v906, 0
      %v1071 = vsub.s32 0, %v906
      %v1072 = vsel %vm1070, %v1071, %v906
      %v1073 = vshrl.u32 %v1072, 4
      %v1074 = vand.u32 %v1072, 15
      %v1075 = vsub.s32 0, %v1074
      %v1076 = vsel %vm1070, %v1075, %v1074
      %vm1077 = vcmp.lt.s32.totalorder %v907, 0
      %v1078 = vsub.s32 0, %v907
      %v1079 = vsel %vm1077, %v1078, %v907
      %v1080 = vshrl.u32 %v1079, 4
      %v1081 = vand.u32 %v1079, 15
      %v1082 = vsub.s32 0, %v1081
      %v1083 = vsel %vm1077, %v1082, %v1081
      %vm1084 = vcmp.lt.s32.totalorder %v908, 0
      %v1085 = vsub.s32 0, %v908
      %v1086 = vsel %vm1084, %v1085, %v908
      %v1087 = vshrl.u32 %v1086, 4
      %v1088 = vand.u32 %v1086, 15
      %v1089 = vsub.s32 0, %v1088
      %v1090 = vsel %vm1084, %v1089, %v1088
      %vm1091 = vcmp.lt.s32.totalorder %v909, 0
      %v1092 = vsub.s32 0, %v909
      %v1093 = vsel %vm1091, %v1092, %v909
      %v1094 = vshrl.u32 %v1093, 4
      %v1095 = vand.u32 %v1093, 15
      %v1096 = vsub.s32 0, %v1095
      %v1097 = vsel %vm1091, %v1096, %v1095
      %vm1098 = vcmp.lt.s32.totalorder %v910, 0
      %v1099 = vsub.s32 0, %v910
      %v1100 = vsel %vm1098, %v1099, %v910
      %v1101 = vshrl.u32 %v1100, 4
      %v1102 = vand.u32 %v1100, 15
      %v1103 = vsub.s32 0, %v1102
      %v1104 = vsel %vm1098, %v1103, %v1102
      %vm1105 = vcmp.lt.s32.totalorder %v911, 0
      %v1106 = vsub.s32 0, %v911
      %v1107 = vsel %vm1105, %v1106, %v911
      %v1108 = vshrl.u32 %v1107, 4
      %v1109 = vand.u32 %v1107, 15
      %v1110 = vsub.s32 0, %v1109
      %v1111 = vsel %vm1105, %v1110, %v1109
      %vm1112 = vcmp.lt.s32.totalorder %v912, 0
      %v1113 = vsub.s32 0, %v912
      %v1114 = vsel %vm1112, %v1113, %v912
      %v1115 = vshrl.u32 %v1114, 4
      %v1116 = vand.u32 %v1114, 15
      %v1117 = vsub.s32 0, %v1116
      %v1118 = vsel %vm1112, %v1117, %v1116
      %vm1119 = vcmp.lt.s32.totalorder %v913, 0
      %v1120 = vsub.s32 0, %v913
      %v1121 = vsel %vm1119, %v1120, %v913
      %v1122 = vshrl.u32 %v1121, 4
      %v1123 = vand.u32 %v1121, 15
      %v1124 = vsub.s32 0, %v1123
      %v1125 = vsel %vm1119, %v1124, %v1123
      %vm1126 = vcmp.lt.s32.totalorder %v914, 0
      %v1127 = vsub.s32 0, %v914
      %v1128 = vsel %vm1126, %v1127, %v914
      %v1129 = vshrl.u32 %v1128, 4
      %v1130 = vand.u32 %v1128, 15
      %v1131 = vsub.s32 0, %v1130
      %v1132 = vsel %vm1126, %v1131, %v1130
      %vm1133 = vcmp.lt.s32.totalorder %v915, 0
      %v1134 = vsub.s32 0, %v915
      %v1135 = vsel %vm1133, %v1134, %v915
      %v1136 = vshrl.u32 %v1135, 4
      %v1137 = vand.u32 %v1135, 15
      %v1138 = vsub.s32 0, %v1137
      %v1139 = vsel %vm1133, %v1138, %v1137
      %vm1140 = vcmp.ne.s32.totalorder %v922, 0
      %vm1141 = vcmp.ne.s32.totalorder %v929, 0
      %vm1142 = vcmp.ne.s32.totalorder %v936, 0
      %vm1143 = vcmp.ne.s32.totalorder %v943, 0
      %vm1144 = vcmp.ne.s32.totalorder %v950, 0
      %vm1145 = vcmp.ne.s32.totalorder %v957, 0
      %vm1146 = vcmp.ne.s32.totalorder %v964, 0
      %vm1147 = vcmp.ne.s32.totalorder %v971, 0
      %vm1148 = vcmp.ne.s32.totalorder %v978, 0
      %vm1149 = vcmp.ne.s32.totalorder %v985, 0
      %vm1150 = vcmp.ne.s32.totalorder %v992, 0
      %vm1151 = vcmp.ne.s32.totalorder %v999, 0
      %vm1152 = vcmp.ne.s32.totalorder %v1006, 0
      %vm1153 = vcmp.ne.s32.totalorder %v1013, 0
      %vm1154 = vcmp.ne.s32.totalorder %v1020, 0
      %vm1155 = vcmp.ne.s32.totalorder %v1027, 0
      %vm1156 = vcmp.ne.s32.totalorder %v1034, 0
      %vm1157 = vcmp.ne.s32.totalorder %v1041, 0
      %vm1158 = vcmp.ne.s32.totalorder %v1048, 0
      %vm1159 = vcmp.ne.s32.totalorder %v1055, 0
      %vm1160 = vcmp.ne.s32.totalorder %v1062, 0
      %vm1161 = vcmp.ne.s32.totalorder %v1069, 0
      %vm1162 = vcmp.ne.s32.totalorder %v1076, 0
      %vm1163 = vcmp.ne.s32.totalorder %v1083, 0
      %vm1164 = vcmp.ne.s32.totalorder %v1090, 0
      %vm1165 = vcmp.ne.s32.totalorder %v1097, 0
      %vm1166 = vcmp.ne.s32.totalorder %v1104, 0
      %vm1167 = vcmp.ne.s32.totalorder %v1111, 0
      %vm1168 = vcmp.ne.s32.totalorder %v1118, 0
      %vm1169 = vcmp.ne.s32.totalorder %v1125, 0
      %vm1170 = vcmp.ne.s32.totalorder %v1132, 0
      %vm1171 = vcmp.ne.s32.totalorder %v1139, 0
      %vm1172 = vcmp.lt.s32.totalorder %v922, 0
      %vm1173 = vcmp.lt.s32.totalorder %v929, 0
      %vm1174 = vcmp.lt.s32.totalorder %v936, 0
      %vm1175 = vcmp.lt.s32.totalorder %v943, 0
      %vm1176 = vcmp.lt.s32.totalorder %v950, 0
      %vm1177 = vcmp.lt.s32.totalorder %v957, 0
      %vm1178 = vcmp.lt.s32.totalorder %v964, 0
      %vm1179 = vcmp.lt.s32.totalorder %v971, 0
      %vm1180 = vcmp.lt.s32.totalorder %v978, 0
      %vm1181 = vcmp.lt.s32.totalorder %v985, 0
      %vm1182 = vcmp.lt.s32.totalorder %v992, 0
      %vm1183 = vcmp.lt.s32.totalorder %v999, 0
      %vm1184 = vcmp.lt.s32.totalorder %v1006, 0
      %vm1185 = vcmp.lt.s32.totalorder %v1013, 0
      %vm1186 = vcmp.lt.s32.totalorder %v1020, 0
      %vm1187 = vcmp.lt.s32.totalorder %v1027, 0
      %vm1188 = vcmp.lt.s32.totalorder %v1034, 0
      %vm1189 = vcmp.lt.s32.totalorder %v1041, 0
      %vm1190 = vcmp.lt.s32.totalorder %v1048, 0
      %vm1191 = vcmp.lt.s32.totalorder %v1055, 0
      %vm1192 = vcmp.lt.s32.totalorder %v1062, 0
      %vm1193 = vcmp.lt.s32.totalorder %v1069, 0
      %vm1194 = vcmp.lt.s32.totalorder %v1076, 0
      %vm1195 = vcmp.lt.s32.totalorder %v1083, 0
      %vm1196 = vcmp.lt.s32.totalorder %v1090, 0
      %vm1197 = vcmp.lt.s32.totalorder %v1097, 0
      %vm1198 = vcmp.lt.s32.totalorder %v1104, 0
      %vm1199 = vcmp.lt.s32.totalorder %v1111, 0
      %vm1200 = vcmp.lt.s32.totalorder %v1118, 0
      %vm1201 = vcmp.lt.s32.totalorder %v1125, 0
      %vm1202 = vcmp.lt.s32.totalorder %v1132, 0
      %vm1203 = vcmp.lt.s32.totalorder %v1139, 0
      %vm1204 = vmand %vm1172, %vm1140
      %vm1205 = vmand %vm1173, %vm1141
      %vm1206 = vmand %vm1174, %vm1142
      %vm1207 = vmand %vm1175, %vm1143
      %vm1208 = vmand %vm1176, %vm1144
      %vm1209 = vmand %vm1177, %vm1145
      %vm1210 = vmand %vm1178, %vm1146
      %vm1211 = vmand %vm1179, %vm1147
      %vm1212 = vmand %vm1180, %vm1148
      %vm1213 = vmand %vm1181, %vm1149
      %vm1214 = vmand %vm1182, %vm1150
      %vm1215 = vmand %vm1183, %vm1151
      %vm1216 = vmand %vm1184, %vm1152
      %vm1217 = vmand %vm1185, %vm1153
      %vm1218 = vmand %vm1186, %vm1154
      %vm1219 = vmand %vm1187, %vm1155
      %vm1220 = vmand %vm1188, %vm1156
      %vm1221 = vmand %vm1189, %vm1157
      %vm1222 = vmand %vm1190, %vm1158
      %vm1223 = vmand %vm1191, %vm1159
      %vm1224 = vmand %vm1192, %vm1160
      %vm1225 = vmand %vm1193, %vm1161
      %vm1226 = vmand %vm1194, %vm1162
      %vm1227 = vmand %vm1195, %vm1163
      %vm1228 = vmand %vm1196, %vm1164
      %vm1229 = vmand %vm1197, %vm1165
      %vm1230 = vmand %vm1198, %vm1166
      %vm1231 = vmand %vm1199, %vm1167
      %vm1232 = vmand %vm1200, %vm1168
      %vm1233 = vmand %vm1201, %vm1169
      %vm1234 = vmand %vm1202, %vm1170
      %vm1235 = vmand %vm1203, %vm1171
      %v1236 = vadd.s32 %v922, 16
      %v1237 = vadd.s32 %v929, 16
      %v1238 = vadd.s32 %v936, 16
      %v1239 = vadd.s32 %v943, 16
      %v1240 = vadd.s32 %v950, 16
      %v1241 = vadd.s32 %v957, 16
      %v1242 = vadd.s32 %v964, 16
      %v1243 = vadd.s32 %v971, 16
      %v1244 = vadd.s32 %v978, 16
      %v1245 = vadd.s32 %v985, 16
      %v1246 = vadd.s32 %v992, 16
      %v1247 = vadd.s32 %v999, 16
      %v1248 = vadd.s32 %v1006, 16
      %v1249 = vadd.s32 %v1013, 16
      %v1250 = vadd.s32 %v1020, 16
      %v1251 = vadd.s32 %v1027, 16
      %v1252 = vadd.s32 %v1034, 16
      %v1253 = vadd.s32 %v1041, 16
      %v1254 = vadd.s32 %v1048, 16
      %v1255 = vadd.s32 %v1055, 16
      %v1256 = vadd.s32 %v1062, 16
      %v1257 = vadd.s32 %v1069, 16
      %v1258 = vadd.s32 %v1076, 16
      %v1259 = vadd.s32 %v1083, 16
      %v1260 = vadd.s32 %v1090, 16
      %v1261 = vadd.s32 %v1097, 16
      %v1262 = vadd.s32 %v1104, 16
      %v1263 = vadd.s32 %v1111, 16
      %v1264 = vadd.s32 %v1118, 16
      %v1265 = vadd.s32 %v1125, 16
      %v1266 = vadd.s32 %v1132, 16
      %v1267 = vadd.s32 %v1139, 16
      %v1268 = vsel %vm1204, %v1236, %v922
      %v1269 = vsel %vm1205, %v1237, %v929
      %v1270 = vsel %vm1206, %v1238, %v936
      %v1271 = vsel %vm1207, %v1239, %v943
      %v1272 = vsel %vm1208, %v1240, %v950
      %v1273 = vsel %vm1209, %v1241, %v957
      %v1274 = vsel %vm1210, %v1242, %v964
      %v1275 = vsel %vm1211, %v1243, %v971
      %v1276 = vsel %vm1212, %v1244, %v978
      %v1277 = vsel %vm1213, %v1245, %v985
      %v1278 = vsel %vm1214, %v1246, %v992
      %v1279 = vsel %vm1215, %v1247, %v999
      %v1280 = vsel %vm1216, %v1248, %v1006
      %v1281 = vsel %vm1217, %v1249, %v1013
      %v1282 = vsel %vm1218, %v1250, %v1020
      %v1283 = vsel %vm1219, %v1251, %v1027
      %v1284 = vsel %vm1220, %v1252, %v1034
      %v1285 = vsel %vm1221, %v1253, %v1041
      %v1286 = vsel %vm1222, %v1254, %v1048
      %v1287 = vsel %vm1223, %v1255, %v1055
      %v1288 = vsel %vm1224, %v1256, %v1062
      %v1289 = vsel %vm1225, %v1257, %v1069
      %v1290 = vsel %vm1226, %v1258, %v1076
      %v1291 = vsel %vm1227, %v1259, %v1083
      %v1292 = vsel %vm1228, %v1260, %v1090
      %v1293 = vsel %vm1229, %v1261, %v1097
      %v1294 = vsel %vm1230, %v1262, %v1104
      %v1295 = vsel %vm1231, %v1263, %v1111
      %v1296 = vsel %vm1232, %v1264, %v1118
      %v1297 = vsel %vm1233, %v1265, %v1125
      %v1298 = vsel %vm1234, %v1266, %v1132
      %v1299 = vsel %vm1235, %v1267, %v1139
      %vm1300 = vcmp.ne.s32.totalorder %v1268, 0
      %vm1301 = vcmp.ne.s32.totalorder %v1269, 0
      %vm1302 = vcmp.ne.s32.totalorder %v1270, 0
      %vm1303 = vcmp.ne.s32.totalorder %v1271, 0
      %vm1304 = vcmp.ne.s32.totalorder %v1272, 0
      %vm1305 = vcmp.ne.s32.totalorder %v1273, 0
      %vm1306 = vcmp.ne.s32.totalorder %v1274, 0
      %vm1307 = vcmp.ne.s32.totalorder %v1275, 0
      %vm1308 = vcmp.ne.s32.totalorder %v1276, 0
      %vm1309 = vcmp.ne.s32.totalorder %v1277, 0
      %vm1310 = vcmp.ne.s32.totalorder %v1278, 0
      %vm1311 = vcmp.ne.s32.totalorder %v1279, 0
      %vm1312 = vcmp.ne.s32.totalorder %v1280, 0
      %vm1313 = vcmp.ne.s32.totalorder %v1281, 0
      %vm1314 = vcmp.ne.s32.totalorder %v1282, 0
      %vm1315 = vcmp.ne.s32.totalorder %v1283, 0
      %vm1316 = vcmp.ne.s32.totalorder %v1284, 0
      %vm1317 = vcmp.ne.s32.totalorder %v1285, 0
      %vm1318 = vcmp.ne.s32.totalorder %v1286, 0
      %vm1319 = vcmp.ne.s32.totalorder %v1287, 0
      %vm1320 = vcmp.ne.s32.totalorder %v1288, 0
      %vm1321 = vcmp.ne.s32.totalorder %v1289, 0
      %vm1322 = vcmp.ne.s32.totalorder %v1290, 0
      %vm1323 = vcmp.ne.s32.totalorder %v1291, 0
      %vm1324 = vcmp.ne.s32.totalorder %v1292, 0
      %vm1325 = vcmp.ne.s32.totalorder %v1293, 0
      %vm1326 = vcmp.ne.s32.totalorder %v1294, 0
      %vm1327 = vcmp.ne.s32.totalorder %v1295, 0
      %vm1328 = vcmp.ne.s32.totalorder %v1296, 0
      %vm1329 = vcmp.ne.s32.totalorder %v1297, 0
      %vm1330 = vcmp.ne.s32.totalorder %v1298, 0
      %vm1331 = vcmp.ne.s32.totalorder %v1299, 0
      %vm1332 = vcmp.ne.s32.totalorder %v1268, 15
      %vm1333 = vcmp.ne.s32.totalorder %v1269, 15
      %vm1334 = vcmp.ne.s32.totalorder %v1270, 15
      %vm1335 = vcmp.ne.s32.totalorder %v1271, 15
      %vm1336 = vcmp.ne.s32.totalorder %v1272, 15
      %vm1337 = vcmp.ne.s32.totalorder %v1273, 15
      %vm1338 = vcmp.ne.s32.totalorder %v1274, 15
      %vm1339 = vcmp.ne.s32.totalorder %v1275, 15
      %vm1340 = vcmp.ne.s32.totalorder %v1276, 15
      %vm1341 = vcmp.ne.s32.totalorder %v1277, 15
      %vm1342 = vcmp.ne.s32.totalorder %v1278, 15
      %vm1343 = vcmp.ne.s32.totalorder %v1279, 15
      %vm1344 = vcmp.ne.s32.totalorder %v1280, 15
      %vm1345 = vcmp.ne.s32.totalorder %v1281, 15
      %vm1346 = vcmp.ne.s32.totalorder %v1282, 15
      %vm1347 = vcmp.ne.s32.totalorder %v1283, 15
      %vm1348 = vcmp.ne.s32.totalorder %v1284, 15
      %vm1349 = vcmp.ne.s32.totalorder %v1285, 15
      %vm1350 = vcmp.ne.s32.totalorder %v1286, 15
      %vm1351 = vcmp.ne.s32.totalorder %v1287, 15
      %vm1352 = vcmp.ne.s32.totalorder %v1288, 15
      %vm1353 = vcmp.ne.s32.totalorder %v1289, 15
      %vm1354 = vcmp.ne.s32.totalorder %v1290, 15
      %vm1355 = vcmp.ne.s32.totalorder %v1291, 15
      %vm1356 = vcmp.ne.s32.totalorder %v1292, 15
      %vm1357 = vcmp.ne.s32.totalorder %v1293, 15
      %vm1358 = vcmp.ne.s32.totalorder %v1294, 15
      %vm1359 = vcmp.ne.s32.totalorder %v1295, 15
      %vm1360 = vcmp.ne.s32.totalorder %v1296, 15
      %vm1361 = vcmp.ne.s32.totalorder %v1297, 15
      %vm1362 = vcmp.ne.s32.totalorder %v1298, 15
      %vm1363 = vcmp.ne.s32.totalorder %v1299, 15
      %v1364 = vld [vmem:[#allocation2] sm:$0xff]
      %v1365 = vld [vmem:[#allocation2 + $0x8] sm:$0xff]
      %v1366 = vld [vmem:[#allocation2 + $0x10] sm:$0xff]
      %v1367 = vld [vmem:[#allocation2 + $0x18] sm:$0xff]
      %v1368 = vld [vmem:[#allocation2 + $0x20] sm:$0xff]
      %v1369 = vld [vmem:[#allocation2 + $0x28] sm:$0xff]
      %v1370 = vld [vmem:[#allocation2 + $0x30] sm:$0xff]
      %v1371 = vld [vmem:[#allocation2 + $0x38] sm:$0xff]
      %v1372 = vld [vmem:[#allocation2 + $0x40] sm:$0xff]
      %v1373 = vld [vmem:[#allocation2 + $0x48] sm:$0xff]
      %v1374 = vld [vmem:[#allocation2 + $0x50] sm:$0xff]
      %v1375 = vld [vmem:[#allocation2 + $0x58] sm:$0xff]
      %v1376 = vld [vmem:[#allocation2 + $0x60] sm:$0xff]
      %v1377 = vld [vmem:[#allocation2 + $0x68] sm:$0xff]
      %v1378 = vld [vmem:[#allocation2 + $0x70] sm:$0xff]
      %v1379 = vld [vmem:[#allocation2 + $0x78] sm:$0xff]
      %v1380 = vld [vmem:[#allocation2 + $0x80] sm:$0xff]
      %v1381 = vld [vmem:[#allocation2 + $0x88] sm:$0xff]
      %v1382 = vld [vmem:[#allocation2 + $0x90] sm:$0xff]
      %v1383 = vld [vmem:[#allocation2 + $0x98] sm:$0xff]
      %v1384 = vld [vmem:[#allocation2 + $0xa0] sm:$0xff]
      %v1385 = vld [vmem:[#allocation2 + $0xa8] sm:$0xff]
      %v1386 = vld [vmem:[#allocation2 + $0xb0] sm:$0xff]
      %v1387 = vld [vmem:[#allocation2 + $0xb8] sm:$0xff]
      %v1388 = vld [vmem:[#allocation2 + $0xc0] sm:$0xff]
      %v1389 = vld [vmem:[#allocation2 + $0xc8] sm:$0xff]
      %v1390 = vld [vmem:[#allocation2 + $0xd0] sm:$0xff]
      %v1391 = vld [vmem:[#allocation2 + $0xd8] sm:$0xff]
      %v1392 = vld [vmem:[#allocation2 + $0xe0] sm:$0xff]
      %v1393 = vld [vmem:[#allocation2 + $0xe8] sm:$0xff]
      %v1394 = vld [vmem:[#allocation2 + $0xf0] sm:$0xff]
      %v1395 = vld [vmem:[#allocation2 + $0xf8] sm:$0xff]
      %v1396 = vld [vmem:[#allocation2 + $0x100] sm:$0xff]
      %v1397 = vld [vmem:[#allocation2 + $0x108] sm:$0xff]
      %v1398 = vsel %vm1300, 1, 0
      %v1399 = vsel %vm1301, 1, 0
      %v1400 = vsel %vm1302, 1, 0
      %v1401 = vsel %vm1303, 1, 0
      %v1402 = vsel %vm1304, 1, 0
      %v1403 = vsel %vm1305, 1, 0
      %v1404 = vsel %vm1306, 1, 0
      %v1405 = vsel %vm1307, 1, 0
      %v1406 = vsel %vm1308, 1, 0
      %v1407 = vsel %vm1309, 1, 0
      %v1408 = vsel %vm1310, 1, 0
      %v1409 = vsel %vm1311, 1, 0
      %v1410 = vsel %vm1312, 1, 0
      %v1411 = vsel %vm1313, 1, 0
      %v1412 = vsel %vm1314, 1, 0
      %v1413 = vsel %vm1315, 1, 0
      %v1414 = vsel %vm1316, 1, 0
      %v1415 = vsel %vm1317, 1, 0
      %v1416 = vsel %vm1318, 1, 0
      %v1417 = vsel %vm1319, 1, 0
      %v1418 = vsel %vm1320, 1, 0
      %v1419 = vsel %vm1321, 1, 0
      %v1420 = vsel %vm1322, 1, 0
      %v1421 = vsel %vm1323, 1, 0
      %v1422 = vsel %vm1324, 1, 0
      %v1423 = vsel %vm1325, 1, 0
      %v1424 = vsel %vm1326, 1, 0
      %v1425 = vsel %vm1327, 1, 0
      %v1426 = vsel %vm1328, 1, 0
      %v1427 = vsel %vm1329, 1, 0
      %v1428 = vsel %vm1330, 1, 0
      %v1429 = vsel %vm1331, 1, 0
      %vm1430 = vcmp.eq.s32.totalorder %v1398, 1
      %vm1431 = vcmp.eq.s32.totalorder %v1399, 1
      %vm1432 = vcmp.eq.s32.totalorder %v1400, 1
      %vm1433 = vcmp.eq.s32.totalorder %v1401, 1
      %vm1434 = vcmp.eq.s32.totalorder %v1402, 1
      %vm1435 = vcmp.eq.s32.totalorder %v1403, 1
      %vm1436 = vcmp.eq.s32.totalorder %v1404, 1
      %vm1437 = vcmp.eq.s32.totalorder %v1405, 1
      %vm1438 = vcmp.eq.s32.totalorder %v1406, 1
      %vm1439 = vcmp.eq.s32.totalorder %v1407, 1
      %vm1440 = vcmp.eq.s32.totalorder %v1408, 1
      %vm1441 = vcmp.eq.s32.totalorder %v1409, 1
      %vm1442 = vcmp.eq.s32.totalorder %v1410, 1
      %vm1443 = vcmp.eq.s32.totalorder %v1411, 1
      %vm1444 = vcmp.eq.s32.totalorder %v1412, 1
      %vm1445 = vcmp.eq.s32.totalorder %v1413, 1
      %vm1446 = vcmp.eq.s32.totalorder %v1414, 1
      %vm1447 = vcmp.eq.s32.totalorder %v1415, 1
      %vm1448 = vcmp.eq.s32.totalorder %v1416, 1
      %vm1449 = vcmp.eq.s32.totalorder %v1417, 1
      %vm1450 = vcmp.eq.s32.totalorder %v1418, 1
      %vm1451 = vcmp.eq.s32.totalorder %v1419, 1
      %vm1452 = vcmp.eq.s32.totalorder %v1420, 1
      %vm1453 = vcmp.eq.s32.totalorder %v1421, 1
      %vm1454 = vcmp.eq.s32.totalorder %v1422, 1
      %vm1455 = vcmp.eq.s32.totalorder %v1423, 1
      %vm1456 = vcmp.eq.s32.totalorder %v1424, 1
      %vm1457 = vcmp.eq.s32.totalorder %v1425, 1
      %vm1458 = vcmp.eq.s32.totalorder %v1426, 1
      %vm1459 = vcmp.eq.s32.totalorder %v1427, 1
      %vm1460 = vcmp.eq.s32.totalorder %v1428, 1
      %vm1461 = vcmp.eq.s32.totalorder %v1429, 1
      %vm1495 = vcmask 1040384
      %v1496 = vrot.slane %v1364, 7
      %v1497 = vrot.slane %v1365, 7
      %v1498 = vsel %vm1495, %v1496, %v1497
      %v1499 = vrot.slane %v1366, 7
      %v1500 = vsel %vm1495, %v1497, %v1499
      %v1501 = vrot.slane %v1367, 7
      %v1502 = vsel %vm1495, %v1499, %v1501
      %v1503 = vrot.slane %v1368, 7
      %v1504 = vsel %vm1495, %v1501, %v1503
      %v1505 = vrot.slane %v1369, 7
      %v1506 = vsel %vm1495, %v1503, %v1505
      %v1507 = vrot.slane %v1370, 7
      %v1508 = vsel %vm1495, %v1505, %v1507
      %v1509 = vrot.slane %v1371, 7
      %v1510 = vsel %vm1495, %v1507, %v1509
      %v1511 = vrot.slane %v1372, 7
      %v1512 = vsel %vm1495, %v1509, %v1511
      %v1513 = vrot.slane %v1373, 7
      %v1514 = vsel %vm1495, %v1511, %v1513
      %v1515 = vrot.slane %v1374, 7
      %v1516 = vsel %vm1495, %v1513, %v1515
      %v1517 = vrot.slane %v1375, 7
      %v1518 = vsel %vm1495, %v1515, %v1517
      %v1519 = vrot.slane %v1376, 7
      %v1520 = vsel %vm1495, %v1517, %v1519
      %v1521 = vrot.slane %v1377, 7
      %v1522 = vsel %vm1495, %v1519, %v1521
      %v1523 = vrot.slane %v1378, 7
      %v1524 = vsel %vm1495, %v1521, %v1523
      %v1525 = vrot.slane %v1379, 7
      %v1526 = vsel %vm1495, %v1523, %v1525
      %v1527 = vrot.slane %v1380, 7
      %v1528 = vsel %vm1495, %v1525, %v1527
      %v1529 = vrot.slane %v1381, 7
      %v1530 = vsel %vm1495, %v1527, %v1529
      %v1531 = vrot.slane %v1382, 7
      %v1532 = vsel %vm1495, %v1529, %v1531
      %v1533 = vrot.slane %v1383, 7
      %v1534 = vsel %vm1495, %v1531, %v1533
      %v1535 = vrot.slane %v1384, 7
      %v1536 = vsel %vm1495, %v1533, %v1535
      %v1537 = vrot.slane %v1385, 7
      %v1538 = vsel %vm1495, %v1535, %v1537
      %v1539 = vrot.slane %v1386, 7
      %v1540 = vsel %vm1495, %v1537, %v1539
      %v1541 = vrot.slane %v1387, 7
      %v1542 = vsel %vm1495, %v1539, %v1541
      %v1543 = vrot.slane %v1388, 7
      %v1544 = vsel %vm1495, %v1541, %v1543
      %v1545 = vrot.slane %v1389, 7
      %v1546 = vsel %vm1495, %v1543, %v1545
      %v1547 = vrot.slane %v1390, 7
      %v1548 = vsel %vm1495, %v1545, %v1547
      %v1549 = vrot.slane %v1391, 7
      %v1550 = vsel %vm1495, %v1547, %v1549
      %v1551 = vrot.slane %v1392, 7
      %v1552 = vsel %vm1495, %v1549, %v1551
      %v1553 = vrot.slane %v1393, 7
      %v1554 = vsel %vm1495, %v1551, %v1553
      %v1555 = vrot.slane %v1394, 7
      %v1556 = vsel %vm1495, %v1553, %v1555
      %v1557 = vrot.slane %v1395, 7
      %v1558 = vsel %vm1495, %v1555, %v1557
      %v1559 = vrot.slane %v1396, 7
      %v1560 = vsel %vm1495, %v1557, %v1559
      %v1593 = vsel %vm1430, %v1498, 0.0
      %v1594 = vsel %vm1431, %v1500, 0.0
      %v1595 = vsel %vm1432, %v1502, 0.0
      %v1596 = vsel %vm1433, %v1504, 0.0
      %v1597 = vsel %vm1434, %v1506, 0.0
      %v1598 = vsel %vm1435, %v1508, 0.0
      %v1599 = vsel %vm1436, %v1510, 0.0
      %v1600 = vsel %vm1437, %v1512, 0.0
      %v1601 = vsel %vm1438, %v1514, 0.0
      %v1602 = vsel %vm1439, %v1516, 0.0
      %v1603 = vsel %vm1440, %v1518, 0.0
      %v1604 = vsel %vm1441, %v1520, 0.0
      %v1605 = vsel %vm1442, %v1522, 0.0
      %v1606 = vsel %vm1443, %v1524, 0.0
      %v1607 = vsel %vm1444, %v1526, 0.0
      %v1608 = vsel %vm1445, %v1528, 0.0
      %v1609 = vsel %vm1446, %v1530, 0.0
      %v1610 = vsel %vm1447, %v1532, 0.0
      %v1611 = vsel %vm1448, %v1534, 0.0
      %v1612 = vsel %vm1449, %v1536, 0.0
      %v1613 = vsel %vm1450, %v1538, 0.0
      %v1614 = vsel %vm1451, %v1540, 0.0
      %v1615 = vsel %vm1452, %v1542, 0.0
      %v1616 = vsel %vm1453, %v1544, 0.0
      %v1617 = vsel %vm1454, %v1546, 0.0
      %v1618 = vsel %vm1455, %v1548, 0.0
      %v1619 = vsel %vm1456, %v1550, 0.0
      %v1620 = vsel %vm1457, %v1552, 0.0
      %v1621 = vsel %vm1458, %v1554, 0.0
      %v1622 = vsel %vm1459, %v1556, 0.0
      %v1623 = vsel %vm1460, %v1558, 0.0
      %v1624 = vsel %vm1461, %v1560, 0.0
      %v1625 = vsel %vm1332, 1, 0
      %v1626 = vsel %vm1333, 1, 0
      %v1627 = vsel %vm1334, 1, 0
      %v1628 = vsel %vm1335, 1, 0
      %v1629 = vsel %vm1336, 1, 0
      %v1630 = vsel %vm1337, 1, 0
      %v1631 = vsel %vm1338, 1, 0
      %v1632 = vsel %vm1339, 1, 0
      %v1633 = vsel %vm1340, 1, 0
      %v1634 = vsel %vm1341, 1, 0
      %v1635 = vsel %vm1342, 1, 0
      %v1636 = vsel %vm1343, 1, 0
      %v1637 = vsel %vm1344, 1, 0
      %v1638 = vsel %vm1345, 1, 0
      %v1639 = vsel %vm1346, 1, 0
      %v1640 = vsel %vm1347, 1, 0
      %v1641 = vsel %vm1348, 1, 0
      %v1642 = vsel %vm1349, 1, 0
      %v1643 = vsel %vm1350, 1, 0
      %v1644 = vsel %vm1351, 1, 0
      %v1645 = vsel %vm1352, 1, 0
      %v1646 = vsel %vm1353, 1, 0
      %v1647 = vsel %vm1354, 1, 0
      %v1648 = vsel %vm1355, 1, 0
      %v1649 = vsel %vm1356, 1, 0
      %v1650 = vsel %vm1357, 1, 0
      %v1651 = vsel %vm1358, 1, 0
      %v1652 = vsel %vm1359, 1, 0
      %v1653 = vsel %vm1360, 1, 0
      %v1654 = vsel %vm1361, 1, 0
      %v1655 = vsel %vm1362, 1, 0
      %v1656 = vsel %vm1363, 1, 0
      %vm1657 = vcmp.eq.s32.totalorder %v1625, 1
      %vm1658 = vcmp.eq.s32.totalorder %v1626, 1
      %vm1659 = vcmp.eq.s32.totalorder %v1627, 1
      %vm1660 = vcmp.eq.s32.totalorder %v1628, 1
      %vm1661 = vcmp.eq.s32.totalorder %v1629, 1
      %vm1662 = vcmp.eq.s32.totalorder %v1630, 1
      %vm1663 = vcmp.eq.s32.totalorder %v1631, 1
      %vm1664 = vcmp.eq.s32.totalorder %v1632, 1
      %vm1665 = vcmp.eq.s32.totalorder %v1633, 1
      %vm1666 = vcmp.eq.s32.totalorder %v1634, 1
      %vm1667 = vcmp.eq.s32.totalorder %v1635, 1
      %vm1668 = vcmp.eq.s32.totalorder %v1636, 1
      %vm1669 = vcmp.eq.s32.totalorder %v1637, 1
      %vm1670 = vcmp.eq.s32.totalorder %v1638, 1
      %vm1671 = vcmp.eq.s32.totalorder %v1639, 1
      %vm1672 = vcmp.eq.s32.totalorder %v1640, 1
      %vm1673 = vcmp.eq.s32.totalorder %v1641, 1
      %vm1674 = vcmp.eq.s32.totalorder %v1642, 1
      %vm1675 = vcmp.eq.s32.totalorder %v1643, 1
      %vm1676 = vcmp.eq.s32.totalorder %v1644, 1
      %vm1677 = vcmp.eq.s32.totalorder %v1645, 1
      %vm1678 = vcmp.eq.s32.totalorder %v1646, 1
      %vm1679 = vcmp.eq.s32.totalorder %v1647, 1
      %vm1680 = vcmp.eq.s32.totalorder %v1648, 1
      %vm1681 = vcmp.eq.s32.totalorder %v1649, 1
      %vm1682 = vcmp.eq.s32.totalorder %v1650, 1
      %vm1683 = vcmp.eq.s32.totalorder %v1651, 1
      %vm1684 = vcmp.eq.s32.totalorder %v1652, 1
      %vm1685 = vcmp.eq.s32.totalorder %v1653, 1
      %vm1686 = vcmp.eq.s32.totalorder %v1654, 1
      %vm1687 = vcmp.eq.s32.totalorder %v1655, 1
      %vm1688 = vcmp.eq.s32.totalorder %v1656, 1
      %vm1690 = vcmask 1046528
      %v1691 = vrot.slane %v1365, 1
      %v1692 = vrot.slane %v1366, 1
      %v1693 = vsel %vm1690, %v1691, %v1692
      %v1694 = vrot.slane %v1367, 1
      %v1695 = vsel %vm1690, %v1692, %v1694
      %v1696 = vrot.slane %v1368, 1
      %v1697 = vsel %vm1690, %v1694, %v1696
      %v1698 = vrot.slane %v1369, 1
      %v1699 = vsel %vm1690, %v1696, %v1698
      %v1700 = vrot.slane %v1370, 1
      %v1701 = vsel %vm1690, %v1698, %v1700
      %v1702 = vrot.slane %v1371, 1
      %v1703 = vsel %vm1690, %v1700, %v1702
      %v1704 = vrot.slane %v1372, 1
      %v1705 = vsel %vm1690, %v1702, %v1704
      %v1706 = vrot.slane %v1373, 1
      %v1707 = vsel %vm1690, %v1704, %v1706
      %v1708 = vrot.slane %v1374, 1
      %v1709 = vsel %vm1690, %v1706, %v1708
      %v1710 = vrot.slane %v1375, 1
      %v1711 = vsel %vm1690, %v1708, %v1710
      %v1712 = vrot.slane %v1376, 1
      %v1713 = vsel %vm1690, %v1710, %v1712
      %v1714 = vrot.slane %v1377, 1
      %v1715 = vsel %vm1690, %v1712, %v1714
      %v1716 = vrot.slane %v1378, 1
      %v1717 = vsel %vm1690, %v1714, %v1716
      %v1718 = vrot.slane %v1379, 1
      %v1719 = vsel %vm1690, %v1716, %v1718
      %v1720 = vrot.slane %v1380, 1
      %v1721 = vsel %vm1690, %v1718, %v1720
      %v1722 = vrot.slane %v1381, 1
      %v1723 = vsel %vm1690, %v1720, %v1722
      %v1724 = vrot.slane %v1382, 1
      %v1725 = vsel %vm1690, %v1722, %v1724
      %v1726 = vrot.slane %v1383, 1
      %v1727 = vsel %vm1690, %v1724, %v1726
      %v1728 = vrot.slane %v1384, 1
      %v1729 = vsel %vm1690, %v1726, %v1728
      %v1730 = vrot.slane %v1385, 1
      %v1731 = vsel %vm1690, %v1728, %v1730
      %v1732 = vrot.slane %v1386, 1
      %v1733 = vsel %vm1690, %v1730, %v1732
      %v1734 = vrot.slane %v1387, 1
      %v1735 = vsel %vm1690, %v1732, %v1734
      %v1736 = vrot.slane %v1388, 1
      %v1737 = vsel %vm1690, %v1734, %v1736
      %v1738 = vrot.slane %v1389, 1
      %v1739 = vsel %vm1690, %v1736, %v1738
      %v1740 = vrot.slane %v1390, 1
      %v1741 = vsel %vm1690, %v1738, %v1740
      %v1742 = vrot.slane %v1391, 1
      %v1743 = vsel %vm1690, %v1740, %v1742
      %v1744 = vrot.slane %v1392, 1
      %v1745 = vsel %vm1690, %v1742, %v1744
      %v1746 = vrot.slane %v1393, 1
      %v1747 = vsel %vm1690, %v1744, %v1746
      %v1748 = vrot.slane %v1394, 1
      %v1749 = vsel %vm1690, %v1746, %v1748
      %v1750 = vrot.slane %v1395, 1
      %v1751 = vsel %vm1690, %v1748, %v1750
      %v1752 = vrot.slane %v1396, 1
      %v1753 = vsel %vm1690, %v1750, %v1752
      %v1754 = vrot.slane %v1397, 1
      %v1755 = vsel %vm1690, %v1752, %v1754
      %v1788 = vsel %vm1657, %v1693, 0.0
      %v1789 = vsel %vm1658, %v1695, 0.0
      %v1790 = vsel %vm1659, %v1697, 0.0
      %v1791 = vsel %vm1660, %v1699, 0.0
      %v1792 = vsel %vm1661, %v1701, 0.0
      %v1793 = vsel %vm1662, %v1703, 0.0
      %v1794 = vsel %vm1663, %v1705, 0.0
      %v1795 = vsel %vm1664, %v1707, 0.0
      %v1796 = vsel %vm1665, %v1709, 0.0
      %v1797 = vsel %vm1666, %v1711, 0.0
      %v1798 = vsel %vm1667, %v1713, 0.0
      %v1799 = vsel %vm1668, %v1715, 0.0
      %v1800 = vsel %vm1669, %v1717, 0.0
      %v1801 = vsel %vm1670, %v1719, 0.0
      %v1802 = vsel %vm1671, %v1721, 0.0
      %v1803 = vsel %vm1672, %v1723, 0.0
      %v1804 = vsel %vm1673, %v1725, 0.0
      %v1805 = vsel %vm1674, %v1727, 0.0
      %v1806 = vsel %vm1675, %v1729, 0.0
      %v1807 = vsel %vm1676, %v1731, 0.0
      %v1808 = vsel %vm1677, %v1733, 0.0
      %v1809 = vsel %vm1678, %v1735, 0.0
      %v1810 = vsel %vm1679, %v1737, 0.0
      %v1811 = vsel %vm1680, %v1739, 0.0
      %v1812 = vsel %vm1681, %v1741, 0.0
      %v1813 = vsel %vm1682, %v1743, 0.0
      %v1814 = vsel %vm1683, %v1745, 0.0
      %v1815 = vsel %vm1684, %v1747, 0.0
      %v1816 = vsel %vm1685, %v1749, 0.0
      %v1817 = vsel %vm1686, %v1751, 0.0
      %v1818 = vsel %vm1687, %v1753, 0.0
      %v1819 = vsel %vm1688, %v1755, 0.0
      %v1820 = vpack.c.bf16 %v1594, %v1593
      %v1821 = vpack.c.bf16 %v1596, %v1595
      %v1822 = vpack.c.bf16 %v1598, %v1597
      %v1823 = vpack.c.bf16 %v1600, %v1599
      %v1824 = vpack.c.bf16 %v1602, %v1601
      %v1825 = vpack.c.bf16 %v1604, %v1603
      %v1826 = vpack.c.bf16 %v1606, %v1605
      %v1827 = vpack.c.bf16 %v1608, %v1607
      %v1828 = vpack.c.bf16 %v1610, %v1609
      %v1829 = vpack.c.bf16 %v1612, %v1611
      %v1830 = vpack.c.bf16 %v1614, %v1613
      %v1831 = vpack.c.bf16 %v1616, %v1615
      %v1832 = vpack.c.bf16 %v1618, %v1617
      %v1833 = vpack.c.bf16 %v1620, %v1619
      %v1834 = vpack.c.bf16 %v1622, %v1621
      %v1835 = vpack.c.bf16 %v1624, %v1623
      %v1836 = vld [vmem:[%s3] sm:$0x3]
      %v1837 = vpack.c.bf16 %v1366, %v1365
      %v1838 = vpack.c.bf16 %v1368, %v1367
      %v1839 = vpack.c.bf16 %v1370, %v1369
      %v1840 = vpack.c.bf16 %v1372, %v1371
      %v1841 = vpack.c.bf16 %v1374, %v1373
      %v1842 = vpack.c.bf16 %v1376, %v1375
      %v1843 = vpack.c.bf16 %v1378, %v1377
      %v1844 = vpack.c.bf16 %v1380, %v1379
      %v1845 = vpack.c.bf16 %v1382, %v1381
      %v1846 = vpack.c.bf16 %v1384, %v1383
      %v1847 = vpack.c.bf16 %v1386, %v1385
      %v1848 = vpack.c.bf16 %v1388, %v1387
      %v1849 = vpack.c.bf16 %v1390, %v1389
      %v1850 = vpack.c.bf16 %v1392, %v1391
      %v1851 = vpack.c.bf16 %v1394, %v1393
      %v1852 = vpack.c.bf16 %v1396, %v1395
      %s1853 = scalar_lea.vmem %s3, 2
      %v1854 = vld [vmem:[%s1853] sm:$0x3]
      %v1856 = vsel %vm677, %v1837, 0
      %v1859 = vsel %vm677, %v1838, 0
      %v1862 = vsel %vm677, %v1839, 0
      %v1865 = vsel %vm677, %v1840, 0
      %v1868 = vsel %vm677, %v1841, 0
      %v1871 = vsel %vm677, %v1842, 0
      %v1874 = vsel %vm677, %v1843, 0
      %v1877 = vsel %vm677, %v1844, 0
      %v1880 = vsel %vm677, %v1845, 0
      %v1883 = vsel %vm677, %v1846, 0
      %v1886 = vsel %vm677, %v1847, 0
      %v1889 = vsel %vm677, %v1848, 0
      %v1892 = vsel %vm677, %v1849, 0
      %v1895 = vsel %vm677, %v1850, 0
      %v1898 = vsel %vm677, %v1851, 0
      %v1901 = vsel %vm677, %v1852, 0
      %vm1903 = vcmask 1041408
      %v1905 = vsel %vm1903, %v1854, 0
      %1907 = vmatprep.subr.bf16.mxu0 0
      %1908 = vmatpush1.bf16.msra.mxu0 0
      %1909 = vmatprep.subr.bf16.mxu0 0
      %1910 = vmatpush1.bf16.msra.mxu0 0
      %1911 = vmatprep.subr.bf16.mxu0 0
      %1912 = vmatpush1.bf16.msra.mxu0 0
      %1913 = vmatprep.subr.bf16.mxu0 0
      %1914 = vmatpush1.bf16.msra.mxu0 0
      %1915 = vmatprep.subr.bf16.mxu0 0
      %1916 = vmatpush1.bf16.msra.mxu0 0
      %1917 = vmatprep.subr.bf16.mxu0 0
      %1918 = vmatpush1.bf16.msra.mxu0 0
      %1919 = vmatprep.subr.bf16.mxu0 0
      %1920 = vmatpush1.bf16.msra.mxu0 0
      %1921 = vmatprep.subr.bf16.mxu0 0
      %1922 = vmatpush1.bf16.msra.mxu0 %v1905
      %1923 = vmatprep.subr.bf16.mxu0 0
      %1924 = vmatpush2.bf16.msra.mxu0 0
      %1925 = vmatprep.subr.bf16.mxu0 0
      %1926 = vmatpush2.bf16.msra.mxu0 0
      %1927 = vmatprep.subr.bf16.mxu0 0
      %1928 = vmatpush2.bf16.msra.mxu0 0
      %1929 = vmatprep.subr.bf16.mxu0 0
      %1930 = vmatpush2.bf16.msra.mxu0 0
      %1931 = vmatprep.subr.bf16.mxu0 0
      %1932 = vmatpush2.bf16.msra.mxu0 0
      %1933 = vmatprep.subr.bf16.mxu0 0
      %1934 = vmatpush2.bf16.msra.mxu0 0
      %1935 = vmatprep.subr.bf16.mxu0 0
      %1936 = vmatpush2.bf16.msra.mxu0 0
      %1937 = vmatprep.subr.bf16.mxu0 0
      %1938 = vmatpush2.bf16.msra.mxu0 0
      %1939 = vmatprep.mubr.bf16.mxu0 0
      %1940 = vmatmul.mubr.bf16.gmra.mxu0 %v1856
      %v1941 = vpop.f32.mrf.mxu0
      %v1942 = vadd.f32 0.0, %v1941
      %v1943 = vpop.f32.mrf.mxu0
      %v1944 = vpop.f32.mrf.mxu0
      %v1945 = vadd.f32 0.0, %v1944
      %v1946 = vpop.f32.mrf.mxu0
      %1947 = vmatprep.mubr.bf16.mxu0 0
      %1948 = vmatmul.mubr.bf16.gmra.mxu0 %v1859
      %v1949 = vpop.f32.mrf.mxu0
      %v1950 = vadd.f32 0.0, %v1949
      %v1951 = vpop.f32.mrf.mxu0
      %v1952 = vpop.f32.mrf.mxu0
      %v1953 = vadd.f32 0.0, %v1952
      %v1954 = vpop.f32.mrf.mxu0
      %1955 = vmatprep.mubr.bf16.mxu0 0
      %1956 = vmatmul.mubr.bf16.gmra.mxu0 %v1862
      %v1957 = vpop.f32.mrf.mxu0
      %v1958 = vadd.f32 0.0, %v1957
      %v1959 = vpop.f32.mrf.mxu0
      %v1960 = vpop.f32.mrf.mxu0
      %v1961 = vadd.f32 0.0, %v1960
      %v1962 = vpop.f32.mrf.mxu0
      %1963 = vmatprep.mubr.bf16.mxu0 0
      %1964 = vmatmul.mubr.bf16.gmra.mxu0 %v1865
      %v1965 = vpop.f32.mrf.mxu0
      %v1966 = vadd.f32 0.0, %v1965
      %v1967 = vpop.f32.mrf.mxu0
      %v1968 = vpop.f32.mrf.mxu0
      %v1969 = vadd.f32 0.0, %v1968
      %v1970 = vpop.f32.mrf.mxu0
      %1971 = vmatprep.mubr.bf16.mxu0 0
      %1972 = vmatmul.mubr.bf16.gmra.mxu0 %v1868
      %v1973 = vpop.f32.mrf.mxu0
      %v1974 = vadd.f32 0.0, %v1973
      %v1975 = vpop.f32.mrf.mxu0
      %v1976 = vpop.f32.mrf.mxu0
      %v1977 = vadd.f32 0.0, %v1976
      %v1978 = vpop.f32.mrf.mxu0
      %1979 = vmatprep.mubr.bf16.mxu0 0
      %1980 = vmatmul.mubr.bf16.gmra.mxu0 %v1871
      %v1981 = vpop.f32.mrf.mxu0
      %v1982 = vadd.f32 0.0, %v1981
      %v1983 = vpop.f32.mrf.mxu0
      %v1984 = vpop.f32.mrf.mxu0
      %v1985 = vadd.f32 0.0, %v1984
      %v1986 = vpop.f32.mrf.mxu0
      %1987 = vmatprep.mubr.bf16.mxu0 0
      %1988 = vmatmul.mubr.bf16.gmra.mxu0 %v1874
      %v1989 = vpop.f32.mrf.mxu0
      %v1990 = vadd.f32 0.0, %v1989
      %v1991 = vpop.f32.mrf.mxu0
      %v1992 = vpop.f32.mrf.mxu0
      %v1993 = vadd.f32 0.0, %v1992
      %v1994 = vpop.f32.mrf.mxu0
      %1995 = vmatprep.mubr.bf16.mxu0 0
      %1996 = vmatmul.mubr.bf16.gmra.mxu0 %v1877
      %v1997 = vpop.f32.mrf.mxu0
      %v1998 = vadd.f32 0.0, %v1997
      %v1999 = vpop.f32.mrf.mxu0
      %v2000 = vpop.f32.mrf.mxu0
      %v2001 = vadd.f32 0.0, %v2000
      %v2002 = vpop.f32.mrf.mxu0
      %2003 = vmatprep.mubr.bf16.mxu0 0
      %2004 = vmatmul.mubr.bf16.gmra.mxu0 %v1880
      %v2005 = vpop.f32.mrf.mxu0
      %v2006 = vadd.f32 0.0, %v2005
      %v2007 = vpop.f32.mrf.mxu0
      %v2008 = vpop.f32.mrf.mxu0
      %v2009 = vadd.f32 0.0, %v2008
      %v2010 = vpop.f32.mrf.mxu0
      %2011 = vmatprep.mubr.bf16.mxu0 0
      %2012 = vmatmul.mubr.bf16.gmra.mxu0 %v1883
      %v2013 = vpop.f32.mrf.mxu0
      %v2014 = vadd.f32 0.0, %v2013
      %v2015 = vpop.f32.mrf.mxu0
      %v2016 = vpop.f32.mrf.mxu0
      %v2017 = vadd.f32 0.0, %v2016
      %v2018 = vpop.f32.mrf.mxu0
      %2019 = vmatprep.mubr.bf16.mxu0 0
      %2020 = vmatmul.mubr.bf16.gmra.mxu0 %v1886
      %v2021 = vpop.f32.mrf.mxu0
      %v2022 = vadd.f32 0.0, %v2021
      %v2023 = vpop.f32.mrf.mxu0
      %v2024 = vpop.f32.mrf.mxu0
      %v2025 = vadd.f32 0.0, %v2024
      %v2026 = vpop.f32.mrf.mxu0
      %2027 = vmatprep.mubr.bf16.mxu0 0
      %2028 = vmatmul.mubr.bf16.gmra.mxu0 %v1889
      %v2029 = vpop.f32.mrf.mxu0
      %v2030 = vadd.f32 0.0, %v2029
      %v2031 = vpop.f32.mrf.mxu0
      %v2032 = vpop.f32.mrf.mxu0
      %v2033 = vadd.f32 0.0, %v2032
      %v2034 = vpop.f32.mrf.mxu0
      %2035 = vmatprep.mubr.bf16.mxu0 0
      %2036 = vmatmul.mubr.bf16.gmra.mxu0 %v1892
      %v2037 = vpop.f32.mrf.mxu0
      %v2038 = vadd.f32 0.0, %v2037
      %v2039 = vpop.f32.mrf.mxu0
      %v2040 = vpop.f32.mrf.mxu0
      %v2041 = vadd.f32 0.0, %v2040
      %v2042 = vpop.f32.mrf.mxu0
      %2043 = vmatprep.mubr.bf16.mxu0 0
      %2044 = vmatmul.mubr.bf16.gmra.mxu0 %v1895
      %v2045 = vpop.f32.mrf.mxu0
      %v2046 = vadd.f32 0.0, %v2045
      %v2047 = vpop.f32.mrf.mxu0
      %v2048 = vpop.f32.mrf.mxu0
      %v2049 = vadd.f32 0.0, %v2048
      %v2050 = vpop.f32.mrf.mxu0
      %2051 = vmatprep.mubr.bf16.mxu0 0
      %2052 = vmatmul.mubr.bf16.gmra.mxu0 %v1898
      %v2053 = vpop.f32.mrf.mxu0
      %v2054 = vadd.f32 0.0, %v2053
      %v2055 = vpop.f32.mrf.mxu0
      %v2056 = vpop.f32.mrf.mxu0
      %v2057 = vadd.f32 0.0, %v2056
      %v2058 = vpop.f32.mrf.mxu0
      %2059 = vmatprep.mubr.bf16.mxu0 0
      %2060 = vmatmul.mubr.bf16.gmra.mxu0 %v1901
      %v2061 = vpop.f32.mrf.mxu0
      %v2062 = vadd.f32 0.0, %v2061
      %v2063 = vpop.f32.mrf.mxu0
      %v2064 = vpop.f32.mrf.mxu0
      %v2065 = vadd.f32 0.0, %v2064
      %v2066 = vpop.f32.mrf.mxu0
      %2067 = vdwg.mxu0
      %v2069 = vsel %vm677, %v1820, 0
      %v2072 = vsel %vm677, %v1821, 0
      %v2075 = vsel %vm677, %v1822, 0
      %v2078 = vsel %vm677, %v1823, 0
      %v2081 = vsel %vm677, %v1824, 0
      %v2084 = vsel %vm677, %v1825, 0
      %v2087 = vsel %vm677, %v1826, 0
      %v2090 = vsel %vm677, %v1827, 0
      %v2093 = vsel %vm677, %v1828, 0
      %v2096 = vsel %vm677, %v1829, 0
      %v2099 = vsel %vm677, %v1830, 0
      %v2102 = vsel %vm677, %v1831, 0
      %v2105 = vsel %vm677, %v1832, 0
      %v2108 = vsel %vm677, %v1833, 0
      %v2111 = vsel %vm677, %v1834, 0
      %v2114 = vsel %vm677, %v1835, 0
      %v2117 = vsel %vm1903, %v1836, 0
      %2119 = vmatprep.subr.bf16.mxu0 0
      %2120 = vmatpush1.bf16.msra.mxu0 0
      %2121 = vmatprep.subr.bf16.mxu0 0
      %2122 = vmatpush1.bf16.msra.mxu0 0
      %2123 = vmatprep.subr.bf16.mxu0 0
      %2124 = vmatpush1.bf16.msra.mxu0 0
      %2125 = vmatprep.subr.bf16.mxu0 0
      %2126 = vmatpush1.bf16.msra.mxu0 0
      %2127 = vmatprep.subr.bf16.mxu0 0
      %2128 = vmatpush1.bf16.msra.mxu0 0
      %2129 = vmatprep.subr.bf16.mxu0 0
      %2130 = vmatpush1.bf16.msra.mxu0 0
      %2131 = vmatprep.subr.bf16.mxu0 0
      %2132 = vmatpush1.bf16.msra.mxu0 0
      %2133 = vmatprep.subr.bf16.mxu0 0
      %2134 = vmatpush1.bf16.msra.mxu0 %v2117
      %2135 = vmatprep.subr.bf16.mxu0 0
      %2136 = vmatpush2.bf16.msra.mxu0 0
      %2137 = vmatprep.subr.bf16.mxu0 0
      %2138 = vmatpush2.bf16.msra.mxu0 0
      %2139 = vmatprep.subr.bf16.mxu0 0
      %2140 = vmatpush2.bf16.msra.mxu0 0
      %2141 = vmatprep.subr.bf16.mxu0 0
      %2142 = vmatpush2.bf16.msra.mxu0 0
      %2143 = vmatprep.subr.bf16.mxu0 0
      %2144 = vmatpush2.bf16.msra.mxu0 0
      %2145 = vmatprep.subr.bf16.mxu0 0
      %2146 = vmatpush2.bf16.msra.mxu0 0
      %2147 = vmatprep.subr.bf16.mxu0 0
      %2148 = vmatpush2.bf16.msra.mxu0 0
      %2149 = vmatprep.subr.bf16.mxu0 0
      %2150 = vmatpush2.bf16.msra.mxu0 0
      %2151 = vmatprep.mubr.bf16.mxu0 0
      %2152 = vmatmul.mubr.bf16.gmra.mxu0 %v2069
      %v2153 = vpop.f32.mrf.mxu0
      %v2154 = vadd.f32 %v1942, %v2153
      %v2155 = vpop.f32.mrf.mxu0
      %v2156 = vpop.f32.mrf.mxu0
      %v2157 = vadd.f32 %v1945, %v2156
      %v2158 = vpop.f32.mrf.mxu0
      %2159 = vmatprep.mubr.bf16.mxu0 0
      %2160 = vmatmul.mubr.bf16.gmra.mxu0 %v2072
      %v2161 = vpop.f32.mrf.mxu0
      %v2162 = vadd.f32 %v1950, %v2161
      %v2163 = vpop.f32.mrf.mxu0
      %v2164 = vpop.f32.mrf.mxu0
      %v2165 = vadd.f32 %v1953, %v2164
      %v2166 = vpop.f32.mrf.mxu0
      %2167 = vmatprep.mubr.bf16.mxu0 0
      %2168 = vmatmul.mubr.bf16.gmra.mxu0 %v2075
      %v2169 = vpop.f32.mrf.mxu0
      %v2170 = vadd.f32 %v1958, %v2169
      %v2171 = vpop.f32.mrf.mxu0
      %v2172 = vpop.f32.mrf.mxu0
      %v2173 = vadd.f32 %v1961, %v2172
      %v2174 = vpop.f32.mrf.mxu0
      %2175 = vmatprep.mubr.bf16.mxu0 0
      %2176 = vmatmul.mubr.bf16.gmra.mxu0 %v2078
      %v2177 = vpop.f32.mrf.mxu0
      %v2178 = vadd.f32 %v1966, %v2177
      %v2179 = vpop.f32.mrf.mxu0
      %v2180 = vpop.f32.mrf.mxu0
      %v2181 = vadd.f32 %v1969, %v2180
      %v2182 = vpop.f32.mrf.mxu0
      %2183 = vmatprep.mubr.bf16.mxu0 0
      %2184 = vmatmul.mubr.bf16.gmra.mxu0 %v2081
      %v2185 = vpop.f32.mrf.mxu0
      %v2186 = vadd.f32 %v1974, %v2185
      %v2187 = vpop.f32.mrf.mxu0
      %v2188 = vpop.f32.mrf.mxu0
      %v2189 = vadd.f32 %v1977, %v2188
      %v2190 = vpop.f32.mrf.mxu0
      %2191 = vmatprep.mubr.bf16.mxu0 0
      %2192 = vmatmul.mubr.bf16.gmra.mxu0 %v2084
      %v2193 = vpop.f32.mrf.mxu0
      %v2194 = vadd.f32 %v1982, %v2193
      %v2195 = vpop.f32.mrf.mxu0
      %v2196 = vpop.f32.mrf.mxu0
      %v2197 = vadd.f32 %v1985, %v2196
      %v2198 = vpop.f32.mrf.mxu0
      %2199 = vmatprep.mubr.bf16.mxu0 0
      %2200 = vmatmul.mubr.bf16.gmra.mxu0 %v2087
      %v2201 = vpop.f32.mrf.mxu0
      %v2202 = vadd.f32 %v1990, %v2201
      %v2203 = vpop.f32.mrf.mxu0
      %v2204 = vpop.f32.mrf.mxu0
      %v2205 = vadd.f32 %v1993, %v2204
      %v2206 = vpop.f32.mrf.mxu0
      %2207 = vmatprep.mubr.bf16.mxu0 0
      %2208 = vmatmul.mubr.bf16.gmra.mxu0 %v2090
      %v2209 = vpop.f32.mrf.mxu0
      %v2210 = vadd.f32 %v1998, %v2209
      %v2211 = vpop.f32.mrf.mxu0
      %v2212 = vpop.f32.mrf.mxu0
      %v2213 = vadd.f32 %v2001, %v2212
      %v2214 = vpop.f32.mrf.mxu0
      %2215 = vmatprep.mubr.bf16.mxu0 0
      %2216 = vmatmul.mubr.bf16.gmra.mxu0 %v2093
      %v2217 = vpop.f32.mrf.mxu0
      %v2218 = vadd.f32 %v2006, %v2217
      %v2219 = vpop.f32.mrf.mxu0
      %v2220 = vpop.f32.mrf.mxu0
      %v2221 = vadd.f32 %v2009, %v2220
      %v2222 = vpop.f32.mrf.mxu0
      %2223 = vmatprep.mubr.bf16.mxu0 0
      %2224 = vmatmul.mubr.bf16.gmra.mxu0 %v2096
      %v2225 = vpop.f32.mrf.mxu0
      %v2226 = vadd.f32 %v2014, %v2225
      %v2227 = vpop.f32.mrf.mxu0
      %v2228 = vpop.f32.mrf.mxu0
      %v2229 = vadd.f32 %v2017, %v2228
      %v2230 = vpop.f32.mrf.mxu0
      %2231 = vmatprep.mubr.bf16.mxu0 0
      %2232 = vmatmul.mubr.bf16.gmra.mxu0 %v2099
      %v2233 = vpop.f32.mrf.mxu0
      %v2234 = vadd.f32 %v2022, %v2233
      %v2235 = vpop.f32.mrf.mxu0
      %v2236 = vpop.f32.mrf.mxu0
      %v2237 = vadd.f32 %v2025, %v2236
      %v2238 = vpop.f32.mrf.mxu0
      %2239 = vmatprep.mubr.bf16.mxu0 0
      %2240 = vmatmul.mubr.bf16.gmra.mxu0 %v2102
      %v2241 = vpop.f32.mrf.mxu0
      %v2242 = vadd.f32 %v2030, %v2241
      %v2243 = vpop.f32.mrf.mxu0
      %v2244 = vpop.f32.mrf.mxu0
      %v2245 = vadd.f32 %v2033, %v2244
      %v2246 = vpop.f32.mrf.mxu0
      %2247 = vmatprep.mubr.bf16.mxu0 0
      %2248 = vmatmul.mubr.bf16.gmra.mxu0 %v2105
      %v2249 = vpop.f32.mrf.mxu0
      %v2250 = vadd.f32 %v2038, %v2249
      %v2251 = vpop.f32.mrf.mxu0
      %v2252 = vpop.f32.mrf.mxu0
      %v2253 = vadd.f32 %v2041, %v2252
      %v2254 = vpop.f32.mrf.mxu0
      %2255 = vmatprep.mubr.bf16.mxu0 0
      %2256 = vmatmul.mubr.bf16.gmra.mxu0 %v2108
      %v2257 = vpop.f32.mrf.mxu0
      %v2258 = vadd.f32 %v2046, %v2257
      %v2259 = vpop.f32.mrf.mxu0
      %v2260 = vpop.f32.mrf.mxu0
      %v2261 = vadd.f32 %v2049, %v2260
      %v2262 = vpop.f32.mrf.mxu0
      %2263 = vmatprep.mubr.bf16.mxu0 0
      %2264 = vmatmul.mubr.bf16.gmra.mxu0 %v2111
      %v2265 = vpop.f32.mrf.mxu0
      %v2266 = vadd.f32 %v2054, %v2265
      %v2267 = vpop.f32.mrf.mxu0
      %v2268 = vpop.f32.mrf.mxu0
      %v2269 = vadd.f32 %v2057, %v2268
      %v2270 = vpop.f32.mrf.mxu0
      %2271 = vmatprep.mubr.bf16.mxu0 0
      %2272 = vmatmul.mubr.bf16.gmra.mxu0 %v2114
      %v2273 = vpop.f32.mrf.mxu0
      %v2274 = vadd.f32 %v2062, %v2273
      %v2275 = vpop.f32.mrf.mxu0
      %v2276 = vpop.f32.mrf.mxu0
      %v2277 = vadd.f32 %v2065, %v2276
      %v2278 = vpop.f32.mrf.mxu0
      %2279 = vdwg.mxu0
      %v2280 = vpack.c.bf16 %v1789, %v1788
      %v2281 = vpack.c.bf16 %v1791, %v1790
      %v2282 = vpack.c.bf16 %v1793, %v1792
      %v2283 = vpack.c.bf16 %v1795, %v1794
      %v2284 = vpack.c.bf16 %v1797, %v1796
      %v2285 = vpack.c.bf16 %v1799, %v1798
      %v2286 = vpack.c.bf16 %v1801, %v1800
      %v2287 = vpack.c.bf16 %v1803, %v1802
      %v2288 = vpack.c.bf16 %v1805, %v1804
      %v2289 = vpack.c.bf16 %v1807, %v1806
      %v2290 = vpack.c.bf16 %v1809, %v1808
      %v2291 = vpack.c.bf16 %v1811, %v1810
      %v2292 = vpack.c.bf16 %v1813, %v1812
      %v2293 = vpack.c.bf16 %v1815, %v1814
      %v2294 = vpack.c.bf16 %v1817, %v1816
      %v2295 = vpack.c.bf16 %v1819, %v1818
      %s2296 = scalar_lea.vmem %s3, 4
      %v2297 = vld [vmem:[%s2296] sm:$0x3]
      %v2299 = vsel %vm677, %v2280, 0
      %v2302 = vsel %vm677, %v2281, 0
      %v2305 = vsel %vm677, %v2282, 0
      %v2308 = vsel %vm677, %v2283, 0
      %v2311 = vsel %vm677, %v2284, 0
      %v2314 = vsel %vm677, %v2285, 0
      %v2317 = vsel %vm677, %v2286, 0
      %v2320 = vsel %vm677, %v2287, 0
      %v2323 = vsel %vm677, %v2288, 0
      %v2326 = vsel %vm677, %v2289, 0
      %v2329 = vsel %vm677, %v2290, 0
      %v2332 = vsel %vm677, %v2291, 0
      %v2335 = vsel %vm677, %v2292, 0
      %v2338 = vsel %vm677, %v2293, 0
      %v2341 = vsel %vm677, %v2294, 0
      %v2344 = vsel %vm677, %v2295, 0
      %v2347 = vsel %vm1903, %v2297, 0
      %2349 = vmatprep.subr.bf16.mxu0 0
      %2350 = vmatpush1.bf16.msra.mxu0 0
      %2351 = vmatprep.subr.bf16.mxu0 0
      %2352 = vmatpush1.bf16.msra.mxu0 0
      %2353 = vmatprep.subr.bf16.mxu0 0
      %2354 = vmatpush1.bf16.msra.mxu0 0
      %2355 = vmatprep.subr.bf16.mxu0 0
      %2356 = vmatpush1.bf16.msra.mxu0 0
      %2357 = vmatprep.subr.bf16.mxu0 0
      %2358 = vmatpush1.bf16.msra.mxu0 0
      %2359 = vmatprep.subr.bf16.mxu0 0
      %2360 = vmatpush1.bf16.msra.mxu0 0
      %2361 = vmatprep.subr.bf16.mxu0 0
      %2362 = vmatpush1.bf16.msra.mxu0 0
      %2363 = vmatprep.subr.bf16.mxu0 0
      %2364 = vmatpush1.bf16.msra.mxu0 %v2347
      %2365 = vmatprep.subr.bf16.mxu0 0
      %2366 = vmatpush2.bf16.msra.mxu0 0
      %2367 = vmatprep.subr.bf16.mxu0 0
      %2368 = vmatpush2.bf16.msra.mxu0 0
      %2369 = vmatprep.subr.bf16.mxu0 0
      %2370 = vmatpush2.bf16.msra.mxu0 0
      %2371 = vmatprep.subr.bf16.mxu0 0
      %2372 = vmatpush2.bf16.msra.mxu0 0
      %2373 = vmatprep.subr.bf16.mxu0 0
      %2374 = vmatpush2.bf16.msra.mxu0 0
      %2375 = vmatprep.subr.bf16.mxu0 0
      %2376 = vmatpush2.bf16.msra.mxu0 0
      %2377 = vmatprep.subr.bf16.mxu0 0
      %2378 = vmatpush2.bf16.msra.mxu0 0
      %2379 = vmatprep.subr.bf16.mxu0 0
      %2380 = vmatpush2.bf16.msra.mxu0 0
      %2381 = vmatprep.mubr.bf16.mxu0 0
      %2382 = vmatmul.mubr.bf16.gmra.mxu0 %v2299
      %v2383 = vpop.f32.mrf.mxu0
      %v2384 = vadd.f32 0.0, %v2383
      %v2385 = vpop.f32.mrf.mxu0
      %v2386 = vpop.f32.mrf.mxu0
      %v2387 = vadd.f32 0.0, %v2386
      %v2388 = vpop.f32.mrf.mxu0
      %2389 = vmatprep.mubr.bf16.mxu0 0
      %2390 = vmatmul.mubr.bf16.gmra.mxu0 %v2302
      %v2391 = vpop.f32.mrf.mxu0
      %v2392 = vadd.f32 0.0, %v2391
      %v2393 = vpop.f32.mrf.mxu0
      %v2394 = vpop.f32.mrf.mxu0
      %v2395 = vadd.f32 0.0, %v2394
      %v2396 = vpop.f32.mrf.mxu0
      %2397 = vmatprep.mubr.bf16.mxu0 0
      %2398 = vmatmul.mubr.bf16.gmra.mxu0 %v2305
      %v2399 = vpop.f32.mrf.mxu0
      %v2400 = vadd.f32 0.0, %v2399
      %v2401 = vpop.f32.mrf.mxu0
      %v2402 = vpop.f32.mrf.mxu0
      %v2403 = vadd.f32 0.0, %v2402
      %v2404 = vpop.f32.mrf.mxu0
      %2405 = vmatprep.mubr.bf16.mxu0 0
      %2406 = vmatmul.mubr.bf16.gmra.mxu0 %v2308
      %v2407 = vpop.f32.mrf.mxu0
      %v2408 = vadd.f32 0.0, %v2407
      %v2409 = vpop.f32.mrf.mxu0
      %v2410 = vpop.f32.mrf.mxu0
      %v2411 = vadd.f32 0.0, %v2410
      %v2412 = vpop.f32.mrf.mxu0
      %2413 = vmatprep.mubr.bf16.mxu0 0
      %2414 = vmatmul.mubr.bf16.gmra.mxu0 %v2311
      %v2415 = vpop.f32.mrf.mxu0
      %v2416 = vadd.f32 0.0, %v2415
      %v2417 = vpop.f32.mrf.mxu0
      %v2418 = vpop.f32.mrf.mxu0
      %v2419 = vadd.f32 0.0, %v2418
      %v2420 = vpop.f32.mrf.mxu0
      %2421 = vmatprep.mubr.bf16.mxu0 0
      %2422 = vmatmul.mubr.bf16.gmra.mxu0 %v2314
      %v2423 = vpop.f32.mrf.mxu0
      %v2424 = vadd.f32 0.0, %v2423
      %v2425 = vpop.f32.mrf.mxu0
      %v2426 = vpop.f32.mrf.mxu0
      %v2427 = vadd.f32 0.0, %v2426
      %v2428 = vpop.f32.mrf.mxu0
      %2429 = vmatprep.mubr.bf16.mxu0 0
      %2430 = vmatmul.mubr.bf16.gmra.mxu0 %v2317
      %v2431 = vpop.f32.mrf.mxu0
      %v2432 = vadd.f32 0.0, %v2431
      %v2433 = vpop.f32.mrf.mxu0
      %v2434 = vpop.f32.mrf.mxu0
      %v2435 = vadd.f32 0.0, %v2434
      %v2436 = vpop.f32.mrf.mxu0
      %2437 = vmatprep.mubr.bf16.mxu0 0
      %2438 = vmatmul.mubr.bf16.gmra.mxu0 %v2320
      %v2439 = vpop.f32.mrf.mxu0
      %v2440 = vadd.f32 0.0, %v2439
      %v2441 = vpop.f32.mrf.mxu0
      %v2442 = vpop.f32.mrf.mxu0
      %v2443 = vadd.f32 0.0, %v2442
      %v2444 = vpop.f32.mrf.mxu0
      %2445 = vmatprep.mubr.bf16.mxu0 0
      %2446 = vmatmul.mubr.bf16.gmra.mxu0 %v2323
      %v2447 = vpop.f32.mrf.mxu0
      %v2448 = vadd.f32 0.0, %v2447
      %v2449 = vpop.f32.mrf.mxu0
      %v2450 = vpop.f32.mrf.mxu0
      %v2451 = vadd.f32 0.0, %v2450
      %v2452 = vpop.f32.mrf.mxu0
      %2453 = vmatprep.mubr.bf16.mxu0 0
      %2454 = vmatmul.mubr.bf16.gmra.mxu0 %v2326
      %v2455 = vpop.f32.mrf.mxu0
      %v2456 = vadd.f32 0.0, %v2455
      %v2457 = vpop.f32.mrf.mxu0
      %v2458 = vpop.f32.mrf.mxu0
      %v2459 = vadd.f32 0.0, %v2458
      %v2460 = vpop.f32.mrf.mxu0
      %2461 = vmatprep.mubr.bf16.mxu0 0
      %2462 = vmatmul.mubr.bf16.gmra.mxu0 %v2329
      %v2463 = vpop.f32.mrf.mxu0
      %v2464 = vadd.f32 0.0, %v2463
      %v2465 = vpop.f32.mrf.mxu0
      %v2466 = vpop.f32.mrf.mxu0
      %v2467 = vadd.f32 0.0, %v2466
      %v2468 = vpop.f32.mrf.mxu0
      %2469 = vmatprep.mubr.bf16.mxu0 0
      %2470 = vmatmul.mubr.bf16.gmra.mxu0 %v2332
      %v2471 = vpop.f32.mrf.mxu0
      %v2472 = vadd.f32 0.0, %v2471
      %v2473 = vpop.f32.mrf.mxu0
      %v2474 = vpop.f32.mrf.mxu0
      %v2475 = vadd.f32 0.0, %v2474
      %v2476 = vpop.f32.mrf.mxu0
      %2477 = vmatprep.mubr.bf16.mxu0 0
      %2478 = vmatmul.mubr.bf16.gmra.mxu0 %v2335
      %v2479 = vpop.f32.mrf.mxu0
      %v2480 = vadd.f32 0.0, %v2479
      %v2481 = vpop.f32.mrf.mxu0
      %v2482 = vpop.f32.mrf.mxu0
      %v2483 = vadd.f32 0.0, %v2482
      %v2484 = vpop.f32.mrf.mxu0
      %2485 = vmatprep.mubr.bf16.mxu0 0
      %2486 = vmatmul.mubr.bf16.gmra.mxu0 %v2338
      %v2487 = vpop.f32.mrf.mxu0
      %v2488 = vadd.f32 0.0, %v2487
      %v2489 = vpop.f32.mrf.mxu0
      %v2490 = vpop.f32.mrf.mxu0
      %v2491 = vadd.f32 0.0, %v2490
      %v2492 = vpop.f32.mrf.mxu0
      %2493 = vmatprep.mubr.bf16.mxu0 0
      %2494 = vmatmul.mubr.bf16.gmra.mxu0 %v2341
      %v2495 = vpop.f32.mrf.mxu0
      %v2496 = vadd.f32 0.0, %v2495
      %v2497 = vpop.f32.mrf.mxu0
      %v2498 = vpop.f32.mrf.mxu0
      %v2499 = vadd.f32 0.0, %v2498
      %v2500 = vpop.f32.mrf.mxu0
      %2501 = vmatprep.mubr.bf16.mxu0 0
      %2502 = vmatmul.mubr.bf16.gmra.mxu0 %v2344
      %v2503 = vpop.f32.mrf.mxu0
      %v2504 = vadd.f32 0.0, %v2503
      %v2505 = vpop.f32.mrf.mxu0
      %v2506 = vpop.f32.mrf.mxu0
      %v2507 = vadd.f32 0.0, %v2506
      %v2508 = vpop.f32.mrf.mxu0
      %2509 = vdwg.mxu0
      %v2510 = vadd.f32 %v2154, %v2384
      %v2511 = vadd.f32 %v2157, %v2387
      %v2512 = vadd.f32 %v2162, %v2392
      %v2513 = vadd.f32 %v2165, %v2395
      %v2514 = vadd.f32 %v2170, %v2400
      %v2515 = vadd.f32 %v2173, %v2403
      %v2516 = vadd.f32 %v2178, %v2408
      %v2517 = vadd.f32 %v2181, %v2411
      %v2518 = vadd.f32 %v2186, %v2416
      %v2519 = vadd.f32 %v2189, %v2419
      %v2520 = vadd.f32 %v2194, %v2424
      %v2521 = vadd.f32 %v2197, %v2427
      %v2522 = vadd.f32 %v2202, %v2432
      %v2523 = vadd.f32 %v2205, %v2435
      %v2524 = vadd.f32 %v2210, %v2440
      %v2525 = vadd.f32 %v2213, %v2443
      %v2526 = vadd.f32 %v2218, %v2448
      %v2527 = vadd.f32 %v2221, %v2451
      %v2528 = vadd.f32 %v2226, %v2456
      %v2529 = vadd.f32 %v2229, %v2459
      %v2530 = vadd.f32 %v2234, %v2464
      %v2531 = vadd.f32 %v2237, %v2467
      %v2532 = vadd.f32 %v2242, %v2472
      %v2533 = vadd.f32 %v2245, %v2475
      %v2534 = vadd.f32 %v2250, %v2480
      %v2535 = vadd.f32 %v2253, %v2483
      %v2536 = vadd.f32 %v2258, %v2488
      %v2537 = vadd.f32 %v2261, %v2491
      %v2538 = vadd.f32 %v2266, %v2496
      %v2539 = vadd.f32 %v2269, %v2499
      %v2540 = vadd.f32 %v2274, %v2504
      %v2541 = vadd.f32 %v2277, %v2507
      %v2542 = vld [vmem:[#allocation2 + $0x10] sm:$0xff]
      %v2543 = vld [vmem:[#allocation2 + $0x18] sm:$0xff]
      %v2544 = vld [vmem:[#allocation2 + $0x20] sm:$0xff]
      %v2545 = vld [vmem:[#allocation2 + $0x28] sm:$0xff]
      %v2546 = vld [vmem:[#allocation2 + $0x30] sm:$0xff]
      %v2547 = vld [vmem:[#allocation2 + $0x38] sm:$0xff]
      %v2548 = vld [vmem:[#allocation2 + $0x40] sm:$0xff]
      %v2549 = vld [vmem:[#allocation2 + $0x48] sm:$0xff]
      %v2550 = vld [vmem:[#allocation2 + $0x50] sm:$0xff]
      %v2551 = vld [vmem:[#allocation2 + $0x58] sm:$0xff]
      %v2552 = vld [vmem:[#allocation2 + $0x60] sm:$0xff]
      %v2553 = vld [vmem:[#allocation2 + $0x68] sm:$0xff]
      %v2554 = vld [vmem:[#allocation2 + $0x70] sm:$0xff]
      %v2555 = vld [vmem:[#allocation2 + $0x78] sm:$0xff]
      %v2556 = vld [vmem:[#allocation2 + $0x80] sm:$0xff]
      %v2557 = vld [vmem:[#allocation2 + $0x88] sm:$0xff]
      %v2558 = vld [vmem:[#allocation2 + $0x90] sm:$0xff]
      %v2559 = vld [vmem:[#allocation2 + $0x98] sm:$0xff]
      %v2560 = vld [vmem:[#allocation2 + $0xa0] sm:$0xff]
      %v2561 = vld [vmem:[#allocation2 + $0xa8] sm:$0xff]
      %v2562 = vld [vmem:[#allocation2 + $0xb0] sm:$0xff]
      %v2563 = vld [vmem:[#allocation2 + $0xb8] sm:$0xff]
      %v2564 = vld [vmem:[#allocation2 + $0xc0] sm:$0xff]
      %v2565 = vld [vmem:[#allocation2 + $0xc8] sm:$0xff]
      %v2566 = vld [vmem:[#allocation2 + $0xd0] sm:$0xff]
      %v2567 = vld [vmem:[#allocation2 + $0xd8] sm:$0xff]
      %v2568 = vld [vmem:[#allocation2 + $0xe0] sm:$0xff]
      %v2569 = vld [vmem:[#allocation2 + $0xe8] sm:$0xff]
      %v2570 = vld [vmem:[#allocation2 + $0xf0] sm:$0xff]
      %v2571 = vld [vmem:[#allocation2 + $0xf8] sm:$0xff]
      %v2572 = vld [vmem:[#allocation2 + $0x100] sm:$0xff]
      %v2573 = vld [vmem:[#allocation2 + $0x108] sm:$0xff]
      %v2574 = vld [vmem:[#allocation2 + $0x110] sm:$0xff]
      %v2575 = vld [vmem:[#allocation2 + $0x118] sm:$0xff]
      %v2609 = vrot.slane %v2542, 7
      %v2610 = vrot.slane %v2543, 7
      %v2611 = vsel %vm1495, %v2609, %v2610
      %v2612 = vrot.slane %v2544, 7
      %v2613 = vsel %vm1495, %v2610, %v2612
      %v2614 = vrot.slane %v2545, 7
      %v2615 = vsel %vm1495, %v2612, %v2614
      %v2616 = vrot.slane %v2546, 7
      %v2617 = vsel %vm1495, %v2614, %v2616
      %v2618 = vrot.slane %v2547, 7
      %v2619 = vsel %vm1495, %v2616, %v2618
      %v2620 = vrot.slane %v2548, 7
      %v2621 = vsel %vm1495, %v2618, %v2620
      %v2622 = vrot.slane %v2549, 7
      %v2623 = vsel %vm1495, %v2620, %v2622
      %v2624 = vrot.slane %v2550, 7
      %v2625 = vsel %vm1495, %v2622, %v2624
      %v2626 = vrot.slane %v2551, 7
      %v2627 = vsel %vm1495, %v2624, %v2626
      %v2628 = vrot.slane %v2552, 7
      %v2629 = vsel %vm1495, %v2626, %v2628
      %v2630 = vrot.slane %v2553, 7
      %v2631 = vsel %vm1495, %v2628, %v2630
      %v2632 = vrot.slane %v2554, 7
      %v2633 = vsel %vm1495, %v2630, %v2632
      %v2634 = vrot.slane %v2555, 7
      %v2635 = vsel %vm1495, %v2632, %v2634
      %v2636 = vrot.slane %v2556, 7
      %v2637 = vsel %vm1495, %v2634, %v2636
      %v2638 = vrot.slane %v2557, 7
      %v2639 = vsel %vm1495, %v2636, %v2638
      %v2640 = vrot.slane %v2558, 7
      %v2641 = vsel %vm1495, %v2638, %v2640
      %v2642 = vrot.slane %v2559, 7
      %v2643 = vsel %vm1495, %v2640, %v2642
      %v2644 = vrot.slane %v2560, 7
      %v2645 = vsel %vm1495, %v2642, %v2644
      %v2646 = vrot.slane %v2561, 7
      %v2647 = vsel %vm1495, %v2644, %v2646
      %v2648 = vrot.slane %v2562, 7
      %v2649 = vsel %vm1495, %v2646, %v2648
      %v2650 = vrot.slane %v2563, 7
      %v2651 = vsel %vm1495, %v2648, %v2650
      %v2652 = vrot.slane %v2564, 7
      %v2653 = vsel %vm1495, %v2650, %v2652
      %v2654 = vrot.slane %v2565, 7
      %v2655 = vsel %vm1495, %v2652, %v2654
      %v2656 = vrot.slane %v2566, 7
      %v2657 = vsel %vm1495, %v2654, %v2656
      %v2658 = vrot.slane %v2567, 7
      %v2659 = vsel %vm1495, %v2656, %v2658
      %v2660 = vrot.slane %v2568, 7
      %v2661 = vsel %vm1495, %v2658, %v2660
      %v2662 = vrot.slane %v2569, 7
      %v2663 = vsel %vm1495, %v2660, %v2662
      %v2664 = vrot.slane %v2570, 7
      %v2665 = vsel %vm1495, %v2662, %v2664
      %v2666 = vrot.slane %v2571, 7
      %v2667 = vsel %vm1495, %v2664, %v2666
      %v2668 = vrot.slane %v2572, 7
      %v2669 = vsel %vm1495, %v2666, %v2668
      %v2670 = vrot.slane %v2573, 7
      %v2671 = vsel %vm1495, %v2668, %v2670
      %v2672 = vrot.slane %v2574, 7
      %v2673 = vsel %vm1495, %v2670, %v2672
      %v2706 = vsel %vm1430, %v2611, 0.0
      %v2707 = vsel %vm1431, %v2613, 0.0
      %v2708 = vsel %vm1432, %v2615, 0.0
      %v2709 = vsel %vm1433, %v2617, 0.0
      %v2710 = vsel %vm1434, %v2619, 0.0
      %v2711 = vsel %vm1435, %v2621, 0.0
      %v2712 = vsel %vm1436, %v2623, 0.0
      %v2713 = vsel %vm1437, %v2625, 0.0
      %v2714 = vsel %vm1438, %v2627, 0.0
      %v2715 = vsel %vm1439, %v2629, 0.0
      %v2716 = vsel %vm1440, %v2631, 0.0
      %v2717 = vsel %vm1441, %v2633, 0.0
      %v2718 = vsel %vm1442, %v2635, 0.0
      %v2719 = vsel %vm1443, %v2637, 0.0
      %v2720 = vsel %vm1444, %v2639, 0.0
      %v2721 = vsel %vm1445, %v2641, 0.0
      %v2722 = vsel %vm1446, %v2643, 0.0
      %v2723 = vsel %vm1447, %v2645, 0.0
      %v2724 = vsel %vm1448, %v2647, 0.0
      %v2725 = vsel %vm1449, %v2649, 0.0
      %v2726 = vsel %vm1450, %v2651, 0.0
      %v2727 = vsel %vm1451, %v2653, 0.0
      %v2728 = vsel %vm1452, %v2655, 0.0
      %v2729 = vsel %vm1453, %v2657, 0.0
      %v2730 = vsel %vm1454, %v2659, 0.0
      %v2731 = vsel %vm1455, %v2661, 0.0
      %v2732 = vsel %vm1456, %v2663, 0.0
      %v2733 = vsel %vm1457, %v2665, 0.0
      %v2734 = vsel %vm1458, %v2667, 0.0
      %v2735 = vsel %vm1459, %v2669, 0.0
      %v2736 = vsel %vm1460, %v2671, 0.0
      %v2737 = vsel %vm1461, %v2673, 0.0
      %v2739 = vrot.slane %v2543, 1
      %v2740 = vrot.slane %v2544, 1
      %v2741 = vsel %vm1690, %v2739, %v2740
      %v2742 = vrot.slane %v2545, 1
      %v2743 = vsel %vm1690, %v2740, %v2742
      %v2744 = vrot.slane %v2546, 1
      %v2745 = vsel %vm1690, %v2742, %v2744
      %v2746 = vrot.slane %v2547, 1
      %v2747 = vsel %vm1690, %v2744, %v2746
      %v2748 = vrot.slane %v2548, 1
      %v2749 = vsel %vm1690, %v2746, %v2748
      %v2750 = vrot.slane %v2549, 1
      %v2751 = vsel %vm1690, %v2748, %v2750
      %v2752 = vrot.slane %v2550, 1
      %v2753 = vsel %vm1690, %v2750, %v2752
      %v2754 = vrot.slane %v2551, 1
      %v2755 = vsel %vm1690, %v2752, %v2754
      %v2756 = vrot.slane %v2552, 1
      %v2757 = vsel %vm1690, %v2754, %v2756
      %v2758 = vrot.slane %v2553, 1
      %v2759 = vsel %vm1690, %v2756, %v2758
      %v2760 = vrot.slane %v2554, 1
      %v2761 = vsel %vm1690, %v2758, %v2760
      %v2762 = vrot.slane %v2555, 1
      %v2763 = vsel %vm1690, %v2760, %v2762
      %v2764 = vrot.slane %v2556, 1
      %v2765 = vsel %vm1690, %v2762, %v2764
      %v2766 = vrot.slane %v2557, 1
      %v2767 = vsel %vm1690, %v2764, %v2766
      %v2768 = vrot.slane %v2558, 1
      %v2769 = vsel %vm1690, %v2766, %v2768
      %v2770 = vrot.slane %v2559, 1
      %v2771 = vsel %vm1690, %v2768, %v2770
      %v2772 = vrot.slane %v2560, 1
      %v2773 = vsel %vm1690, %v2770, %v2772
      %v2774 = vrot.slane %v2561, 1
      %v2775 = vsel %vm1690, %v2772, %v2774
      %v2776 = vrot.slane %v2562, 1
      %v2777 = vsel %vm1690, %v2774, %v2776
      %v2778 = vrot.slane %v2563, 1
      %v2779 = vsel %vm1690, %v2776, %v2778
      %v2780 = vrot.slane %v2564, 1
      %v2781 = vsel %vm1690, %v2778, %v2780
      %v2782 = vrot.slane %v2565, 1
      %v2783 = vsel %vm1690, %v2780, %v2782
      %v2784 = vrot.slane %v2566, 1
      %v2785 = vsel %vm1690, %v2782, %v2784
      %v2786 = vrot.slane %v2567, 1
      %v2787 = vsel %vm1690, %v2784, %v2786
      %v2788 = vrot.slane %v2568, 1
      %v2789 = vsel %vm1690, %v2786, %v2788
      %v2790 = vrot.slane %v2569, 1
      %v2791 = vsel %vm1690, %v2788, %v2790
      %v2792 = vrot.slane %v2570, 1
      %v2793 = vsel %vm1690, %v2790, %v2792
      %v2794 = vrot.slane %v2571, 1
      %v2795 = vsel %vm1690, %v2792, %v2794
      %v2796 = vrot.slane %v2572, 1
      %v2797 = vsel %vm1690, %v2794, %v2796
      %v2798 = vrot.slane %v2573, 1
      %v2799 = vsel %vm1690, %v2796, %v2798
      %v2800 = vrot.slane %v2574, 1
      %v2801 = vsel %vm1690, %v2798, %v2800
      %v2802 = vrot.slane %v2575, 1
      %v2803 = vsel %vm1690, %v2800, %v2802
      %v2836 = vsel %vm1657, %v2741, 0.0
      %v2837 = vsel %vm1658, %v2743, 0.0
      %v2838 = vsel %vm1659, %v2745, 0.0
      %v2839 = vsel %vm1660, %v2747, 0.0
      %v2840 = vsel %vm1661, %v2749, 0.0
      %v2841 = vsel %vm1662, %v2751, 0.0
      %v2842 = vsel %vm1663, %v2753, 0.0
      %v2843 = vsel %vm1664, %v2755, 0.0
      %v2844 = vsel %vm1665, %v2757, 0.0
      %v2845 = vsel %vm1666, %v2759, 0.0
      %v2846 = vsel %vm1667, %v2761, 0.0
      %v2847 = vsel %vm1668, %v2763, 0.0
      %v2848 = vsel %vm1669, %v2765, 0.0
      %v2849 = vsel %vm1670, %v2767, 0.0
      %v2850 = vsel %vm1671, %v2769, 0.0
      %v2851 = vsel %vm1672, %v2771, 0.0
      %v2852 = vsel %vm1673, %v2773, 0.0
      %v2853 = vsel %vm1674, %v2775, 0.0
      %v2854 = vsel %vm1675, %v2777, 0.0
      %v2855 = vsel %vm1676, %v2779, 0.0
      %v2856 = vsel %vm1677, %v2781, 0.0
      %v2857 = vsel %vm1678, %v2783, 0.0
      %v2858 = vsel %vm1679, %v2785, 0.0
      %v2859 = vsel %vm1680, %v2787, 0.0
      %v2860 = vsel %vm1681, %v2789, 0.0
      %v2861 = vsel %vm1682, %v2791, 0.0
      %v2862 = vsel %vm1683, %v2793, 0.0
      %v2863 = vsel %vm1684, %v2795, 0.0
      %v2864 = vsel %vm1685, %v2797, 0.0
      %v2865 = vsel %vm1686, %v2799, 0.0
      %v2866 = vsel %vm1687, %v2801, 0.0
      %v2867 = vsel %vm1688, %v2803, 0.0
      %v2868 = vpack.c.bf16 %v2707, %v2706
      %v2869 = vpack.c.bf16 %v2709, %v2708
      %v2870 = vpack.c.bf16 %v2711, %v2710
      %v2871 = vpack.c.bf16 %v2713, %v2712
      %v2872 = vpack.c.bf16 %v2715, %v2714
      %v2873 = vpack.c.bf16 %v2717, %v2716
      %v2874 = vpack.c.bf16 %v2719, %v2718
      %v2875 = vpack.c.bf16 %v2721, %v2720
      %v2876 = vpack.c.bf16 %v2723, %v2722
      %v2877 = vpack.c.bf16 %v2725, %v2724
      %v2878 = vpack.c.bf16 %v2727, %v2726
      %v2879 = vpack.c.bf16 %v2729, %v2728
      %v2880 = vpack.c.bf16 %v2731, %v2730
      %v2881 = vpack.c.bf16 %v2733, %v2732
      %v2882 = vpack.c.bf16 %v2735, %v2734
      %v2883 = vpack.c.bf16 %v2737, %v2736
      %s2884 = scalar_lea.vmem %s3, 6
      %v2885 = vld [vmem:[%s2884] sm:$0x3]
      %v2887 = vsel %vm677, %v2868, 0
      %v2890 = vsel %vm677, %v2869, 0
      %v2893 = vsel %vm677, %v2870, 0
      %v2896 = vsel %vm677, %v2871, 0
      %v2899 = vsel %vm677, %v2872, 0
      %v2902 = vsel %vm677, %v2873, 0
      %v2905 = vsel %vm677, %v2874, 0
      %v2908 = vsel %vm677, %v2875, 0
      %v2911 = vsel %vm677, %v2876, 0
      %v2914 = vsel %vm677, %v2877, 0
      %v2917 = vsel %vm677, %v2878, 0
      %v2920 = vsel %vm677, %v2879, 0
      %v2923 = vsel %vm677, %v2880, 0
      %v2926 = vsel %vm677, %v2881, 0
      %v2929 = vsel %vm677, %v2882, 0
      %v2932 = vsel %vm677, %v2883, 0
      %v2935 = vsel %vm1903, %v2885, 0
      %2937 = vmatprep.subr.bf16.mxu0 0
      %2938 = vmatpush1.bf16.msra.mxu0 0
      %2939 = vmatprep.subr.bf16.mxu0 0
      %2940 = vmatpush1.bf16.msra.mxu0 0
      %2941 = vmatprep.subr.bf16.mxu0 0
      %2942 = vmatpush1.bf16.msra.mxu0 0
      %2943 = vmatprep.subr.bf16.mxu0 0
      %2944 = vmatpush1.bf16.msra.mxu0 0
      %2945 = vmatprep.subr.bf16.mxu0 0
      %2946 = vmatpush1.bf16.msra.mxu0 0
      %2947 = vmatprep.subr.bf16.mxu0 0
      %2948 = vmatpush1.bf16.msra.mxu0 0
      %2949 = vmatprep.subr.bf16.mxu0 0
      %2950 = vmatpush1.bf16.msra.mxu0 0
      %2951 = vmatprep.subr.bf16.mxu0 0
      %2952 = vmatpush1.bf16.msra.mxu0 %v2935
      %2953 = vmatprep.subr.bf16.mxu0 0
      %2954 = vmatpush2.bf16.msra.mxu0 0
      %2955 = vmatprep.subr.bf16.mxu0 0
      %2956 = vmatpush2.bf16.msra.mxu0 0
      %2957 = vmatprep.subr.bf16.mxu0 0
      %2958 = vmatpush2.bf16.msra.mxu0 0
      %2959 = vmatprep.subr.bf16.mxu0 0
      %2960 = vmatpush2.bf16.msra.mxu0 0
      %2961 = vmatprep.subr.bf16.mxu0 0
      %2962 = vmatpush2.bf16.msra.mxu0 0
      %2963 = vmatprep.subr.bf16.mxu0 0
      %2964 = vmatpush2.bf16.msra.mxu0 0
      %2965 = vmatprep.subr.bf16.mxu0 0
      %2966 = vmatpush2.bf16.msra.mxu0 0
      %2967 = vmatprep.subr.bf16.mxu0 0
      %2968 = vmatpush2.bf16.msra.mxu0 0
      %2969 = vmatprep.mubr.bf16.mxu0 0
      %2970 = vmatmul.mubr.bf16.gmra.mxu0 %v2887
      %v2971 = vpop.f32.mrf.mxu0
      %v2972 = vadd.f32 0.0, %v2971
      %v2973 = vpop.f32.mrf.mxu0
      %v2974 = vpop.f32.mrf.mxu0
      %v2975 = vadd.f32 0.0, %v2974
      %v2976 = vpop.f32.mrf.mxu0
      %2977 = vmatprep.mubr.bf16.mxu0 0
      %2978 = vmatmul.mubr.bf16.gmra.mxu0 %v2890
      %v2979 = vpop.f32.mrf.mxu0
      %v2980 = vadd.f32 0.0, %v2979
      %v2981 = vpop.f32.mrf.mxu0
      %v2982 = vpop.f32.mrf.mxu0
      %v2983 = vadd.f32 0.0, %v2982
      %v2984 = vpop.f32.mrf.mxu0
      %2985 = vmatprep.mubr.bf16.mxu0 0
      %2986 = vmatmul.mubr.bf16.gmra.mxu0 %v2893
      %v2987 = vpop.f32.mrf.mxu0
      %v2988 = vadd.f32 0.0, %v2987
      %v2989 = vpop.f32.mrf.mxu0
      %v2990 = vpop.f32.mrf.mxu0
      %v2991 = vadd.f32 0.0, %v2990
      %v2992 = vpop.f32.mrf.mxu0
      %2993 = vmatprep.mubr.bf16.mxu0 0
      %2994 = vmatmul.mubr.bf16.gmra.mxu0 %v2896
      %v2995 = vpop.f32.mrf.mxu0
      %v2996 = vadd.f32 0.0, %v2995
      %v2997 = vpop.f32.mrf.mxu0
      %v2998 = vpop.f32.mrf.mxu0
      %v2999 = vadd.f32 0.0, %v2998
      %v3000 = vpop.f32.mrf.mxu0
      %3001 = vmatprep.mubr.bf16.mxu0 0
      %3002 = vmatmul.mubr.bf16.gmra.mxu0 %v2899
      %v3003 = vpop.f32.mrf.mxu0
      %v3004 = vadd.f32 0.0, %v3003
      %v3005 = vpop.f32.mrf.mxu0
      %v3006 = vpop.f32.mrf.mxu0
      %v3007 = vadd.f32 0.0, %v3006
      %v3008 = vpop.f32.mrf.mxu0
      %3009 = vmatprep.mubr.bf16.mxu0 0
      %3010 = vmatmul.mubr.bf16.gmra.mxu0 %v2902
      %v3011 = vpop.f32.mrf.mxu0
      %v3012 = vadd.f32 0.0, %v3011
      %v3013 = vpop.f32.mrf.mxu0
      %v3014 = vpop.f32.mrf.mxu0
      %v3015 = vadd.f32 0.0, %v3014
      %v3016 = vpop.f32.mrf.mxu0
      %3017 = vmatprep.mubr.bf16.mxu0 0
      %3018 = vmatmul.mubr.bf16.gmra.mxu0 %v2905
      %v3019 = vpop.f32.mrf.mxu0
      %v3020 = vadd.f32 0.0, %v3019
      %v3021 = vpop.f32.mrf.mxu0
      %v3022 = vpop.f32.mrf.mxu0
      %v3023 = vadd.f32 0.0, %v3022
      %v3024 = vpop.f32.mrf.mxu0
      %3025 = vmatprep.mubr.bf16.mxu0 0
      %3026 = vmatmul.mubr.bf16.gmra.mxu0 %v2908
      %v3027 = vpop.f32.mrf.mxu0
      %v3028 = vadd.f32 0.0, %v3027
      %v3029 = vpop.f32.mrf.mxu0
      %v3030 = vpop.f32.mrf.mxu0
      %v3031 = vadd.f32 0.0, %v3030
      %v3032 = vpop.f32.mrf.mxu0
      %3033 = vmatprep.mubr.bf16.mxu0 0
      %3034 = vmatmul.mubr.bf16.gmra.mxu0 %v2911
      %v3035 = vpop.f32.mrf.mxu0
      %v3036 = vadd.f32 0.0, %v3035
      %v3037 = vpop.f32.mrf.mxu0
      %v3038 = vpop.f32.mrf.mxu0
      %v3039 = vadd.f32 0.0, %v3038
      %v3040 = vpop.f32.mrf.mxu0
      %3041 = vmatprep.mubr.bf16.mxu0 0
      %3042 = vmatmul.mubr.bf16.gmra.mxu0 %v2914
      %v3043 = vpop.f32.mrf.mxu0
      %v3044 = vadd.f32 0.0, %v3043
      %v3045 = vpop.f32.mrf.mxu0
      %v3046 = vpop.f32.mrf.mxu0
      %v3047 = vadd.f32 0.0, %v3046
      %v3048 = vpop.f32.mrf.mxu0
      %3049 = vmatprep.mubr.bf16.mxu0 0
      %3050 = vmatmul.mubr.bf16.gmra.mxu0 %v2917
      %v3051 = vpop.f32.mrf.mxu0
      %v3052 = vadd.f32 0.0, %v3051
      %v3053 = vpop.f32.mrf.mxu0
      %v3054 = vpop.f32.mrf.mxu0
      %v3055 = vadd.f32 0.0, %v3054
      %v3056 = vpop.f32.mrf.mxu0
      %3057 = vmatprep.mubr.bf16.mxu0 0
      %3058 = vmatmul.mubr.bf16.gmra.mxu0 %v2920
      %v3059 = vpop.f32.mrf.mxu0
      %v3060 = vadd.f32 0.0, %v3059
      %v3061 = vpop.f32.mrf.mxu0
      %v3062 = vpop.f32.mrf.mxu0
      %v3063 = vadd.f32 0.0, %v3062
      %v3064 = vpop.f32.mrf.mxu0
      %3065 = vmatprep.mubr.bf16.mxu0 0
      %3066 = vmatmul.mubr.bf16.gmra.mxu0 %v2923
      %v3067 = vpop.f32.mrf.mxu0
      %v3068 = vadd.f32 0.0, %v3067
      %v3069 = vpop.f32.mrf.mxu0
      %v3070 = vpop.f32.mrf.mxu0
      %v3071 = vadd.f32 0.0, %v3070
      %v3072 = vpop.f32.mrf.mxu0
      %3073 = vmatprep.mubr.bf16.mxu0 0
      %3074 = vmatmul.mubr.bf16.gmra.mxu0 %v2926
      %v3075 = vpop.f32.mrf.mxu0
      %v3076 = vadd.f32 0.0, %v3075
      %v3077 = vpop.f32.mrf.mxu0
      %v3078 = vpop.f32.mrf.mxu0
      %v3079 = vadd.f32 0.0, %v3078
      %v3080 = vpop.f32.mrf.mxu0
      %3081 = vmatprep.mubr.bf16.mxu0 0
      %3082 = vmatmul.mubr.bf16.gmra.mxu0 %v2929
      %v3083 = vpop.f32.mrf.mxu0
      %v3084 = vadd.f32 0.0, %v3083
      %v3085 = vpop.f32.mrf.mxu0
      %v3086 = vpop.f32.mrf.mxu0
      %v3087 = vadd.f32 0.0, %v3086
      %v3088 = vpop.f32.mrf.mxu0
      %3089 = vmatprep.mubr.bf16.mxu0 0
      %3090 = vmatmul.mubr.bf16.gmra.mxu0 %v2932
      %v3091 = vpop.f32.mrf.mxu0
      %v3092 = vadd.f32 0.0, %v3091
      %v3093 = vpop.f32.mrf.mxu0
      %v3094 = vpop.f32.mrf.mxu0
      %v3095 = vadd.f32 0.0, %v3094
      %v3096 = vpop.f32.mrf.mxu0
      %3097 = vdwg.mxu0
      %v3098 = vadd.f32 %v2510, %v2972
      %v3099 = vadd.f32 %v2511, %v2975
      %v3100 = vadd.f32 %v2512, %v2980
      %v3101 = vadd.f32 %v2513, %v2983
      %v3102 = vadd.f32 %v2514, %v2988
      %v3103 = vadd.f32 %v2515, %v2991
      %v3104 = vadd.f32 %v2516, %v2996
      %v3105 = vadd.f32 %v2517, %v2999
      %v3106 = vadd.f32 %v2518, %v3004
      %v3107 = vadd.f32 %v2519, %v3007
      %v3108 = vadd.f32 %v2520, %v3012
      %v3109 = vadd.f32 %v2521, %v3015
      %v3110 = vadd.f32 %v2522, %v3020
      %v3111 = vadd.f32 %v2523, %v3023
      %v3112 = vadd.f32 %v2524, %v3028
      %v3113 = vadd.f32 %v2525, %v3031
      %v3114 = vadd.f32 %v2526, %v3036
      %v3115 = vadd.f32 %v2527, %v3039
      %v3116 = vadd.f32 %v2528, %v3044
      %v3117 = vadd.f32 %v2529, %v3047
      %v3118 = vadd.f32 %v2530, %v3052
      %v3119 = vadd.f32 %v2531, %v3055
      %v3120 = vadd.f32 %v2532, %v3060
      %v3121 = vadd.f32 %v2533, %v3063
      %v3122 = vadd.f32 %v2534, %v3068
      %v3123 = vadd.f32 %v2535, %v3071
      %v3124 = vadd.f32 %v2536, %v3076
      %v3125 = vadd.f32 %v2537, %v3079
      %v3126 = vadd.f32 %v2538, %v3084
      %v3127 = vadd.f32 %v2539, %v3087
      %v3128 = vadd.f32 %v2540, %v3092
      %v3129 = vadd.f32 %v2541, %v3095
      %v3130 = vpack.c.bf16 %v2544, %v2543
      %v3131 = vpack.c.bf16 %v2546, %v2545
      %v3132 = vpack.c.bf16 %v2548, %v2547
      %v3133 = vpack.c.bf16 %v2550, %v2549
      %v3134 = vpack.c.bf16 %v2552, %v2551
      %v3135 = vpack.c.bf16 %v2554, %v2553
      %v3136 = vpack.c.bf16 %v2556, %v2555
      %v3137 = vpack.c.bf16 %v2558, %v2557
      %v3138 = vpack.c.bf16 %v2560, %v2559
      %v3139 = vpack.c.bf16 %v2562, %v2561
      %v3140 = vpack.c.bf16 %v2564, %v2563
      %v3141 = vpack.c.bf16 %v2566, %v2565
      %v3142 = vpack.c.bf16 %v2568, %v2567
      %v3143 = vpack.c.bf16 %v2570, %v2569
      %v3144 = vpack.c.bf16 %v2572, %v2571
      %v3145 = vpack.c.bf16 %v2574, %v2573
      %s3146 = scalar_lea.vmem %s3, 8
      %v3147 = vld [vmem:[%s3146] sm:$0x3]
      %v3149 = vsel %vm677, %v3130, 0
      %v3152 = vsel %vm677, %v3131, 0
      %v3155 = vsel %vm677, %v3132, 0
      %v3158 = vsel %vm677, %v3133, 0
      %v3161 = vsel %vm677, %v3134, 0
      %v3164 = vsel %vm677, %v3135, 0
      %v3167 = vsel %vm677, %v3136, 0
      %v3170 = vsel %vm677, %v3137, 0
      %v3173 = vsel %vm677, %v3138, 0
      %v3176 = vsel %vm677, %v3139, 0
      %v3179 = vsel %vm677, %v3140, 0
      %v3182 = vsel %vm677, %v3141, 0
      %v3185 = vsel %vm677, %v3142, 0
      %v3188 = vsel %vm677, %v3143, 0
      %v3191 = vsel %vm677, %v3144, 0
      %v3194 = vsel %vm677, %v3145, 0
      %v3197 = vsel %vm1903, %v3147, 0
      %3199 = vmatprep.subr.bf16.mxu0 0
      %3200 = vmatpush1.bf16.msra.mxu0 0
      %3201 = vmatprep.subr.bf16.mxu0 0
      %3202 = vmatpush1.bf16.msra.mxu0 0
      %3203 = vmatprep.subr.bf16.mxu0 0
      %3204 = vmatpush1.bf16.msra.mxu0 0
      %3205 = vmatprep.subr.bf16.mxu0 0
      %3206 = vmatpush1.bf16.msra.mxu0 0
      %3207 = vmatprep.subr.bf16.mxu0 0
      %3208 = vmatpush1.bf16.msra.mxu0 0
      %3209 = vmatprep.subr.bf16.mxu0 0
      %3210 = vmatpush1.bf16.msra.mxu0 0
      %3211 = vmatprep.subr.bf16.mxu0 0
      %3212 = vmatpush1.bf16.msra.mxu0 0
      %3213 = vmatprep.subr.bf16.mxu0 0
      %3214 = vmatpush1.bf16.msra.mxu0 %v3197
      %3215 = vmatprep.subr.bf16.mxu0 0
      %3216 = vmatpush2.bf16.msra.mxu0 0
      %3217 = vmatprep.subr.bf16.mxu0 0
      %3218 = vmatpush2.bf16.msra.mxu0 0
      %3219 = vmatprep.subr.bf16.mxu0 0
      %3220 = vmatpush2.bf16.msra.mxu0 0
      %3221 = vmatprep.subr.bf16.mxu0 0
      %3222 = vmatpush2.bf16.msra.mxu0 0
      %3223 = vmatprep.subr.bf16.mxu0 0
      %3224 = vmatpush2.bf16.msra.mxu0 0
      %3225 = vmatprep.subr.bf16.mxu0 0
      %3226 = vmatpush2.bf16.msra.mxu0 0
      %3227 = vmatprep.subr.bf16.mxu0 0
      %3228 = vmatpush2.bf16.msra.mxu0 0
      %3229 = vmatprep.subr.bf16.mxu0 0
      %3230 = vmatpush2.bf16.msra.mxu0 0
      %3231 = vmatprep.mubr.bf16.mxu0 0
      %3232 = vmatmul.mubr.bf16.gmra.mxu0 %v3149
      %v3233 = vpop.f32.mrf.mxu0
      %v3234 = vadd.f32 0.0, %v3233
      %v3235 = vpop.f32.mrf.mxu0
      %v3236 = vpop.f32.mrf.mxu0
      %v3237 = vadd.f32 0.0, %v3236
      %v3238 = vpop.f32.mrf.mxu0
      %3239 = vmatprep.mubr.bf16.mxu0 0
      %3240 = vmatmul.mubr.bf16.gmra.mxu0 %v3152
      %v3241 = vpop.f32.mrf.mxu0
      %v3242 = vadd.f32 0.0, %v3241
      %v3243 = vpop.f32.mrf.mxu0
      %v3244 = vpop.f32.mrf.mxu0
      %v3245 = vadd.f32 0.0, %v3244
      %v3246 = vpop.f32.mrf.mxu0
      %3247 = vmatprep.mubr.bf16.mxu0 0
      %3248 = vmatmul.mubr.bf16.gmra.mxu0 %v3155
      %v3249 = vpop.f32.mrf.mxu0
      %v3250 = vadd.f32 0.0, %v3249
      %v3251 = vpop.f32.mrf.mxu0
      %v3252 = vpop.f32.mrf.mxu0
      %v3253 = vadd.f32 0.0, %v3252
      %v3254 = vpop.f32.mrf.mxu0
      %3255 = vmatprep.mubr.bf16.mxu0 0
      %3256 = vmatmul.mubr.bf16.gmra.mxu0 %v3158
      %v3257 = vpop.f32.mrf.mxu0
      %v3258 = vadd.f32 0.0, %v3257
      %v3259 = vpop.f32.mrf.mxu0
      %v3260 = vpop.f32.mrf.mxu0
      %v3261 = vadd.f32 0.0, %v3260
      %v3262 = vpop.f32.mrf.mxu0
      %3263 = vmatprep.mubr.bf16.mxu0 0
      %3264 = vmatmul.mubr.bf16.gmra.mxu0 %v3161
      %v3265 = vpop.f32.mrf.mxu0
      %v3266 = vadd.f32 0.0, %v3265
      %v3267 = vpop.f32.mrf.mxu0
      %v3268 = vpop.f32.mrf.mxu0
      %v3269 = vadd.f32 0.0, %v3268
      %v3270 = vpop.f32.mrf.mxu0
      %3271 = vmatprep.mubr.bf16.mxu0 0
      %3272 = vmatmul.mubr.bf16.gmra.mxu0 %v3164
      %v3273 = vpop.f32.mrf.mxu0
      %v3274 = vadd.f32 0.0, %v3273
      %v3275 = vpop.f32.mrf.mxu0
      %v3276 = vpop.f32.mrf.mxu0
      %v3277 = vadd.f32 0.0, %v3276
      %v3278 = vpop.f32.mrf.mxu0
      %3279 = vmatprep.mubr.bf16.mxu0 0
      %3280 = vmatmul.mubr.bf16.gmra.mxu0 %v3167
      %v3281 = vpop.f32.mrf.mxu0
      %v3282 = vadd.f32 0.0, %v3281
      %v3283 = vpop.f32.mrf.mxu0
      %v3284 = vpop.f32.mrf.mxu0
      %v3285 = vadd.f32 0.0, %v3284
      %v3286 = vpop.f32.mrf.mxu0
      %3287 = vmatprep.mubr.bf16.mxu0 0
      %3288 = vmatmul.mubr.bf16.gmra.mxu0 %v3170
      %v3289 = vpop.f32.mrf.mxu0
      %v3290 = vadd.f32 0.0, %v3289
      %v3291 = vpop.f32.mrf.mxu0
      %v3292 = vpop.f32.mrf.mxu0
      %v3293 = vadd.f32 0.0, %v3292
      %v3294 = vpop.f32.mrf.mxu0
      %3295 = vmatprep.mubr.bf16.mxu0 0
      %3296 = vmatmul.mubr.bf16.gmra.mxu0 %v3173
      %v3297 = vpop.f32.mrf.mxu0
      %v3298 = vadd.f32 0.0, %v3297
      %v3299 = vpop.f32.mrf.mxu0
      %v3300 = vpop.f32.mrf.mxu0
      %v3301 = vadd.f32 0.0, %v3300
      %v3302 = vpop.f32.mrf.mxu0
      %3303 = vmatprep.mubr.bf16.mxu0 0
      %3304 = vmatmul.mubr.bf16.gmra.mxu0 %v3176
      %v3305 = vpop.f32.mrf.mxu0
      %v3306 = vadd.f32 0.0, %v3305
      %v3307 = vpop.f32.mrf.mxu0
      %v3308 = vpop.f32.mrf.mxu0
      %v3309 = vadd.f32 0.0, %v3308
      %v3310 = vpop.f32.mrf.mxu0
      %3311 = vmatprep.mubr.bf16.mxu0 0
      %3312 = vmatmul.mubr.bf16.gmra.mxu0 %v3179
      %v3313 = vpop.f32.mrf.mxu0
      %v3314 = vadd.f32 0.0, %v3313
      %v3315 = vpop.f32.mrf.mxu0
      %v3316 = vpop.f32.mrf.mxu0
      %v3317 = vadd.f32 0.0, %v3316
      %v3318 = vpop.f32.mrf.mxu0
      %3319 = vmatprep.mubr.bf16.mxu0 0
      %3320 = vmatmul.mubr.bf16.gmra.mxu0 %v3182
      %v3321 = vpop.f32.mrf.mxu0
      %v3322 = vadd.f32 0.0, %v3321
      %v3323 = vpop.f32.mrf.mxu0
      %v3324 = vpop.f32.mrf.mxu0
      %v3325 = vadd.f32 0.0, %v3324
      %v3326 = vpop.f32.mrf.mxu0
      %3327 = vmatprep.mubr.bf16.mxu0 0
      %3328 = vmatmul.mubr.bf16.gmra.mxu0 %v3185
      %v3329 = vpop.f32.mrf.mxu0
      %v3330 = vadd.f32 0.0, %v3329
      %v3331 = vpop.f32.mrf.mxu0
      %v3332 = vpop.f32.mrf.mxu0
      %v3333 = vadd.f32 0.0, %v3332
      %v3334 = vpop.f32.mrf.mxu0
      %3335 = vmatprep.mubr.bf16.mxu0 0
      %3336 = vmatmul.mubr.bf16.gmra.mxu0 %v3188
      %v3337 = vpop.f32.mrf.mxu0
      %v3338 = vadd.f32 0.0, %v3337
      %v3339 = vpop.f32.mrf.mxu0
      %v3340 = vpop.f32.mrf.mxu0
      %v3341 = vadd.f32 0.0, %v3340
      %v3342 = vpop.f32.mrf.mxu0
      %3343 = vmatprep.mubr.bf16.mxu0 0
      %3344 = vmatmul.mubr.bf16.gmra.mxu0 %v3191
      %v3345 = vpop.f32.mrf.mxu0
      %v3346 = vadd.f32 0.0, %v3345
      %v3347 = vpop.f32.mrf.mxu0
      %v3348 = vpop.f32.mrf.mxu0
      %v3349 = vadd.f32 0.0, %v3348
      %v3350 = vpop.f32.mrf.mxu0
      %3351 = vmatprep.mubr.bf16.mxu0 0
      %3352 = vmatmul.mubr.bf16.gmra.mxu0 %v3194
      %v3353 = vpop.f32.mrf.mxu0
      %v3354 = vadd.f32 0.0, %v3353
      %v3355 = vpop.f32.mrf.mxu0
      %v3356 = vpop.f32.mrf.mxu0
      %v3357 = vadd.f32 0.0, %v3356
      %v3358 = vpop.f32.mrf.mxu0
      %3359 = vdwg.mxu0
      %v3360 = vadd.f32 %v3098, %v3234
      %v3361 = vadd.f32 %v3099, %v3237
      %v3362 = vadd.f32 %v3100, %v3242
      %v3363 = vadd.f32 %v3101, %v3245
      %v3364 = vadd.f32 %v3102, %v3250
      %v3365 = vadd.f32 %v3103, %v3253
      %v3366 = vadd.f32 %v3104, %v3258
      %v3367 = vadd.f32 %v3105, %v3261
      %v3368 = vadd.f32 %v3106, %v3266
      %v3369 = vadd.f32 %v3107, %v3269
      %v3370 = vadd.f32 %v3108, %v3274
      %v3371 = vadd.f32 %v3109, %v3277
      %v3372 = vadd.f32 %v3110, %v3282
      %v3373 = vadd.f32 %v3111, %v3285
      %v3374 = vadd.f32 %v3112, %v3290
      %v3375 = vadd.f32 %v3113, %v3293
      %v3376 = vadd.f32 %v3114, %v3298
      %v3377 = vadd.f32 %v3115, %v3301
      %v3378 = vadd.f32 %v3116, %v3306
      %v3379 = vadd.f32 %v3117, %v3309
      %v3380 = vadd.f32 %v3118, %v3314
      %v3381 = vadd.f32 %v3119, %v3317
      %v3382 = vadd.f32 %v3120, %v3322
      %v3383 = vadd.f32 %v3121, %v3325
      %v3384 = vadd.f32 %v3122, %v3330
      %v3385 = vadd.f32 %v3123, %v3333
      %v3386 = vadd.f32 %v3124, %v3338
      %v3387 = vadd.f32 %v3125, %v3341
      %v3388 = vadd.f32 %v3126, %v3346
      %v3389 = vadd.f32 %v3127, %v3349
      %v3390 = vadd.f32 %v3128, %v3354
      %v3391 = vadd.f32 %v3129, %v3357
      %v3392 = vpack.c.bf16 %v2837, %v2836
      %v3393 = vpack.c.bf16 %v2839, %v2838
      %v3394 = vpack.c.bf16 %v2841, %v2840
      %v3395 = vpack.c.bf16 %v2843, %v2842
      %v3396 = vpack.c.bf16 %v2845, %v2844
      %v3397 = vpack.c.bf16 %v2847, %v2846
      %v3398 = vpack.c.bf16 %v2849, %v2848
      %v3399 = vpack.c.bf16 %v2851, %v2850
      %v3400 = vpack.c.bf16 %v2853, %v2852
      %v3401 = vpack.c.bf16 %v2855, %v2854
      %v3402 = vpack.c.bf16 %v2857, %v2856
      %v3403 = vpack.c.bf16 %v2859, %v2858
      %v3404 = vpack.c.bf16 %v2861, %v2860
      %v3405 = vpack.c.bf16 %v2863, %v2862
      %v3406 = vpack.c.bf16 %v2865, %v2864
      %v3407 = vpack.c.bf16 %v2867, %v2866
      %s3408 = scalar_lea.vmem %s3, 10
      %v3409 = vld [vmem:[%s3408] sm:$0x3]
      %v3411 = vsel %vm677, %v3392, 0
      %v3414 = vsel %vm677, %v3393, 0
      %v3417 = vsel %vm677, %v3394, 0
      %v3420 = vsel %vm677, %v3395, 0
      %v3423 = vsel %vm677, %v3396, 0
      %v3426 = vsel %vm677, %v3397, 0
      %v3429 = vsel %vm677, %v3398, 0
      %v3432 = vsel %vm677, %v3399, 0
      %v3435 = vsel %vm677, %v3400, 0
      %v3438 = vsel %vm677, %v3401, 0
      %v3441 = vsel %vm677, %v3402, 0
      %v3444 = vsel %vm677, %v3403, 0
      %v3447 = vsel %vm677, %v3404, 0
      %v3450 = vsel %vm677, %v3405, 0
      %v3453 = vsel %vm677, %v3406, 0
      %v3456 = vsel %vm677, %v3407, 0
      %v3459 = vsel %vm1903, %v3409, 0
      %3461 = vmatprep.subr.bf16.mxu0 0
      %3462 = vmatpush1.bf16.msra.mxu0 0
      %3463 = vmatprep.subr.bf16.mxu0 0
      %3464 = vmatpush1.bf16.msra.mxu0 0
      %3465 = vmatprep.subr.bf16.mxu0 0
      %3466 = vmatpush1.bf16.msra.mxu0 0
      %3467 = vmatprep.subr.bf16.mxu0 0
      %3468 = vmatpush1.bf16.msra.mxu0 0
      %3469 = vmatprep.subr.bf16.mxu0 0
      %3470 = vmatpush1.bf16.msra.mxu0 0
      %3471 = vmatprep.subr.bf16.mxu0 0
      %3472 = vmatpush1.bf16.msra.mxu0 0
      %3473 = vmatprep.subr.bf16.mxu0 0
      %3474 = vmatpush1.bf16.msra.mxu0 0
      %3475 = vmatprep.subr.bf16.mxu0 0
      %3476 = vmatpush1.bf16.msra.mxu0 %v3459
      %3477 = vmatprep.subr.bf16.mxu0 0
      %3478 = vmatpush2.bf16.msra.mxu0 0
      %3479 = vmatprep.subr.bf16.mxu0 0
      %3480 = vmatpush2.bf16.msra.mxu0 0
      %3481 = vmatprep.subr.bf16.mxu0 0
      %3482 = vmatpush2.bf16.msra.mxu0 0
      %3483 = vmatprep.subr.bf16.mxu0 0
      %3484 = vmatpush2.bf16.msra.mxu0 0
      %3485 = vmatprep.subr.bf16.mxu0 0
      %3486 = vmatpush2.bf16.msra.mxu0 0
      %3487 = vmatprep.subr.bf16.mxu0 0
      %3488 = vmatpush2.bf16.msra.mxu0 0
      %3489 = vmatprep.subr.bf16.mxu0 0
      %3490 = vmatpush2.bf16.msra.mxu0 0
      %3491 = vmatprep.subr.bf16.mxu0 0
      %3492 = vmatpush2.bf16.msra.mxu0 0
      %3493 = vmatprep.mubr.bf16.mxu0 0
      %3494 = vmatmul.mubr.bf16.gmra.mxu0 %v3411
      %v3495 = vpop.f32.mrf.mxu0
      %v3496 = vadd.f32 0.0, %v3495
      %v3497 = vpop.f32.mrf.mxu0
      %v3498 = vpop.f32.mrf.mxu0
      %v3499 = vadd.f32 0.0, %v3498
      %v3500 = vpop.f32.mrf.mxu0
      %3501 = vmatprep.mubr.bf16.mxu0 0
      %3502 = vmatmul.mubr.bf16.gmra.mxu0 %v3414
      %v3503 = vpop.f32.mrf.mxu0
      %v3504 = vadd.f32 0.0, %v3503
      %v3505 = vpop.f32.mrf.mxu0
      %v3506 = vpop.f32.mrf.mxu0
      %v3507 = vadd.f32 0.0, %v3506
      %v3508 = vpop.f32.mrf.mxu0
      %3509 = vmatprep.mubr.bf16.mxu0 0
      %3510 = vmatmul.mubr.bf16.gmra.mxu0 %v3417
      %v3511 = vpop.f32.mrf.mxu0
      %v3512 = vadd.f32 0.0, %v3511
      %v3513 = vpop.f32.mrf.mxu0
      %v3514 = vpop.f32.mrf.mxu0
      %v3515 = vadd.f32 0.0, %v3514
      %v3516 = vpop.f32.mrf.mxu0
      %3517 = vmatprep.mubr.bf16.mxu0 0
      %3518 = vmatmul.mubr.bf16.gmra.mxu0 %v3420
      %v3519 = vpop.f32.mrf.mxu0
      %v3520 = vadd.f32 0.0, %v3519
      %v3521 = vpop.f32.mrf.mxu0
      %v3522 = vpop.f32.mrf.mxu0
      %v3523 = vadd.f32 0.0, %v3522
      %v3524 = vpop.f32.mrf.mxu0
      %3525 = vmatprep.mubr.bf16.mxu0 0
      %3526 = vmatmul.mubr.bf16.gmra.mxu0 %v3423
      %v3527 = vpop.f32.mrf.mxu0
      %v3528 = vadd.f32 0.0, %v3527
      %v3529 = vpop.f32.mrf.mxu0
      %v3530 = vpop.f32.mrf.mxu0
      %v3531 = vadd.f32 0.0, %v3530
      %v3532 = vpop.f32.mrf.mxu0
      %3533 = vmatprep.mubr.bf16.mxu0 0
      %3534 = vmatmul.mubr.bf16.gmra.mxu0 %v3426
      %v3535 = vpop.f32.mrf.mxu0
      %v3536 = vadd.f32 0.0, %v3535
      %v3537 = vpop.f32.mrf.mxu0
      %v3538 = vpop.f32.mrf.mxu0
      %v3539 = vadd.f32 0.0, %v3538
      %v3540 = vpop.f32.mrf.mxu0
      %3541 = vmatprep.mubr.bf16.mxu0 0
      %3542 = vmatmul.mubr.bf16.gmra.mxu0 %v3429
      %v3543 = vpop.f32.mrf.mxu0
      %v3544 = vadd.f32 0.0, %v3543
      %v3545 = vpop.f32.mrf.mxu0
      %v3546 = vpop.f32.mrf.mxu0
      %v3547 = vadd.f32 0.0, %v3546
      %v3548 = vpop.f32.mrf.mxu0
      %3549 = vmatprep.mubr.bf16.mxu0 0
      %3550 = vmatmul.mubr.bf16.gmra.mxu0 %v3432
      %v3551 = vpop.f32.mrf.mxu0
      %v3552 = vadd.f32 0.0, %v3551
      %v3553 = vpop.f32.mrf.mxu0
      %v3554 = vpop.f32.mrf.mxu0
      %v3555 = vadd.f32 0.0, %v3554
      %v3556 = vpop.f32.mrf.mxu0
      %3557 = vmatprep.mubr.bf16.mxu0 0
      %3558 = vmatmul.mubr.bf16.gmra.mxu0 %v3435
      %v3559 = vpop.f32.mrf.mxu0
      %v3560 = vadd.f32 0.0, %v3559
      %v3561 = vpop.f32.mrf.mxu0
      %v3562 = vpop.f32.mrf.mxu0
      %v3563 = vadd.f32 0.0, %v3562
      %v3564 = vpop.f32.mrf.mxu0
      %3565 = vmatprep.mubr.bf16.mxu0 0
      %3566 = vmatmul.mubr.bf16.gmra.mxu0 %v3438
      %v3567 = vpop.f32.mrf.mxu0
      %v3568 = vadd.f32 0.0, %v3567
      %v3569 = vpop.f32.mrf.mxu0
      %v3570 = vpop.f32.mrf.mxu0
      %v3571 = vadd.f32 0.0, %v3570
      %v3572 = vpop.f32.mrf.mxu0
      %3573 = vmatprep.mubr.bf16.mxu0 0
      %3574 = vmatmul.mubr.bf16.gmra.mxu0 %v3441
      %v3575 = vpop.f32.mrf.mxu0
      %v3576 = vadd.f32 0.0, %v3575
      %v3577 = vpop.f32.mrf.mxu0
      %v3578 = vpop.f32.mrf.mxu0
      %v3579 = vadd.f32 0.0, %v3578
      %v3580 = vpop.f32.mrf.mxu0
      %3581 = vmatprep.mubr.bf16.mxu0 0
      %3582 = vmatmul.mubr.bf16.gmra.mxu0 %v3444
      %v3583 = vpop.f32.mrf.mxu0
      %v3584 = vadd.f32 0.0, %v3583
      %v3585 = vpop.f32.mrf.mxu0
      %v3586 = vpop.f32.mrf.mxu0
      %v3587 = vadd.f32 0.0, %v3586
      %v3588 = vpop.f32.mrf.mxu0
      %3589 = vmatprep.mubr.bf16.mxu0 0
      %3590 = vmatmul.mubr.bf16.gmra.mxu0 %v3447
      %v3591 = vpop.f32.mrf.mxu0
      %v3592 = vadd.f32 0.0, %v3591
      %v3593 = vpop.f32.mrf.mxu0
      %v3594 = vpop.f32.mrf.mxu0
      %v3595 = vadd.f32 0.0, %v3594
      %v3596 = vpop.f32.mrf.mxu0
      %3597 = vmatprep.mubr.bf16.mxu0 0
      %3598 = vmatmul.mubr.bf16.gmra.mxu0 %v3450
      %v3599 = vpop.f32.mrf.mxu0
      %v3600 = vadd.f32 0.0, %v3599
      %v3601 = vpop.f32.mrf.mxu0
      %v3602 = vpop.f32.mrf.mxu0
      %v3603 = vadd.f32 0.0, %v3602
      %v3604 = vpop.f32.mrf.mxu0
      %3605 = vmatprep.mubr.bf16.mxu0 0
      %3606 = vmatmul.mubr.bf16.gmra.mxu0 %v3453
      %v3607 = vpop.f32.mrf.mxu0
      %v3608 = vadd.f32 0.0, %v3607
      %v3609 = vpop.f32.mrf.mxu0
      %v3610 = vpop.f32.mrf.mxu0
      %v3611 = vadd.f32 0.0, %v3610
      %v3612 = vpop.f32.mrf.mxu0
      %3613 = vmatprep.mubr.bf16.mxu0 0
      %3614 = vmatmul.mubr.bf16.gmra.mxu0 %v3456
      %v3615 = vpop.f32.mrf.mxu0
      %v3616 = vadd.f32 0.0, %v3615
      %v3617 = vpop.f32.mrf.mxu0
      %v3618 = vpop.f32.mrf.mxu0
      %v3619 = vadd.f32 0.0, %v3618
      %v3620 = vpop.f32.mrf.mxu0
      %3621 = vdwg.mxu0
      %v3622 = vadd.f32 %v3360, %v3496
      %v3623 = vadd.f32 %v3361, %v3499
      %v3624 = vadd.f32 %v3362, %v3504
      %v3625 = vadd.f32 %v3363, %v3507
      %v3626 = vadd.f32 %v3364, %v3512
      %v3627 = vadd.f32 %v3365, %v3515
      %v3628 = vadd.f32 %v3366, %v3520
      %v3629 = vadd.f32 %v3367, %v3523
      %v3630 = vadd.f32 %v3368, %v3528
      %v3631 = vadd.f32 %v3369, %v3531
      %v3632 = vadd.f32 %v3370, %v3536
      %v3633 = vadd.f32 %v3371, %v3539
      %v3634 = vadd.f32 %v3372, %v3544
      %v3635 = vadd.f32 %v3373, %v3547
      %v3636 = vadd.f32 %v3374, %v3552
      %v3637 = vadd.f32 %v3375, %v3555
      %v3638 = vadd.f32 %v3376, %v3560
      %v3639 = vadd.f32 %v3377, %v3563
      %v3640 = vadd.f32 %v3378, %v3568
      %v3641 = vadd.f32 %v3379, %v3571
      %v3642 = vadd.f32 %v3380, %v3576
      %v3643 = vadd.f32 %v3381, %v3579
      %v3644 = vadd.f32 %v3382, %v3584
      %v3645 = vadd.f32 %v3383, %v3587
      %v3646 = vadd.f32 %v3384, %v3592
      %v3647 = vadd.f32 %v3385, %v3595
      %v3648 = vadd.f32 %v3386, %v3600
      %v3649 = vadd.f32 %v3387, %v3603
      %v3650 = vadd.f32 %v3388, %v3608
      %v3651 = vadd.f32 %v3389, %v3611
      %v3652 = vadd.f32 %v3390, %v3616
      %v3653 = vadd.f32 %v3391, %v3619
      %v3654 = vld [vmem:[#allocation2 + $0x20] sm:$0xff]
      %v3655 = vld [vmem:[#allocation2 + $0x28] sm:$0xff]
      %v3656 = vld [vmem:[#allocation2 + $0x30] sm:$0xff]
      %v3657 = vld [vmem:[#allocation2 + $0x38] sm:$0xff]
      %v3658 = vld [vmem:[#allocation2 + $0x40] sm:$0xff]
      %v3659 = vld [vmem:[#allocation2 + $0x48] sm:$0xff]
      %v3660 = vld [vmem:[#allocation2 + $0x50] sm:$0xff]
      %v3661 = vld [vmem:[#allocation2 + $0x58] sm:$0xff]
      %v3662 = vld [vmem:[#allocation2 + $0x60] sm:$0xff]
      %v3663 = vld [vmem:[#allocation2 + $0x68] sm:$0xff]
      %v3664 = vld [vmem:[#allocation2 + $0x70] sm:$0xff]
      %v3665 = vld [vmem:[#allocation2 + $0x78] sm:$0xff]
      %v3666 = vld [vmem:[#allocation2 + $0x80] sm:$0xff]
      %v3667 = vld [vmem:[#allocation2 + $0x88] sm:$0xff]
      %v3668 = vld [vmem:[#allocation2 + $0x90] sm:$0xff]
      %v3669 = vld [vmem:[#allocation2 + $0x98] sm:$0xff]
      %v3670 = vld [vmem:[#allocation2 + $0xa0] sm:$0xff]
      %v3671 = vld [vmem:[#allocation2 + $0xa8] sm:$0xff]
      %v3672 = vld [vmem:[#allocation2 + $0xb0] sm:$0xff]
      %v3673 = vld [vmem:[#allocation2 + $0xb8] sm:$0xff]
      %v3674 = vld [vmem:[#allocation2 + $0xc0] sm:$0xff]
      %v3675 = vld [vmem:[#allocation2 + $0xc8] sm:$0xff]
      %v3676 = vld [vmem:[#allocation2 + $0xd0] sm:$0xff]
      %v3677 = vld [vmem:[#allocation2 + $0xd8] sm:$0xff]
      %v3678 = vld [vmem:[#allocation2 + $0xe0] sm:$0xff]
      %v3679 = vld [vmem:[#allocation2 + $0xe8] sm:$0xff]
      %v3680 = vld [vmem:[#allocation2 + $0xf0] sm:$0xff]
      %v3681 = vld [vmem:[#allocation2 + $0xf8] sm:$0xff]
      %v3682 = vld [vmem:[#allocation2 + $0x100] sm:$0xff]
      %v3683 = vld [vmem:[#allocation2 + $0x108] sm:$0xff]
      %v3684 = vld [vmem:[#allocation2 + $0x110] sm:$0xff]
      %v3685 = vld [vmem:[#allocation2 + $0x118] sm:$0xff]
      %v3686 = vld [vmem:[#allocation2 + $0x120] sm:$0xff]
      %v3687 = vld [vmem:[#allocation2 + $0x128] sm:$0xff]
      %v3721 = vrot.slane %v3654, 7
      %v3722 = vrot.slane %v3655, 7
      %v3723 = vsel %vm1495, %v3721, %v3722
      %v3724 = vrot.slane %v3656, 7
      %v3725 = vsel %vm1495, %v3722, %v3724
      %v3726 = vrot.slane %v3657, 7
      %v3727 = vsel %vm1495, %v3724, %v3726
      %v3728 = vrot.slane %v3658, 7
      %v3729 = vsel %vm1495, %v3726, %v3728
      %v3730 = vrot.slane %v3659, 7
      %v3731 = vsel %vm1495, %v3728, %v3730
      %v3732 = vrot.slane %v3660, 7
      %v3733 = vsel %vm1495, %v3730, %v3732
      %v3734 = vrot.slane %v3661, 7
      %v3735 = vsel %vm1495, %v3732, %v3734
      %v3736 = vrot.slane %v3662, 7
      %v3737 = vsel %vm1495, %v3734, %v3736
      %v3738 = vrot.slane %v3663, 7
      %v3739 = vsel %vm1495, %v3736, %v3738
      %v3740 = vrot.slane %v3664, 7
      %v3741 = vsel %vm1495, %v3738, %v3740
      %v3742 = vrot.slane %v3665, 7
      %v3743 = vsel %vm1495, %v3740, %v3742
      %v3744 = vrot.slane %v3666, 7
      %v3745 = vsel %vm1495, %v3742, %v3744
      %v3746 = vrot.slane %v3667, 7
      %v3747 = vsel %vm1495, %v3744, %v3746
      %v3748 = vrot.slane %v3668, 7
      %v3749 = vsel %vm1495, %v3746, %v3748
      %v3750 = vrot.slane %v3669, 7
      %v3751 = vsel %vm1495, %v3748, %v3750
      %v3752 = vrot.slane %v3670, 7
      %v3753 = vsel %vm1495, %v3750, %v3752
      %v3754 = vrot.slane %v3671, 7
      %v3755 = vsel %vm1495, %v3752, %v3754
      %v3756 = vrot.slane %v3672, 7
      %v3757 = vsel %vm1495, %v3754, %v3756
      %v3758 = vrot.slane %v3673, 7
      %v3759 = vsel %vm1495, %v3756, %v3758
      %v3760 = vrot.slane %v3674, 7
      %v3761 = vsel %vm1495, %v3758, %v3760
      %v3762 = vrot.slane %v3675, 7
      %v3763 = vsel %vm1495, %v3760, %v3762
      %v3764 = vrot.slane %v3676, 7
      %v3765 = vsel %vm1495, %v3762, %v3764
      %v3766 = vrot.slane %v3677, 7
      %v3767 = vsel %vm1495, %v3764, %v3766
      %v3768 = vrot.slane %v3678, 7
      %v3769 = vsel %vm1495, %v3766, %v3768
      %v3770 = vrot.slane %v3679, 7
      %v3771 = vsel %vm1495, %v3768, %v3770
      %v3772 = vrot.slane %v3680, 7
      %v3773 = vsel %vm1495, %v3770, %v3772
      %v3774 = vrot.slane %v3681, 7
      %v3775 = vsel %vm1495, %v3772, %v3774
      %v3776 = vrot.slane %v3682, 7
      %v3777 = vsel %vm1495, %v3774, %v3776
      %v3778 = vrot.slane %v3683, 7
      %v3779 = vsel %vm1495, %v3776, %v3778
      %v3780 = vrot.slane %v3684, 7
      %v3781 = vsel %vm1495, %v3778, %v3780
      %v3782 = vrot.slane %v3685, 7
      %v3783 = vsel %vm1495, %v3780, %v3782
      %v3784 = vrot.slane %v3686, 7
      %v3785 = vsel %vm1495, %v3782, %v3784
      %v3818 = vsel %vm1430, %v3723, 0.0
      %v3819 = vsel %vm1431, %v3725, 0.0
      %v3820 = vsel %vm1432, %v3727, 0.0
      %v3821 = vsel %vm1433, %v3729, 0.0
      %v3822 = vsel %vm1434, %v3731, 0.0
      %v3823 = vsel %vm1435, %v3733, 0.0
      %v3824 = vsel %vm1436, %v3735, 0.0
      %v3825 = vsel %vm1437, %v3737, 0.0
      %v3826 = vsel %vm1438, %v3739, 0.0
      %v3827 = vsel %vm1439, %v3741, 0.0
      %v3828 = vsel %vm1440, %v3743, 0.0
      %v3829 = vsel %vm1441, %v3745, 0.0
      %v3830 = vsel %vm1442, %v3747, 0.0
      %v3831 = vsel %vm1443, %v3749, 0.0
      %v3832 = vsel %vm1444, %v3751, 0.0
      %v3833 = vsel %vm1445, %v3753, 0.0
      %v3834 = vsel %vm1446, %v3755, 0.0
      %v3835 = vsel %vm1447, %v3757, 0.0
      %v3836 = vsel %vm1448, %v3759, 0.0
      %v3837 = vsel %vm1449, %v3761, 0.0
      %v3838 = vsel %vm1450, %v3763, 0.0
      %v3839 = vsel %vm1451, %v3765, 0.0
      %v3840 = vsel %vm1452, %v3767, 0.0
      %v3841 = vsel %vm1453, %v3769, 0.0
      %v3842 = vsel %vm1454, %v3771, 0.0
      %v3843 = vsel %vm1455, %v3773, 0.0
      %v3844 = vsel %vm1456, %v3775, 0.0
      %v3845 = vsel %vm1457, %v3777, 0.0
      %v3846 = vsel %vm1458, %v3779, 0.0
      %v3847 = vsel %vm1459, %v3781, 0.0
      %v3848 = vsel %vm1460, %v3783, 0.0
      %v3849 = vsel %vm1461, %v3785, 0.0
      %v3851 = vrot.slane %v3655, 1
      %v3852 = vrot.slane %v3656, 1
      %v3853 = vsel %vm1690, %v3851, %v3852
      %v3854 = vrot.slane %v3657, 1
      %v3855 = vsel %vm1690, %v3852, %v3854
      %v3856 = vrot.slane %v3658, 1
      %v3857 = vsel %vm1690, %v3854, %v3856
      %v3858 = vrot.slane %v3659, 1
      %v3859 = vsel %vm1690, %v3856, %v3858
      %v3860 = vrot.slane %v3660, 1
      %v3861 = vsel %vm1690, %v3858, %v3860
      %v3862 = vrot.slane %v3661, 1
      %v3863 = vsel %vm1690, %v3860, %v3862
      %v3864 = vrot.slane %v3662, 1
      %v3865 = vsel %vm1690, %v3862, %v3864
      %v3866 = vrot.slane %v3663, 1
      %v3867 = vsel %vm1690, %v3864, %v3866
      %v3868 = vrot.slane %v3664, 1
      %v3869 = vsel %vm1690, %v3866, %v3868
      %v3870 = vrot.slane %v3665, 1
      %v3871 = vsel %vm1690, %v3868, %v3870
      %v3872 = vrot.slane %v3666, 1
      %v3873 = vsel %vm1690, %v3870, %v3872
      %v3874 = vrot.slane %v3667, 1
      %v3875 = vsel %vm1690, %v3872, %v3874
      %v3876 = vrot.slane %v3668, 1
      %v3877 = vsel %vm1690, %v3874, %v3876
      %v3878 = vrot.slane %v3669, 1
      %v3879 = vsel %vm1690, %v3876, %v3878
      %v3880 = vrot.slane %v3670, 1
      %v3881 = vsel %vm1690, %v3878, %v3880
      %v3882 = vrot.slane %v3671, 1
      %v3883 = vsel %vm1690, %v3880, %v3882
      %v3884 = vrot.slane %v3672, 1
      %v3885 = vsel %vm1690, %v3882, %v3884
      %v3886 = vrot.slane %v3673, 1
      %v3887 = vsel %vm1690, %v3884, %v3886
      %v3888 = vrot.slane %v3674, 1
      %v3889 = vsel %vm1690, %v3886, %v3888
      %v3890 = vrot.slane %v3675, 1
      %v3891 = vsel %vm1690, %v3888, %v3890
      %v3892 = vrot.slane %v3676, 1
      %v3893 = vsel %vm1690, %v3890, %v3892
      %v3894 = vrot.slane %v3677, 1
      %v3895 = vsel %vm1690, %v3892, %v3894
      %v3896 = vrot.slane %v3678, 1
      %v3897 = vsel %vm1690, %v3894, %v3896
      %v3898 = vrot.slane %v3679, 1
      %v3899 = vsel %vm1690, %v3896, %v3898
      %v3900 = vrot.slane %v3680, 1
      %v3901 = vsel %vm1690, %v3898, %v3900
      %v3902 = vrot.slane %v3681, 1
      %v3903 = vsel %vm1690, %v3900, %v3902
      %v3904 = vrot.slane %v3682, 1
      %v3905 = vsel %vm1690, %v3902, %v3904
      %v3906 = vrot.slane %v3683, 1
      %v3907 = vsel %vm1690, %v3904, %v3906
      %v3908 = vrot.slane %v3684, 1
      %v3909 = vsel %vm1690, %v3906, %v3908
      %v3910 = vrot.slane %v3685, 1
      %v3911 = vsel %vm1690, %v3908, %v3910
      %v3912 = vrot.slane %v3686, 1
      %v3913 = vsel %vm1690, %v3910, %v3912
      %v3914 = vrot.slane %v3687, 1
      %v3915 = vsel %vm1690, %v3912, %v3914
      %v3948 = vsel %vm1657, %v3853, 0.0
      %v3949 = vsel %vm1658, %v3855, 0.0
      %v3950 = vsel %vm1659, %v3857, 0.0
      %v3951 = vsel %vm1660, %v3859, 0.0
      %v3952 = vsel %vm1661, %v3861, 0.0
      %v3953 = vsel %vm1662, %v3863, 0.0
      %v3954 = vsel %vm1663, %v3865, 0.0
      %v3955 = vsel %vm1664, %v3867, 0.0
      %v3956 = vsel %vm1665, %v3869, 0.0
      %v3957 = vsel %vm1666, %v3871, 0.0
      %v3958 = vsel %vm1667, %v3873, 0.0
      %v3959 = vsel %vm1668, %v3875, 0.0
      %v3960 = vsel %vm1669, %v3877, 0.0
      %v3961 = vsel %vm1670, %v3879, 0.0
      %v3962 = vsel %vm1671, %v3881, 0.0
      %v3963 = vsel %vm1672, %v3883, 0.0
      %v3964 = vsel %vm1673, %v3885, 0.0
      %v3965 = vsel %vm1674, %v3887, 0.0
      %v3966 = vsel %vm1675, %v3889, 0.0
      %v3967 = vsel %vm1676, %v3891, 0.0
      %v3968 = vsel %vm1677, %v3893, 0.0
      %v3969 = vsel %vm1678, %v3895, 0.0
      %v3970 = vsel %vm1679, %v3897, 0.0
      %v3971 = vsel %vm1680, %v3899, 0.0
      %v3972 = vsel %vm1681, %v3901, 0.0
      %v3973 = vsel %vm1682, %v3903, 0.0
      %v3974 = vsel %vm1683, %v3905, 0.0
      %v3975 = vsel %vm1684, %v3907, 0.0
      %v3976 = vsel %vm1685, %v3909, 0.0
      %v3977 = vsel %vm1686, %v3911, 0.0
      %v3978 = vsel %vm1687, %v3913, 0.0
      %v3979 = vsel %vm1688, %v3915, 0.0
      %v3980 = vpack.c.bf16 %v3819, %v3818
      %v3981 = vpack.c.bf16 %v3821, %v3820
      %v3982 = vpack.c.bf16 %v3823, %v3822
      %v3983 = vpack.c.bf16 %v3825, %v3824
      %v3984 = vpack.c.bf16 %v3827, %v3826
      %v3985 = vpack.c.bf16 %v3829, %v3828
      %v3986 = vpack.c.bf16 %v3831, %v3830
      %v3987 = vpack.c.bf16 %v3833, %v3832
      %v3988 = vpack.c.bf16 %v3835, %v3834
      %v3989 = vpack.c.bf16 %v3837, %v3836
      %v3990 = vpack.c.bf16 %v3839, %v3838
      %v3991 = vpack.c.bf16 %v3841, %v3840
      %v3992 = vpack.c.bf16 %v3843, %v3842
      %v3993 = vpack.c.bf16 %v3845, %v3844
      %v3994 = vpack.c.bf16 %v3847, %v3846
      %v3995 = vpack.c.bf16 %v3849, %v3848
      %s3996 = scalar_lea.vmem %s3, 12
      %v3997 = vld [vmem:[%s3996] sm:$0x3]
      %v3999 = vsel %vm677, %v3980, 0
      %v4002 = vsel %vm677, %v3981, 0
      %v4005 = vsel %vm677, %v3982, 0
      %v4008 = vsel %vm677, %v3983, 0
      %v4011 = vsel %vm677, %v3984, 0
      %v4014 = vsel %vm677, %v3985, 0
      %v4017 = vsel %vm677, %v3986, 0
      %v4020 = vsel %vm677, %v3987, 0
      %v4023 = vsel %vm677, %v3988, 0
      %v4026 = vsel %vm677, %v3989, 0
      %v4029 = vsel %vm677, %v3990, 0
      %v4032 = vsel %vm677, %v3991, 0
      %v4035 = vsel %vm677, %v3992, 0
      %v4038 = vsel %vm677, %v3993, 0
      %v4041 = vsel %vm677, %v3994, 0
      %v4044 = vsel %vm677, %v3995, 0
      %v4047 = vsel %vm1903, %v3997, 0
      %4049 = vmatprep.subr.bf16.mxu0 0
      %4050 = vmatpush1.bf16.msra.mxu0 0
      %4051 = vmatprep.subr.bf16.mxu0 0
      %4052 = vmatpush1.bf16.msra.mxu0 0
      %4053 = vmatprep.subr.bf16.mxu0 0
      %4054 = vmatpush1.bf16.msra.mxu0 0
      %4055 = vmatprep.subr.bf16.mxu0 0
      %4056 = vmatpush1.bf16.msra.mxu0 0
      %4057 = vmatprep.subr.bf16.mxu0 0
      %4058 = vmatpush1.bf16.msra.mxu0 0
      %4059 = vmatprep.subr.bf16.mxu0 0
      %4060 = vmatpush1.bf16.msra.mxu0 0
      %4061 = vmatprep.subr.bf16.mxu0 0
      %4062 = vmatpush1.bf16.msra.mxu0 0
      %4063 = vmatprep.subr.bf16.mxu0 0
      %4064 = vmatpush1.bf16.msra.mxu0 %v4047
      %4065 = vmatprep.subr.bf16.mxu0 0
      %4066 = vmatpush2.bf16.msra.mxu0 0
      %4067 = vmatprep.subr.bf16.mxu0 0
      %4068 = vmatpush2.bf16.msra.mxu0 0
      %4069 = vmatprep.subr.bf16.mxu0 0
      %4070 = vmatpush2.bf16.msra.mxu0 0
      %4071 = vmatprep.subr.bf16.mxu0 0
      %4072 = vmatpush2.bf16.msra.mxu0 0
      %4073 = vmatprep.subr.bf16.mxu0 0
      %4074 = vmatpush2.bf16.msra.mxu0 0
      %4075 = vmatprep.subr.bf16.mxu0 0
      %4076 = vmatpush2.bf16.msra.mxu0 0
      %4077 = vmatprep.subr.bf16.mxu0 0
      %4078 = vmatpush2.bf16.msra.mxu0 0
      %4079 = vmatprep.subr.bf16.mxu0 0
      %4080 = vmatpush2.bf16.msra.mxu0 0
      %4081 = vmatprep.mubr.bf16.mxu0 0
      %4082 = vmatmul.mubr.bf16.gmra.mxu0 %v3999
      %v4083 = vpop.f32.mrf.mxu0
      %v4084 = vadd.f32 0.0, %v4083
      %v4085 = vpop.f32.mrf.mxu0
      %v4086 = vpop.f32.mrf.mxu0
      %v4087 = vadd.f32 0.0, %v4086
      %v4088 = vpop.f32.mrf.mxu0
      %4089 = vmatprep.mubr.bf16.mxu0 0
      %4090 = vmatmul.mubr.bf16.gmra.mxu0 %v4002
      %v4091 = vpop.f32.mrf.mxu0
      %v4092 = vadd.f32 0.0, %v4091
      %v4093 = vpop.f32.mrf.mxu0
      %v4094 = vpop.f32.mrf.mxu0
      %v4095 = vadd.f32 0.0, %v4094
      %v4096 = vpop.f32.mrf.mxu0
      %4097 = vmatprep.mubr.bf16.mxu0 0
      %4098 = vmatmul.mubr.bf16.gmra.mxu0 %v4005
      %v4099 = vpop.f32.mrf.mxu0
      %v4100 = vadd.f32 0.0, %v4099
      %v4101 = vpop.f32.mrf.mxu0
      %v4102 = vpop.f32.mrf.mxu0
      %v4103 = vadd.f32 0.0, %v4102
      %v4104 = vpop.f32.mrf.mxu0
      %4105 = vmatprep.mubr.bf16.mxu0 0
      %4106 = vmatmul.mubr.bf16.gmra.mxu0 %v4008
      %v4107 = vpop.f32.mrf.mxu0
      %v4108 = vadd.f32 0.0, %v4107
      %v4109 = vpop.f32.mrf.mxu0
      %v4110 = vpop.f32.mrf.mxu0
      %v4111 = vadd.f32 0.0, %v4110
      %v4112 = vpop.f32.mrf.mxu0
      %4113 = vmatprep.mubr.bf16.mxu0 0
      %4114 = vmatmul.mubr.bf16.gmra.mxu0 %v4011
      %v4115 = vpop.f32.mrf.mxu0
      %v4116 = vadd.f32 0.0, %v4115
      %v4117 = vpop.f32.mrf.mxu0
      %v4118 = vpop.f32.mrf.mxu0
      %v4119 = vadd.f32 0.0, %v4118
      %v4120 = vpop.f32.mrf.mxu0
      %4121 = vmatprep.mubr.bf16.mxu0 0
      %4122 = vmatmul.mubr.bf16.gmra.mxu0 %v4014
      %v4123 = vpop.f32.mrf.mxu0
      %v4124 = vadd.f32 0.0, %v4123
      %v4125 = vpop.f32.mrf.mxu0
      %v4126 = vpop.f32.mrf.mxu0
      %v4127 = vadd.f32 0.0, %v4126
      %v4128 = vpop.f32.mrf.mxu0
      %4129 = vmatprep.mubr.bf16.mxu0 0
      %4130 = vmatmul.mubr.bf16.gmra.mxu0 %v4017
      %v4131 = vpop.f32.mrf.mxu0
      %v4132 = vadd.f32 0.0, %v4131
      %v4133 = vpop.f32.mrf.mxu0
      %v4134 = vpop.f32.mrf.mxu0
      %v4135 = vadd.f32 0.0, %v4134
      %v4136 = vpop.f32.mrf.mxu0
      %4137 = vmatprep.mubr.bf16.mxu0 0
      %4138 = vmatmul.mubr.bf16.gmra.mxu0 %v4020
      %v4139 = vpop.f32.mrf.mxu0
      %v4140 = vadd.f32 0.0, %v4139
      %v4141 = vpop.f32.mrf.mxu0
      %v4142 = vpop.f32.mrf.mxu0
      %v4143 = vadd.f32 0.0, %v4142
      %v4144 = vpop.f32.mrf.mxu0
      %4145 = vmatprep.mubr.bf16.mxu0 0
      %4146 = vmatmul.mubr.bf16.gmra.mxu0 %v4023
      %v4147 = vpop.f32.mrf.mxu0
      %v4148 = vadd.f32 0.0, %v4147
      %v4149 = vpop.f32.mrf.mxu0
      %v4150 = vpop.f32.mrf.mxu0
      %v4151 = vadd.f32 0.0, %v4150
      %v4152 = vpop.f32.mrf.mxu0
      %4153 = vmatprep.mubr.bf16.mxu0 0
      %4154 = vmatmul.mubr.bf16.gmra.mxu0 %v4026
      %v4155 = vpop.f32.mrf.mxu0
      %v4156 = vadd.f32 0.0, %v4155
      %v4157 = vpop.f32.mrf.mxu0
      %v4158 = vpop.f32.mrf.mxu0
      %v4159 = vadd.f32 0.0, %v4158
      %v4160 = vpop.f32.mrf.mxu0
      %4161 = vmatprep.mubr.bf16.mxu0 0
      %4162 = vmatmul.mubr.bf16.gmra.mxu0 %v4029
      %v4163 = vpop.f32.mrf.mxu0
      %v4164 = vadd.f32 0.0, %v4163
      %v4165 = vpop.f32.mrf.mxu0
      %v4166 = vpop.f32.mrf.mxu0
      %v4167 = vadd.f32 0.0, %v4166
      %v4168 = vpop.f32.mrf.mxu0
      %4169 = vmatprep.mubr.bf16.mxu0 0
      %4170 = vmatmul.mubr.bf16.gmra.mxu0 %v4032
      %v4171 = vpop.f32.mrf.mxu0
      %v4172 = vadd.f32 0.0, %v4171
      %v4173 = vpop.f32.mrf.mxu0
      %v4174 = vpop.f32.mrf.mxu0
      %v4175 = vadd.f32 0.0, %v4174
      %v4176 = vpop.f32.mrf.mxu0
      %4177 = vmatprep.mubr.bf16.mxu0 0
      %4178 = vmatmul.mubr.bf16.gmra.mxu0 %v4035
      %v4179 = vpop.f32.mrf.mxu0
      %v4180 = vadd.f32 0.0, %v4179
      %v4181 = vpop.f32.mrf.mxu0
      %v4182 = vpop.f32.mrf.mxu0
      %v4183 = vadd.f32 0.0, %v4182
      %v4184 = vpop.f32.mrf.mxu0
      %4185 = vmatprep.mubr.bf16.mxu0 0
      %4186 = vmatmul.mubr.bf16.gmra.mxu0 %v4038
      %v4187 = vpop.f32.mrf.mxu0
      %v4188 = vadd.f32 0.0, %v4187
      %v4189 = vpop.f32.mrf.mxu0
      %v4190 = vpop.f32.mrf.mxu0
      %v4191 = vadd.f32 0.0, %v4190
      %v4192 = vpop.f32.mrf.mxu0
      %4193 = vmatprep.mubr.bf16.mxu0 0
      %4194 = vmatmul.mubr.bf16.gmra.mxu0 %v4041
      %v4195 = vpop.f32.mrf.mxu0
      %v4196 = vadd.f32 0.0, %v4195
      %v4197 = vpop.f32.mrf.mxu0
      %v4198 = vpop.f32.mrf.mxu0
      %v4199 = vadd.f32 0.0, %v4198
      %v4200 = vpop.f32.mrf.mxu0
      %4201 = vmatprep.mubr.bf16.mxu0 0
      %4202 = vmatmul.mubr.bf16.gmra.mxu0 %v4044
      %v4203 = vpop.f32.mrf.mxu0
      %v4204 = vadd.f32 0.0, %v4203
      %v4205 = vpop.f32.mrf.mxu0
      %v4206 = vpop.f32.mrf.mxu0
      %v4207 = vadd.f32 0.0, %v4206
      %v4208 = vpop.f32.mrf.mxu0
      %4209 = vdwg.mxu0
      %v4210 = vadd.f32 %v3622, %v4084
      %v4211 = vadd.f32 %v3623, %v4087
      %v4212 = vadd.f32 %v3624, %v4092
      %v4213 = vadd.f32 %v3625, %v4095
      %v4214 = vadd.f32 %v3626, %v4100
      %v4215 = vadd.f32 %v3627, %v4103
      %v4216 = vadd.f32 %v3628, %v4108
      %v4217 = vadd.f32 %v3629, %v4111
      %v4218 = vadd.f32 %v3630, %v4116
      %v4219 = vadd.f32 %v3631, %v4119
      %v4220 = vadd.f32 %v3632, %v4124
      %v4221 = vadd.f32 %v3633, %v4127
      %v4222 = vadd.f32 %v3634, %v4132
      %v4223 = vadd.f32 %v3635, %v4135
      %v4224 = vadd.f32 %v3636, %v4140
      %v4225 = vadd.f32 %v3637, %v4143
      %v4226 = vadd.f32 %v3638, %v4148
      %v4227 = vadd.f32 %v3639, %v4151
      %v4228 = vadd.f32 %v3640, %v4156
      %v4229 = vadd.f32 %v3641, %v4159
      %v4230 = vadd.f32 %v3642, %v4164
      %v4231 = vadd.f32 %v3643, %v4167
      %v4232 = vadd.f32 %v3644, %v4172
      %v4233 = vadd.f32 %v3645, %v4175
      %v4234 = vadd.f32 %v3646, %v4180
      %v4235 = vadd.f32 %v3647, %v4183
      %v4236 = vadd.f32 %v3648, %v4188
      %v4237 = vadd.f32 %v3649, %v4191
      %v4238 = vadd.f32 %v3650, %v4196
      %v4239 = vadd.f32 %v3651, %v4199
      %v4240 = vadd.f32 %v3652, %v4204
      %v4241 = vadd.f32 %v3653, %v4207
      %v4242 = vpack.c.bf16 %v3656, %v3655
      %v4243 = vpack.c.bf16 %v3658, %v3657
      %v4244 = vpack.c.bf16 %v3660, %v3659
      %v4245 = vpack.c.bf16 %v3662, %v3661
      %v4246 = vpack.c.bf16 %v3664, %v3663
      %v4247 = vpack.c.bf16 %v3666, %v3665
      %v4248 = vpack.c.bf16 %v3668, %v3667
      %v4249 = vpack.c.bf16 %v3670, %v3669
      %v4250 = vpack.c.bf16 %v3672, %v3671
      %v4251 = vpack.c.bf16 %v3674, %v3673
      %v4252 = vpack.c.bf16 %v3676, %v3675
      %v4253 = vpack.c.bf16 %v3678, %v3677
      %v4254 = vpack.c.bf16 %v3680, %v3679
      %v4255 = vpack.c.bf16 %v3682, %v3681
      %v4256 = vpack.c.bf16 %v3684, %v3683
      %v4257 = vpack.c.bf16 %v3686, %v3685
      %s4258 = scalar_lea.vmem %s3, 14
      %v4259 = vld [vmem:[%s4258] sm:$0x3]
      %v4261 = vsel %vm677, %v4242, 0
      %v4264 = vsel %vm677, %v4243, 0
      %v4267 = vsel %vm677, %v4244, 0
      %v4270 = vsel %vm677, %v4245, 0
      %v4273 = vsel %vm677, %v4246, 0
      %v4276 = vsel %vm677, %v4247, 0
      %v4279 = vsel %vm677, %v4248, 0
      %v4282 = vsel %vm677, %v4249, 0
      %v4285 = vsel %vm677, %v4250, 0
      %v4288 = vsel %vm677, %v4251, 0
      %v4291 = vsel %vm677, %v4252, 0
      %v4294 = vsel %vm677, %v4253, 0
      %v4297 = vsel %vm677, %v4254, 0
      %v4300 = vsel %vm677, %v4255, 0
      %v4303 = vsel %vm677, %v4256, 0
      %v4306 = vsel %vm677, %v4257, 0
      %v4309 = vsel %vm1903, %v4259, 0
      %4311 = vmatprep.subr.bf16.mxu0 0
      %4312 = vmatpush1.bf16.msra.mxu0 0
      %4313 = vmatprep.subr.bf16.mxu0 0
      %4314 = vmatpush1.bf16.msra.mxu0 0
      %4315 = vmatprep.subr.bf16.mxu0 0
      %4316 = vmatpush1.bf16.msra.mxu0 0
      %4317 = vmatprep.subr.bf16.mxu0 0
      %4318 = vmatpush1.bf16.msra.mxu0 0
      %4319 = vmatprep.subr.bf16.mxu0 0
      %4320 = vmatpush1.bf16.msra.mxu0 0
      %4321 = vmatprep.subr.bf16.mxu0 0
      %4322 = vmatpush1.bf16.msra.mxu0 0
      %4323 = vmatprep.subr.bf16.mxu0 0
      %4324 = vmatpush1.bf16.msra.mxu0 0
      %4325 = vmatprep.subr.bf16.mxu0 0
      %4326 = vmatpush1.bf16.msra.mxu0 %v4309
      %4327 = vmatprep.subr.bf16.mxu0 0
      %4328 = vmatpush2.bf16.msra.mxu0 0
      %4329 = vmatprep.subr.bf16.mxu0 0
      %4330 = vmatpush2.bf16.msra.mxu0 0
      %4331 = vmatprep.subr.bf16.mxu0 0
      %4332 = vmatpush2.bf16.msra.mxu0 0
      %4333 = vmatprep.subr.bf16.mxu0 0
      %4334 = vmatpush2.bf16.msra.mxu0 0
      %4335 = vmatprep.subr.bf16.mxu0 0
      %4336 = vmatpush2.bf16.msra.mxu0 0
      %4337 = vmatprep.subr.bf16.mxu0 0
      %4338 = vmatpush2.bf16.msra.mxu0 0
      %4339 = vmatprep.subr.bf16.mxu0 0
      %4340 = vmatpush2.bf16.msra.mxu0 0
      %4341 = vmatprep.subr.bf16.mxu0 0
      %4342 = vmatpush2.bf16.msra.mxu0 0
      %4343 = vmatprep.mubr.bf16.mxu0 0
      %4344 = vmatmul.mubr.bf16.gmra.mxu0 %v4261
      %v4345 = vpop.f32.mrf.mxu0
      %v4346 = vadd.f32 0.0, %v4345
      %v4347 = vpop.f32.mrf.mxu0
      %v4348 = vpop.f32.mrf.mxu0
      %v4349 = vadd.f32 0.0, %v4348
      %v4350 = vpop.f32.mrf.mxu0
      %4351 = vmatprep.mubr.bf16.mxu0 0
      %4352 = vmatmul.mubr.bf16.gmra.mxu0 %v4264
      %v4353 = vpop.f32.mrf.mxu0
      %v4354 = vadd.f32 0.0, %v4353
      %v4355 = vpop.f32.mrf.mxu0
      %v4356 = vpop.f32.mrf.mxu0
      %v4357 = vadd.f32 0.0, %v4356
      %v4358 = vpop.f32.mrf.mxu0
      %4359 = vmatprep.mubr.bf16.mxu0 0
      %4360 = vmatmul.mubr.bf16.gmra.mxu0 %v4267
      %v4361 = vpop.f32.mrf.mxu0
      %v4362 = vadd.f32 0.0, %v4361
      %v4363 = vpop.f32.mrf.mxu0
      %v4364 = vpop.f32.mrf.mxu0
      %v4365 = vadd.f32 0.0, %v4364
      %v4366 = vpop.f32.mrf.mxu0
      %4367 = vmatprep.mubr.bf16.mxu0 0
      %4368 = vmatmul.mubr.bf16.gmra.mxu0 %v4270
      %v4369 = vpop.f32.mrf.mxu0
      %v4370 = vadd.f32 0.0, %v4369
      %v4371 = vpop.f32.mrf.mxu0
      %v4372 = vpop.f32.mrf.mxu0
      %v4373 = vadd.f32 0.0, %v4372
      %v4374 = vpop.f32.mrf.mxu0
      %4375 = vmatprep.mubr.bf16.mxu0 0
      %4376 = vmatmul.mubr.bf16.gmra.mxu0 %v4273
      %v4377 = vpop.f32.mrf.mxu0
      %v4378 = vadd.f32 0.0, %v4377
      %v4379 = vpop.f32.mrf.mxu0
      %v4380 = vpop.f32.mrf.mxu0
      %v4381 = vadd.f32 0.0, %v4380
      %v4382 = vpop.f32.mrf.mxu0
      %4383 = vmatprep.mubr.bf16.mxu0 0
      %4384 = vmatmul.mubr.bf16.gmra.mxu0 %v4276
      %v4385 = vpop.f32.mrf.mxu0
      %v4386 = vadd.f32 0.0, %v4385
      %v4387 = vpop.f32.mrf.mxu0
      %v4388 = vpop.f32.mrf.mxu0
      %v4389 = vadd.f32 0.0, %v4388
      %v4390 = vpop.f32.mrf.mxu0
      %4391 = vmatprep.mubr.bf16.mxu0 0
      %4392 = vmatmul.mubr.bf16.gmra.mxu0 %v4279
      %v4393 = vpop.f32.mrf.mxu0
      %v4394 = vadd.f32 0.0, %v4393
      %v4395 = vpop.f32.mrf.mxu0
      %v4396 = vpop.f32.mrf.mxu0
      %v4397 = vadd.f32 0.0, %v4396
      %v4398 = vpop.f32.mrf.mxu0
      %4399 = vmatprep.mubr.bf16.mxu0 0
      %4400 = vmatmul.mubr.bf16.gmra.mxu0 %v4282
      %v4401 = vpop.f32.mrf.mxu0
      %v4402 = vadd.f32 0.0, %v4401
      %v4403 = vpop.f32.mrf.mxu0
      %v4404 = vpop.f32.mrf.mxu0
      %v4405 = vadd.f32 0.0, %v4404
      %v4406 = vpop.f32.mrf.mxu0
      %4407 = vmatprep.mubr.bf16.mxu0 0
      %4408 = vmatmul.mubr.bf16.gmra.mxu0 %v4285
      %v4409 = vpop.f32.mrf.mxu0
      %v4410 = vadd.f32 0.0, %v4409
      %v4411 = vpop.f32.mrf.mxu0
      %v4412 = vpop.f32.mrf.mxu0
      %v4413 = vadd.f32 0.0, %v4412
      %v4414 = vpop.f32.mrf.mxu0
      %4415 = vmatprep.mubr.bf16.mxu0 0
      %4416 = vmatmul.mubr.bf16.gmra.mxu0 %v4288
      %v4417 = vpop.f32.mrf.mxu0
      %v4418 = vadd.f32 0.0, %v4417
      %v4419 = vpop.f32.mrf.mxu0
      %v4420 = vpop.f32.mrf.mxu0
      %v4421 = vadd.f32 0.0, %v4420
      %v4422 = vpop.f32.mrf.mxu0
      %4423 = vmatprep.mubr.bf16.mxu0 0
      %4424 = vmatmul.mubr.bf16.gmra.mxu0 %v4291
      %v4425 = vpop.f32.mrf.mxu0
      %v4426 = vadd.f32 0.0, %v4425
      %v4427 = vpop.f32.mrf.mxu0
      %v4428 = vpop.f32.mrf.mxu0
      %v4429 = vadd.f32 0.0, %v4428
      %v4430 = vpop.f32.mrf.mxu0
      %4431 = vmatprep.mubr.bf16.mxu0 0
      %4432 = vmatmul.mubr.bf16.gmra.mxu0 %v4294
      %v4433 = vpop.f32.mrf.mxu0
      %v4434 = vadd.f32 0.0, %v4433
      %v4435 = vpop.f32.mrf.mxu0
      %v4436 = vpop.f32.mrf.mxu0
      %v4437 = vadd.f32 0.0, %v4436
      %v4438 = vpop.f32.mrf.mxu0
      %4439 = vmatprep.mubr.bf16.mxu0 0
      %4440 = vmatmul.mubr.bf16.gmra.mxu0 %v4297
      %v4441 = vpop.f32.mrf.mxu0
      %v4442 = vadd.f32 0.0, %v4441
      %v4443 = vpop.f32.mrf.mxu0
      %v4444 = vpop.f32.mrf.mxu0
      %v4445 = vadd.f32 0.0, %v4444
      %v4446 = vpop.f32.mrf.mxu0
      %4447 = vmatprep.mubr.bf16.mxu0 0
      %4448 = vmatmul.mubr.bf16.gmra.mxu0 %v4300
      %v4449 = vpop.f32.mrf.mxu0
      %v4450 = vadd.f32 0.0, %v4449
      %v4451 = vpop.f32.mrf.mxu0
      %v4452 = vpop.f32.mrf.mxu0
      %v4453 = vadd.f32 0.0, %v4452
      %v4454 = vpop.f32.mrf.mxu0
      %4455 = vmatprep.mubr.bf16.mxu0 0
      %4456 = vmatmul.mubr.bf16.gmra.mxu0 %v4303
      %v4457 = vpop.f32.mrf.mxu0
      %v4458 = vadd.f32 0.0, %v4457
      %v4459 = vpop.f32.mrf.mxu0
      %v4460 = vpop.f32.mrf.mxu0
      %v4461 = vadd.f32 0.0, %v4460
      %v4462 = vpop.f32.mrf.mxu0
      %4463 = vmatprep.mubr.bf16.mxu0 0
      %4464 = vmatmul.mubr.bf16.gmra.mxu0 %v4306
      %v4465 = vpop.f32.mrf.mxu0
      %v4466 = vadd.f32 0.0, %v4465
      %v4467 = vpop.f32.mrf.mxu0
      %v4468 = vpop.f32.mrf.mxu0
      %v4469 = vadd.f32 0.0, %v4468
      %v4470 = vpop.f32.mrf.mxu0
      %4471 = vdwg.mxu0
      %v4472 = vadd.f32 %v4210, %v4346
      %v4473 = vadd.f32 %v4211, %v4349
      %v4474 = vadd.f32 %v4212, %v4354
      %v4475 = vadd.f32 %v4213, %v4357
      %v4476 = vadd.f32 %v4214, %v4362
      %v4477 = vadd.f32 %v4215, %v4365
      %v4478 = vadd.f32 %v4216, %v4370
      %v4479 = vadd.f32 %v4217, %v4373
      %v4480 = vadd.f32 %v4218, %v4378
      %v4481 = vadd.f32 %v4219, %v4381
      %v4482 = vadd.f32 %v4220, %v4386
      %v4483 = vadd.f32 %v4221, %v4389
      %v4484 = vadd.f32 %v4222, %v4394
      %v4485 = vadd.f32 %v4223, %v4397
      %v4486 = vadd.f32 %v4224, %v4402
      %v4487 = vadd.f32 %v4225, %v4405
      %v4488 = vadd.f32 %v4226, %v4410
      %v4489 = vadd.f32 %v4227, %v4413
      %v4490 = vadd.f32 %v4228, %v4418
      %v4491 = vadd.f32 %v4229, %v4421
      %v4492 = vadd.f32 %v4230, %v4426
      %v4493 = vadd.f32 %v4231, %v4429
      %v4494 = vadd.f32 %v4232, %v4434
      %v4495 = vadd.f32 %v4233, %v4437
      %v4496 = vadd.f32 %v4234, %v4442
      %v4497 = vadd.f32 %v4235, %v4445
      %v4498 = vadd.f32 %v4236, %v4450
      %v4499 = vadd.f32 %v4237, %v4453
      %v4500 = vadd.f32 %v4238, %v4458
      %v4501 = vadd.f32 %v4239, %v4461
      %v4502 = vadd.f32 %v4240, %v4466
      %v4503 = vadd.f32 %v4241, %v4469
      %v4504 = vpack.c.bf16 %v3949, %v3948
      %v4505 = vpack.c.bf16 %v3951, %v3950
      %v4506 = vpack.c.bf16 %v3953, %v3952
      %v4507 = vpack.c.bf16 %v3955, %v3954
      %v4508 = vpack.c.bf16 %v3957, %v3956
      %v4509 = vpack.c.bf16 %v3959, %v3958
      %v4510 = vpack.c.bf16 %v3961, %v3960
      %v4511 = vpack.c.bf16 %v3963, %v3962
      %v4512 = vpack.c.bf16 %v3965, %v3964
      %v4513 = vpack.c.bf16 %v3967, %v3966
      %v4514 = vpack.c.bf16 %v3969, %v3968
      %v4515 = vpack.c.bf16 %v3971, %v3970
      %v4516 = vpack.c.bf16 %v3973, %v3972
      %v4517 = vpack.c.bf16 %v3975, %v3974
      %v4518 = vpack.c.bf16 %v3977, %v3976
      %v4519 = vpack.c.bf16 %v3979, %v3978
      %s4520 = scalar_lea.vmem %s3, 16
      %v4521 = vld [vmem:[%s4520] sm:$0x3]
      %v4523 = vsel %vm677, %v4504, 0
      %v4526 = vsel %vm677, %v4505, 0
      %v4529 = vsel %vm677, %v4506, 0
      %v4532 = vsel %vm677, %v4507, 0
      %v4535 = vsel %vm677, %v4508, 0
      %v4538 = vsel %vm677, %v4509, 0
      %v4541 = vsel %vm677, %v4510, 0
      %v4544 = vsel %vm677, %v4511, 0
      %v4547 = vsel %vm677, %v4512, 0
      %v4550 = vsel %vm677, %v4513, 0
      %v4553 = vsel %vm677, %v4514, 0
      %v4556 = vsel %vm677, %v4515, 0
      %v4559 = vsel %vm677, %v4516, 0
      %v4562 = vsel %vm677, %v4517, 0
      %v4565 = vsel %vm677, %v4518, 0
      %v4568 = vsel %vm677, %v4519, 0
      %v4571 = vsel %vm1903, %v4521, 0
      %4573 = vmatprep.subr.bf16.mxu0 0
      %4574 = vmatpush1.bf16.msra.mxu0 0
      %4575 = vmatprep.subr.bf16.mxu0 0
      %4576 = vmatpush1.bf16.msra.mxu0 0
      %4577 = vmatprep.subr.bf16.mxu0 0
      %4578 = vmatpush1.bf16.msra.mxu0 0
      %4579 = vmatprep.subr.bf16.mxu0 0
      %4580 = vmatpush1.bf16.msra.mxu0 0
      %4581 = vmatprep.subr.bf16.mxu0 0
      %4582 = vmatpush1.bf16.msra.mxu0 0
      %4583 = vmatprep.subr.bf16.mxu0 0
      %4584 = vmatpush1.bf16.msra.mxu0 0
      %4585 = vmatprep.subr.bf16.mxu0 0
      %4586 = vmatpush1.bf16.msra.mxu0 0
      %4587 = vmatprep.subr.bf16.mxu0 0
      %4588 = vmatpush1.bf16.msra.mxu0 %v4571
      %4589 = vmatprep.subr.bf16.mxu0 0
      %4590 = vmatpush2.bf16.msra.mxu0 0
      %4591 = vmatprep.subr.bf16.mxu0 0
      %4592 = vmatpush2.bf16.msra.mxu0 0
      %4593 = vmatprep.subr.bf16.mxu0 0
      %4594 = vmatpush2.bf16.msra.mxu0 0
      %4595 = vmatprep.subr.bf16.mxu0 0
      %4596 = vmatpush2.bf16.msra.mxu0 0
      %4597 = vmatprep.subr.bf16.mxu0 0
      %4598 = vmatpush2.bf16.msra.mxu0 0
      %4599 = vmatprep.subr.bf16.mxu0 0
      %4600 = vmatpush2.bf16.msra.mxu0 0
      %4601 = vmatprep.subr.bf16.mxu0 0
      %4602 = vmatpush2.bf16.msra.mxu0 0
      %4603 = vmatprep.subr.bf16.mxu0 0
      %4604 = vmatpush2.bf16.msra.mxu0 0
      %4605 = vmatprep.mubr.bf16.mxu0 0
      %4606 = vmatmul.mubr.bf16.gmra.mxu0 %v4523
      %v4607 = vpop.f32.mrf.mxu0
      %v4608 = vadd.f32 0.0, %v4607
      %v4609 = vpop.f32.mrf.mxu0
      %v4610 = vpop.f32.mrf.mxu0
      %v4611 = vadd.f32 0.0, %v4610
      %v4612 = vpop.f32.mrf.mxu0
      %4613 = vmatprep.mubr.bf16.mxu0 0
      %4614 = vmatmul.mubr.bf16.gmra.mxu0 %v4526
      %v4615 = vpop.f32.mrf.mxu0
      %v4616 = vadd.f32 0.0, %v4615
      %v4617 = vpop.f32.mrf.mxu0
      %v4618 = vpop.f32.mrf.mxu0
      %v4619 = vadd.f32 0.0, %v4618
      %v4620 = vpop.f32.mrf.mxu0
      %4621 = vmatprep.mubr.bf16.mxu0 0
      %4622 = vmatmul.mubr.bf16.gmra.mxu0 %v4529
      %v4623 = vpop.f32.mrf.mxu0
      %v4624 = vadd.f32 0.0, %v4623
      %v4625 = vpop.f32.mrf.mxu0
      %v4626 = vpop.f32.mrf.mxu0
      %v4627 = vadd.f32 0.0, %v4626
      %v4628 = vpop.f32.mrf.mxu0
      %4629 = vmatprep.mubr.bf16.mxu0 0
      %4630 = vmatmul.mubr.bf16.gmra.mxu0 %v4532
      %v4631 = vpop.f32.mrf.mxu0
      %v4632 = vadd.f32 0.0, %v4631
      %v4633 = vpop.f32.mrf.mxu0
      %v4634 = vpop.f32.mrf.mxu0
      %v4635 = vadd.f32 0.0, %v4634
      %v4636 = vpop.f32.mrf.mxu0
      %4637 = vmatprep.mubr.bf16.mxu0 0
      %4638 = vmatmul.mubr.bf16.gmra.mxu0 %v4535
      %v4639 = vpop.f32.mrf.mxu0
      %v4640 = vadd.f32 0.0, %v4639
      %v4641 = vpop.f32.mrf.mxu0
      %v4642 = vpop.f32.mrf.mxu0
      %v4643 = vadd.f32 0.0, %v4642
      %v4644 = vpop.f32.mrf.mxu0
      %4645 = vmatprep.mubr.bf16.mxu0 0
      %4646 = vmatmul.mubr.bf16.gmra.mxu0 %v4538
      %v4647 = vpop.f32.mrf.mxu0
      %v4648 = vadd.f32 0.0, %v4647
      %v4649 = vpop.f32.mrf.mxu0
      %v4650 = vpop.f32.mrf.mxu0
      %v4651 = vadd.f32 0.0, %v4650
      %v4652 = vpop.f32.mrf.mxu0
      %4653 = vmatprep.mubr.bf16.mxu0 0
      %4654 = vmatmul.mubr.bf16.gmra.mxu0 %v4541
      %v4655 = vpop.f32.mrf.mxu0
      %v4656 = vadd.f32 0.0, %v4655
      %v4657 = vpop.f32.mrf.mxu0
      %v4658 = vpop.f32.mrf.mxu0
      %v4659 = vadd.f32 0.0, %v4658
      %v4660 = vpop.f32.mrf.mxu0
      %4661 = vmatprep.mubr.bf16.mxu0 0
      %4662 = vmatmul.mubr.bf16.gmra.mxu0 %v4544
      %v4663 = vpop.f32.mrf.mxu0
      %v4664 = vadd.f32 0.0, %v4663
      %v4665 = vpop.f32.mrf.mxu0
      %v4666 = vpop.f32.mrf.mxu0
      %v4667 = vadd.f32 0.0, %v4666
      %v4668 = vpop.f32.mrf.mxu0
      %4669 = vmatprep.mubr.bf16.mxu0 0
      %4670 = vmatmul.mubr.bf16.gmra.mxu0 %v4547
      %v4671 = vpop.f32.mrf.mxu0
      %v4672 = vadd.f32 0.0, %v4671
      %v4673 = vpop.f32.mrf.mxu0
      %v4674 = vpop.f32.mrf.mxu0
      %v4675 = vadd.f32 0.0, %v4674
      %v4676 = vpop.f32.mrf.mxu0
      %4677 = vmatprep.mubr.bf16.mxu0 0
      %4678 = vmatmul.mubr.bf16.gmra.mxu0 %v4550
      %v4679 = vpop.f32.mrf.mxu0
      %v4680 = vadd.f32 0.0, %v4679
      %v4681 = vpop.f32.mrf.mxu0
      %v4682 = vpop.f32.mrf.mxu0
      %v4683 = vadd.f32 0.0, %v4682
      %v4684 = vpop.f32.mrf.mxu0
      %4685 = vmatprep.mubr.bf16.mxu0 0
      %4686 = vmatmul.mubr.bf16.gmra.mxu0 %v4553
      %v4687 = vpop.f32.mrf.mxu0
      %v4688 = vadd.f32 0.0, %v4687
      %v4689 = vpop.f32.mrf.mxu0
      %v4690 = vpop.f32.mrf.mxu0
      %v4691 = vadd.f32 0.0, %v4690
      %v4692 = vpop.f32.mrf.mxu0
      %4693 = vmatprep.mubr.bf16.mxu0 0
      %4694 = vmatmul.mubr.bf16.gmra.mxu0 %v4556
      %v4695 = vpop.f32.mrf.mxu0
      %v4696 = vadd.f32 0.0, %v4695
      %v4697 = vpop.f32.mrf.mxu0
      %v4698 = vpop.f32.mrf.mxu0
      %v4699 = vadd.f32 0.0, %v4698
      %v4700 = vpop.f32.mrf.mxu0
      %4701 = vmatprep.mubr.bf16.mxu0 0
      %4702 = vmatmul.mubr.bf16.gmra.mxu0 %v4559
      %v4703 = vpop.f32.mrf.mxu0
      %v4704 = vadd.f32 0.0, %v4703
      %v4705 = vpop.f32.mrf.mxu0
      %v4706 = vpop.f32.mrf.mxu0
      %v4707 = vadd.f32 0.0, %v4706
      %v4708 = vpop.f32.mrf.mxu0
      %4709 = vmatprep.mubr.bf16.mxu0 0
      %4710 = vmatmul.mubr.bf16.gmra.mxu0 %v4562
      %v4711 = vpop.f32.mrf.mxu0
      %v4712 = vadd.f32 0.0, %v4711
      %v4713 = vpop.f32.mrf.mxu0
      %v4714 = vpop.f32.mrf.mxu0
      %v4715 = vadd.f32 0.0, %v4714
      %v4716 = vpop.f32.mrf.mxu0
      %4717 = vmatprep.mubr.bf16.mxu0 0
      %4718 = vmatmul.mubr.bf16.gmra.mxu0 %v4565
      %v4719 = vpop.f32.mrf.mxu0
      %v4720 = vadd.f32 0.0, %v4719
      %v4721 = vpop.f32.mrf.mxu0
      %v4722 = vpop.f32.mrf.mxu0
      %v4723 = vadd.f32 0.0, %v4722
      %v4724 = vpop.f32.mrf.mxu0
      %4725 = vmatprep.mubr.bf16.mxu0 0
      %4726 = vmatmul.mubr.bf16.gmra.mxu0 %v4568
      %v4727 = vpop.f32.mrf.mxu0
      %v4728 = vadd.f32 0.0, %v4727
      %v4729 = vpop.f32.mrf.mxu0
      %v4730 = vpop.f32.mrf.mxu0
      %v4731 = vadd.f32 0.0, %v4730
      %v4732 = vpop.f32.mrf.mxu0
      %4733 = vdwg.mxu0
      %v4734 = vadd.f32 %v4472, %v4608
      %v4735 = vadd.f32 %v4473, %v4611
      %v4736 = vadd.f32 %v4474, %v4616
      %v4737 = vadd.f32 %v4475, %v4619
      %v4738 = vadd.f32 %v4476, %v4624
      %v4739 = vadd.f32 %v4477, %v4627
      %v4740 = vadd.f32 %v4478, %v4632
      %v4741 = vadd.f32 %v4479, %v4635
      %v4742 = vadd.f32 %v4480, %v4640
      %v4743 = vadd.f32 %v4481, %v4643
      %v4744 = vadd.f32 %v4482, %v4648
      %v4745 = vadd.f32 %v4483, %v4651
      %v4746 = vadd.f32 %v4484, %v4656
      %v4747 = vadd.f32 %v4485, %v4659
      %v4748 = vadd.f32 %v4486, %v4664
      %v4749 = vadd.f32 %v4487, %v4667
      %v4750 = vadd.f32 %v4488, %v4672
      %v4751 = vadd.f32 %v4489, %v4675
      %v4752 = vadd.f32 %v4490, %v4680
      %v4753 = vadd.f32 %v4491, %v4683
      %v4754 = vadd.f32 %v4492, %v4688
      %v4755 = vadd.f32 %v4493, %v4691
      %v4756 = vadd.f32 %v4494, %v4696
      %v4757 = vadd.f32 %v4495, %v4699
      %v4758 = vadd.f32 %v4496, %v4704
      %v4759 = vadd.f32 %v4497, %v4707
      %v4760 = vadd.f32 %v4498, %v4712
      %v4761 = vadd.f32 %v4499, %v4715
      %v4762 = vadd.f32 %v4500, %v4720
      %v4763 = vadd.f32 %v4501, %v4723
      %v4764 = vadd.f32 %v4502, %v4728
      %v4765 = vadd.f32 %v4503, %v4731
      %v4766 = vld [vmem:[%s4] sm:$0x1]
      %v4768 = vlaneseq
      %v4769 = vshrl.u32 %v4768, 7
      %v4770 = vsub.s32 0, %v4769
      %v4771 = vrot.slane %v4766, %v4770
      %v4773 = vadd.f32 %v4734, %v4771
      %v4774 = vadd.f32 %v4735, %v4771
      %v4775 = vadd.f32 %v4736, %v4771
      %v4776 = vadd.f32 %v4737, %v4771
      %v4777 = vadd.f32 %v4738, %v4771
      %v4778 = vadd.f32 %v4739, %v4771
      %v4779 = vadd.f32 %v4740, %v4771
      %v4780 = vadd.f32 %v4741, %v4771
      %v4781 = vadd.f32 %v4742, %v4771
      %v4782 = vadd.f32 %v4743, %v4771
      %v4783 = vadd.f32 %v4744, %v4771
      %v4784 = vadd.f32 %v4745, %v4771
      %v4785 = vadd.f32 %v4746, %v4771
      %v4786 = vadd.f32 %v4747, %v4771
      %v4787 = vadd.f32 %v4748, %v4771
      %v4788 = vadd.f32 %v4749, %v4771
      %v4789 = vadd.f32 %v4750, %v4771
      %v4790 = vadd.f32 %v4751, %v4771
      %v4791 = vadd.f32 %v4752, %v4771
      %v4792 = vadd.f32 %v4753, %v4771
      %v4793 = vadd.f32 %v4754, %v4771
      %v4794 = vadd.f32 %v4755, %v4771
      %v4795 = vadd.f32 %v4756, %v4771
      %v4796 = vadd.f32 %v4757, %v4771
      %v4797 = vadd.f32 %v4758, %v4771
      %v4798 = vadd.f32 %v4759, %v4771
      %v4799 = vadd.f32 %v4760, %v4771
      %v4800 = vadd.f32 %v4761, %v4771
      %v4801 = vadd.f32 %v4762, %v4771
      %v4802 = vadd.f32 %v4763, %v4771
      %v4803 = vadd.f32 %v4764, %v4771
      %v4804 = vadd.f32 %v4765, %v4771
      %v4805 = vmax.f32 %v4773, 0.0
      %v4806 = vmax.f32 %v4774, 0.0
      %v4807 = vmax.f32 %v4775, 0.0
      %v4808 = vmax.f32 %v4776, 0.0
      %v4809 = vmax.f32 %v4777, 0.0
      %v4810 = vmax.f32 %v4778, 0.0
      %v4811 = vmax.f32 %v4779, 0.0
      %v4812 = vmax.f32 %v4780, 0.0
      %v4813 = vmax.f32 %v4781, 0.0
      %v4814 = vmax.f32 %v4782, 0.0
      %v4815 = vmax.f32 %v4783, 0.0
      %v4816 = vmax.f32 %v4784, 0.0
      %v4817 = vmax.f32 %v4785, 0.0
      %v4818 = vmax.f32 %v4786, 0.0
      %v4819 = vmax.f32 %v4787, 0.0
      %v4820 = vmax.f32 %v4788, 0.0
      %v4821 = vmax.f32 %v4789, 0.0
      %v4822 = vmax.f32 %v4790, 0.0
      %v4823 = vmax.f32 %v4791, 0.0
      %v4824 = vmax.f32 %v4792, 0.0
      %v4825 = vmax.f32 %v4793, 0.0
      %v4826 = vmax.f32 %v4794, 0.0
      %v4827 = vmax.f32 %v4795, 0.0
      %v4828 = vmax.f32 %v4796, 0.0
      %v4829 = vmax.f32 %v4797, 0.0
      %v4830 = vmax.f32 %v4798, 0.0
      %v4831 = vmax.f32 %v4799, 0.0
      %v4832 = vmax.f32 %v4800, 0.0
      %v4833 = vmax.f32 %v4801, 0.0
      %v4834 = vmax.f32 %v4802, 0.0
      %v4835 = vmax.f32 %v4803, 0.0
      %v4836 = vmax.f32 %v4804, 0.0
      %v4837 = vpack.c.bf16 %v4806, %v4805
      %v4838 = vpack.c.bf16 %v4808, %v4807
      %v4839 = vpack.c.bf16 %v4810, %v4809
      %v4840 = vpack.c.bf16 %v4812, %v4811
      %v4841 = vpack.c.bf16 %v4814, %v4813
      %v4842 = vpack.c.bf16 %v4816, %v4815
      %v4843 = vpack.c.bf16 %v4818, %v4817
      %v4844 = vpack.c.bf16 %v4820, %v4819
      %v4845 = vpack.c.bf16 %v4822, %v4821
      %v4846 = vpack.c.bf16 %v4824, %v4823
      %v4847 = vpack.c.bf16 %v4826, %v4825
      %v4848 = vpack.c.bf16 %v4828, %v4827
      %v4849 = vpack.c.bf16 %v4830, %v4829
      %v4850 = vpack.c.bf16 %v4832, %v4831
      %v4851 = vpack.c.bf16 %v4834, %v4833
      %v4852 = vpack.c.bf16 %v4836, %v4835
      %v4853 = vld [vmem:[%s5] sm:$0x3]
      %v4854 = vld [vmem:[%s6] sm:$0x1]
      %v4856 = vlaneseq
      %v4857 = vshrl.u32 %v4856, 7
      %v4858 = vsub.s32 0, %v4857
      %v4859 = vrot.slane %v4854, %v4858
      %v4862 = vsel %vm677, %v4837, 0
      %v4865 = vsel %vm677, %v4838, 0
      %v4868 = vsel %vm677, %v4839, 0
      %v4871 = vsel %vm677, %v4840, 0
      %v4874 = vsel %vm677, %v4841, 0
      %v4877 = vsel %vm677, %v4842, 0
      %v4880 = vsel %vm677, %v4843, 0
      %v4883 = vsel %vm677, %v4844, 0
      %v4886 = vsel %vm677, %v4845, 0
      %v4889 = vsel %vm677, %v4846, 0
      %v4892 = vsel %vm677, %v4847, 0
      %v4895 = vsel %vm677, %v4848, 0
      %v4898 = vsel %vm677, %v4849, 0
      %v4901 = vsel %vm677, %v4850, 0
      %v4904 = vsel %vm677, %v4851, 0
      %v4907 = vsel %vm677, %v4852, 0
      %v4910 = vsel %vm1903, %v4853, 0
      %4912 = vmatprep.subr.bf16.mxu0 0
      %4913 = vmatpush1.bf16.msra.mxu0 0
      %4914 = vmatprep.subr.bf16.mxu0 0
      %4915 = vmatpush1.bf16.msra.mxu0 0
      %4916 = vmatprep.subr.bf16.mxu0 0
      %4917 = vmatpush1.bf16.msra.mxu0 0
      %4918 = vmatprep.subr.bf16.mxu0 0
      %4919 = vmatpush1.bf16.msra.mxu0 0
      %4920 = vmatprep.subr.bf16.mxu0 0
      %4921 = vmatpush1.bf16.msra.mxu0 0
      %4922 = vmatprep.subr.bf16.mxu0 0
      %4923 = vmatpush1.bf16.msra.mxu0 0
      %4924 = vmatprep.subr.bf16.mxu0 0
      %4925 = vmatpush1.bf16.msra.mxu0 0
      %4926 = vmatprep.subr.bf16.mxu0 0
      %4927 = vmatpush1.bf16.msra.mxu0 %v4910
      %4928 = vmatprep.subr.bf16.mxu0 0
      %4929 = vmatpush2.bf16.msra.mxu0 0
      %4930 = vmatprep.subr.bf16.mxu0 0
      %4931 = vmatpush2.bf16.msra.mxu0 0
      %4932 = vmatprep.subr.bf16.mxu0 0
      %4933 = vmatpush2.bf16.msra.mxu0 0
      %4934 = vmatprep.subr.bf16.mxu0 0
      %4935 = vmatpush2.bf16.msra.mxu0 0
      %4936 = vmatprep.subr.bf16.mxu0 0
      %4937 = vmatpush2.bf16.msra.mxu0 0
      %4938 = vmatprep.subr.bf16.mxu0 0
      %4939 = vmatpush2.bf16.msra.mxu0 0
      %4940 = vmatprep.subr.bf16.mxu0 0
      %4941 = vmatpush2.bf16.msra.mxu0 0
      %4942 = vmatprep.subr.bf16.mxu0 0
      %4943 = vmatpush2.bf16.msra.mxu0 0
      %4944 = vmatprep.mubr.bf16.mxu0 0
      %4945 = vmatmul.mubr.bf16.gmra.mxu0 %v4862
      %v4946 = vpop.f32.mrf.mxu0
      %v4947 = vadd.f32 %v4859, %v4946
      %v4948 = vpop.f32.mrf.mxu0
      %v4949 = vpop.f32.mrf.mxu0
      %v4950 = vadd.f32 %v4859, %v4949
      %v4951 = vpop.f32.mrf.mxu0
      %4952 = vmatprep.mubr.bf16.mxu0 0
      %4953 = vmatmul.mubr.bf16.gmra.mxu0 %v4865
      %v4954 = vpop.f32.mrf.mxu0
      %v4955 = vadd.f32 %v4859, %v4954
      %v4956 = vpop.f32.mrf.mxu0
      %v4957 = vpop.f32.mrf.mxu0
      %v4958 = vadd.f32 %v4859, %v4957
      %v4959 = vpop.f32.mrf.mxu0
      %4960 = vmatprep.mubr.bf16.mxu0 0
      %4961 = vmatmul.mubr.bf16.gmra.mxu0 %v4868
      %v4962 = vpop.f32.mrf.mxu0
      %v4963 = vadd.f32 %v4859, %v4962
      %v4964 = vpop.f32.mrf.mxu0
      %v4965 = vpop.f32.mrf.mxu0
      %v4966 = vadd.f32 %v4859, %v4965
      %v4967 = vpop.f32.mrf.mxu0
      %4968 = vmatprep.mubr.bf16.mxu0 0
      %4969 = vmatmul.mubr.bf16.gmra.mxu0 %v4871
      %v4970 = vpop.f32.mrf.mxu0
      %v4971 = vadd.f32 %v4859, %v4970
      %v4972 = vpop.f32.mrf.mxu0
      %v4973 = vpop.f32.mrf.mxu0
      %v4974 = vadd.f32 %v4859, %v4973
      %v4975 = vpop.f32.mrf.mxu0
      %4976 = vmatprep.mubr.bf16.mxu0 0
      %4977 = vmatmul.mubr.bf16.gmra.mxu0 %v4874
      %v4978 = vpop.f32.mrf.mxu0
      %v4979 = vadd.f32 %v4859, %v4978
      %v4980 = vpop.f32.mrf.mxu0
      %v4981 = vpop.f32.mrf.mxu0
      %v4982 = vadd.f32 %v4859, %v4981
      %v4983 = vpop.f32.mrf.mxu0
      %4984 = vmatprep.mubr.bf16.mxu0 0
      %4985 = vmatmul.mubr.bf16.gmra.mxu0 %v4877
      %v4986 = vpop.f32.mrf.mxu0
      %v4987 = vadd.f32 %v4859, %v4986
      %v4988 = vpop.f32.mrf.mxu0
      %v4989 = vpop.f32.mrf.mxu0
      %v4990 = vadd.f32 %v4859, %v4989
      %v4991 = vpop.f32.mrf.mxu0
      %4992 = vmatprep.mubr.bf16.mxu0 0
      %4993 = vmatmul.mubr.bf16.gmra.mxu0 %v4880
      %v4994 = vpop.f32.mrf.mxu0
      %v4995 = vadd.f32 %v4859, %v4994
      %v4996 = vpop.f32.mrf.mxu0
      %v4997 = vpop.f32.mrf.mxu0
      %v4998 = vadd.f32 %v4859, %v4997
      %v4999 = vpop.f32.mrf.mxu0
      %5000 = vmatprep.mubr.bf16.mxu0 0
      %5001 = vmatmul.mubr.bf16.gmra.mxu0 %v4883
      %v5002 = vpop.f32.mrf.mxu0
      %v5003 = vadd.f32 %v4859, %v5002
      %v5004 = vpop.f32.mrf.mxu0
      %v5005 = vpop.f32.mrf.mxu0
      %v5006 = vadd.f32 %v4859, %v5005
      %v5007 = vpop.f32.mrf.mxu0
      %5008 = vmatprep.mubr.bf16.mxu0 0
      %5009 = vmatmul.mubr.bf16.gmra.mxu0 %v4886
      %v5010 = vpop.f32.mrf.mxu0
      %v5011 = vadd.f32 %v4859, %v5010
      %v5012 = vpop.f32.mrf.mxu0
      %v5013 = vpop.f32.mrf.mxu0
      %v5014 = vadd.f32 %v4859, %v5013
      %v5015 = vpop.f32.mrf.mxu0
      %5016 = vmatprep.mubr.bf16.mxu0 0
      %5017 = vmatmul.mubr.bf16.gmra.mxu0 %v4889
      %v5018 = vpop.f32.mrf.mxu0
      %v5019 = vadd.f32 %v4859, %v5018
      %v5020 = vpop.f32.mrf.mxu0
      %v5021 = vpop.f32.mrf.mxu0
      %v5022 = vadd.f32 %v4859, %v5021
      %v5023 = vpop.f32.mrf.mxu0
      %5024 = vmatprep.mubr.bf16.mxu0 0
      %5025 = vmatmul.mubr.bf16.gmra.mxu0 %v4892
      %v5026 = vpop.f32.mrf.mxu0
      %v5027 = vadd.f32 %v4859, %v5026
      %v5028 = vpop.f32.mrf.mxu0
      %v5029 = vpop.f32.mrf.mxu0
      %v5030 = vadd.f32 %v4859, %v5029
      %v5031 = vpop.f32.mrf.mxu0
      %5032 = vmatprep.mubr.bf16.mxu0 0
      %5033 = vmatmul.mubr.bf16.gmra.mxu0 %v4895
      %v5034 = vpop.f32.mrf.mxu0
      %v5035 = vadd.f32 %v4859, %v5034
      %v5036 = vpop.f32.mrf.mxu0
      %v5037 = vpop.f32.mrf.mxu0
      %v5038 = vadd.f32 %v4859, %v5037
      %v5039 = vpop.f32.mrf.mxu0
      %5040 = vmatprep.mubr.bf16.mxu0 0
      %5041 = vmatmul.mubr.bf16.gmra.mxu0 %v4898
      %v5042 = vpop.f32.mrf.mxu0
      %v5043 = vadd.f32 %v4859, %v5042
      %v5044 = vpop.f32.mrf.mxu0
      %v5045 = vpop.f32.mrf.mxu0
      %v5046 = vadd.f32 %v4859, %v5045
      %v5047 = vpop.f32.mrf.mxu0
      %5048 = vmatprep.mubr.bf16.mxu0 0
      %5049 = vmatmul.mubr.bf16.gmra.mxu0 %v4901
      %v5050 = vpop.f32.mrf.mxu0
      %v5051 = vadd.f32 %v4859, %v5050
      %v5052 = vpop.f32.mrf.mxu0
      %v5053 = vpop.f32.mrf.mxu0
      %v5054 = vadd.f32 %v4859, %v5053
      %v5055 = vpop.f32.mrf.mxu0
      %5056 = vmatprep.mubr.bf16.mxu0 0
      %5057 = vmatmul.mubr.bf16.gmra.mxu0 %v4904
      %v5058 = vpop.f32.mrf.mxu0
      %v5059 = vadd.f32 %v4859, %v5058
      %v5060 = vpop.f32.mrf.mxu0
      %v5061 = vpop.f32.mrf.mxu0
      %v5062 = vadd.f32 %v4859, %v5061
      %v5063 = vpop.f32.mrf.mxu0
      %5064 = vmatprep.mubr.bf16.mxu0 0
      %5065 = vmatmul.mubr.bf16.gmra.mxu0 %v4907
      %v5066 = vpop.f32.mrf.mxu0
      %v5067 = vadd.f32 %v4859, %v5066
      %v5068 = vpop.f32.mrf.mxu0
      %v5069 = vpop.f32.mrf.mxu0
      %v5070 = vadd.f32 %v4859, %v5069
      %v5071 = vpop.f32.mrf.mxu0
      %5072 = vdwg.mxu0
      %v5073 = vunpack.c.l.bf16 %v308
      %v5074 = vunpack.c.l.bf16 %v309
      %v5075 = vunpack.c.l.bf16 %v310
      %v5076 = vunpack.c.l.bf16 %v311
      %v5077 = vunpack.c.l.bf16 %v312
      %v5078 = vunpack.c.l.bf16 %v313
      %v5079 = vunpack.c.l.bf16 %v314
      %v5080 = vunpack.c.l.bf16 %v315
      %v5081 = vunpack.c.l.bf16 %v316
      %v5082 = vunpack.c.l.bf16 %v317
      %v5083 = vunpack.c.l.bf16 %v318
      %v5084 = vunpack.c.l.bf16 %v319
      %v5085 = vunpack.c.l.bf16 %v320
      %v5086 = vunpack.c.l.bf16 %v321
      %v5087 = vunpack.c.l.bf16 %v322
      %v5088 = vunpack.c.l.bf16 %v323
      %v5089 = vunpack.c.l.bf16 %v324
      %v5090 = vunpack.c.l.bf16 %v325
      %v5091 = vunpack.c.l.bf16 %v326
      %v5092 = vunpack.c.l.bf16 %v327
      %v5093 = vunpack.c.l.bf16 %v328
      %v5094 = vunpack.c.l.bf16 %v329
      %v5095 = vunpack.c.l.bf16 %v330
      %v5096 = vunpack.c.l.bf16 %v331
      %v5097 = vunpack.c.l.bf16 %v332
      %v5098 = vunpack.c.l.bf16 %v333
      %v5099 = vunpack.c.l.bf16 %v334
      %v5100 = vunpack.c.l.bf16 %v335
      %v5101 = vunpack.c.l.bf16 %v336
      %v5102 = vunpack.c.l.bf16 %v337
      %v5103 = vunpack.c.l.bf16 %v338
      %v5104 = vunpack.c.l.bf16 %v339
      %v5105 = vadd.f32 %v4947, %v5073
      %v5106 = vadd.f32 %v4950, %v5074
      %v5107 = vadd.f32 %v4955, %v5075
      %v5108 = vadd.f32 %v4958, %v5076
      %v5109 = vadd.f32 %v4963, %v5077
      %v5110 = vadd.f32 %v4966, %v5078
      %v5111 = vadd.f32 %v4971, %v5079
      %v5112 = vadd.f32 %v4974, %v5080
      %v5113 = vadd.f32 %v4979, %v5081
      %v5114 = vadd.f32 %v4982, %v5082
      %v5115 = vadd.f32 %v4987, %v5083
      %v5116 = vadd.f32 %v4990, %v5084
      %v5117 = vadd.f32 %v4995, %v5085
      %v5118 = vadd.f32 %v4998, %v5086
      %v5119 = vadd.f32 %v5003, %v5087
      %v5120 = vadd.f32 %v5006, %v5088
      %v5121 = vadd.f32 %v5011, %v5089
      %v5122 = vadd.f32 %v5014, %v5090
      %v5123 = vadd.f32 %v5019, %v5091
      %v5124 = vadd.f32 %v5022, %v5092
      %v5125 = vadd.f32 %v5027, %v5093
      %v5126 = vadd.f32 %v5030, %v5094
      %v5127 = vadd.f32 %v5035, %v5095
      %v5128 = vadd.f32 %v5038, %v5096
      %v5129 = vadd.f32 %v5043, %v5097
      %v5130 = vadd.f32 %v5046, %v5098
      %v5131 = vadd.f32 %v5051, %v5099
      %v5132 = vadd.f32 %v5054, %v5100
      %v5133 = vadd.f32 %v5059, %v5101
      %v5134 = vadd.f32 %v5062, %v5102
      %v5135 = vadd.f32 %v5067, %v5103
      %v5136 = vadd.f32 %v5070, %v5104
      %v5137 = vmax.f32 %v5105, 0.0
      %v5138 = vmax.f32 %v5106, 0.0
      %v5139 = vmax.f32 %v5107, 0.0
      %v5140 = vmax.f32 %v5108, 0.0
      %v5141 = vmax.f32 %v5109, 0.0
      %v5142 = vmax.f32 %v5110, 0.0
      %v5143 = vmax.f32 %v5111, 0.0
      %v5144 = vmax.f32 %v5112, 0.0
      %v5145 = vmax.f32 %v5113, 0.0
      %v5146 = vmax.f32 %v5114, 0.0
      %v5147 = vmax.f32 %v5115, 0.0
      %v5148 = vmax.f32 %v5116, 0.0
      %v5149 = vmax.f32 %v5117, 0.0
      %v5150 = vmax.f32 %v5118, 0.0
      %v5151 = vmax.f32 %v5119, 0.0
      %v5152 = vmax.f32 %v5120, 0.0
      %v5153 = vmax.f32 %v5121, 0.0
      %v5154 = vmax.f32 %v5122, 0.0
      %v5155 = vmax.f32 %v5123, 0.0
      %v5156 = vmax.f32 %v5124, 0.0
      %v5157 = vmax.f32 %v5125, 0.0
      %v5158 = vmax.f32 %v5126, 0.0
      %v5159 = vmax.f32 %v5127, 0.0
      %v5160 = vmax.f32 %v5128, 0.0
      %v5161 = vmax.f32 %v5129, 0.0
      %v5162 = vmax.f32 %v5130, 0.0
      %v5163 = vmax.f32 %v5131, 0.0
      %v5164 = vmax.f32 %v5132, 0.0
      %v5165 = vmax.f32 %v5133, 0.0
      %v5166 = vmax.f32 %v5134, 0.0
      %v5167 = vmax.f32 %v5135, 0.0
      %v5168 = vmax.f32 %v5136, 0.0
      %v5169 = vpack.c.bf16 %v5138, %v5137
      %v5170 = vpack.c.bf16 %v5140, %v5139
      %v5171 = vpack.c.bf16 %v5142, %v5141
      %v5172 = vpack.c.bf16 %v5144, %v5143
      %v5173 = vpack.c.bf16 %v5146, %v5145
      %v5174 = vpack.c.bf16 %v5148, %v5147
      %v5175 = vpack.c.bf16 %v5150, %v5149
      %v5176 = vpack.c.bf16 %v5152, %v5151
      %v5177 = vpack.c.bf16 %v5154, %v5153
      %v5178 = vpack.c.bf16 %v5156, %v5155
      %v5179 = vpack.c.bf16 %v5158, %v5157
      %v5180 = vpack.c.bf16 %v5160, %v5159
      %v5181 = vpack.c.bf16 %v5162, %v5161
      %v5182 = vpack.c.bf16 %v5164, %v5163
      %v5183 = vpack.c.bf16 %v5166, %v5165
      %v5184 = vpack.c.bf16 %v5168, %v5167
      %v5201 = vunpack.c.l.b16 %v5169
      %v5202 = vunpack.c.h.b16 %v5169
      %v5203 = vunpack.c.l.b16 %v5170
      %v5204 = vunpack.c.h.b16 %v5170
      %v5205 = vunpack.c.l.b16 %v5171
      %v5206 = vunpack.c.h.b16 %v5171
      %v5207 = vunpack.c.l.b16 %v5172
      %v5208 = vunpack.c.h.b16 %v5172
      %v5209 = vunpack.c.l.b16 %v5173
      %v5210 = vunpack.c.h.b16 %v5173
      %v5211 = vunpack.c.l.b16 %v5174
      %v5212 = vunpack.c.h.b16 %v5174
      %v5213 = vunpack.c.l.b16 %v5175
      %v5214 = vunpack.c.h.b16 %v5175
      %v5215 = vunpack.c.l.b16 %v5176
      %v5216 = vunpack.c.h.b16 %v5176
      %v5217 = vunpack.c.l.b16 %v5177
      %v5218 = vunpack.c.h.b16 %v5177
      %v5219 = vunpack.c.l.b16 %v5178
      %v5220 = vunpack.c.h.b16 %v5178
      %v5221 = vunpack.c.l.b16 %v5179
      %v5222 = vunpack.c.h.b16 %v5179
      %v5223 = vunpack.c.l.b16 %v5180
      %v5224 = vunpack.c.h.b16 %v5180
      %v5225 = vunpack.c.l.b16 %v5181
      %v5226 = vunpack.c.h.b16 %v5181
      %v5227 = vunpack.c.l.b16 %v5182
      %v5228 = vunpack.c.h.b16 %v5182
      %v5229 = vunpack.c.l.b16 %v5183
      %v5230 = vunpack.c.h.b16 %v5183
      %v5231 = vunpack.c.l.b16 %v5184
      %v5232 = vunpack.c.h.b16 %v5184
      %v5233 = vpack.c.b16 %v5201, %v5201
      %v5234 = vpack.c.b16 %v5202, %v5202
      %v5235 = vpack.c.b16 %v5203, %v5203
      %v5236 = vpack.c.b16 %v5204, %v5204
      %v5237 = vpack.c.b16 %v5205, %v5205
      %v5238 = vpack.c.b16 %v5206, %v5206
      %v5239 = vpack.c.b16 %v5207, %v5207
      %v5240 = vpack.c.b16 %v5208, %v5208
      %v5241 = vpack.c.b16 %v5209, %v5209
      %v5242 = vpack.c.b16 %v5210, %v5210
      %v5243 = vpack.c.b16 %v5211, %v5211
      %v5244 = vpack.c.b16 %v5212, %v5212
      %v5245 = vpack.c.b16 %v5213, %v5213
      %v5246 = vpack.c.b16 %v5214, %v5214
      %v5247 = vpack.c.b16 %v5215, %v5215
      %v5248 = vpack.c.b16 %v5216, %v5216
      %v5249 = vpack.c.b16 %v5217, %v5217
      %v5250 = vpack.c.b16 %v5218, %v5218
      %v5251 = vpack.c.b16 %v5219, %v5219
      %v5252 = vpack.c.b16 %v5220, %v5220
      %v5253 = vpack.c.b16 %v5221, %v5221
      %v5254 = vpack.c.b16 %v5222, %v5222
      %v5255 = vpack.c.b16 %v5223, %v5223
      %v5256 = vpack.c.b16 %v5224, %v5224
      %v5257 = vpack.c.b16 %v5225, %v5225
      %v5258 = vpack.c.b16 %v5226, %v5226
      %v5259 = vpack.c.b16 %v5227, %v5227
      %v5260 = vpack.c.b16 %v5228, %v5228
      %v5261 = vpack.c.b16 %v5229, %v5229
      %v5262 = vpack.c.b16 %v5230, %v5230
      %v5263 = vpack.c.b16 %v5231, %v5231
      %v5264 = vpack.c.b16 %v5232, %v5232
      %vm5297 = vcmask 125952
      %5298 = vst.msk [vmem:[%s300] sm:$0xf] %vm5297, %v5233
      %5299 = vst.msk [vmem:[%s300 + $0x4] sm:$0xf] %vm5297, %v5234
      %5300 = vst.msk [vmem:[%s300 + $0x8] sm:$0xf] %vm5297, %v5235
      %5301 = vst.msk [vmem:[%s300 + $0xc] sm:$0xf] %vm5297, %v5236
      %5302 = vst.msk [vmem:[%s300 + $0x10] sm:$0xf] %vm5297, %v5237
      %5303 = vst.msk [vmem:[%s300 + $0x14] sm:$0xf] %vm5297, %v5238
      %5304 = vst.msk [vmem:[%s300 + $0x18] sm:$0xf] %vm5297, %v5239
      %5305 = vst.msk [vmem:[%s300 + $0x1c] sm:$0xf] %vm5297, %v5240
      %5306 = vst.msk [vmem:[%s300 + $0x20] sm:$0xf] %vm5297, %v5241
      %5307 = vst.msk [vmem:[%s300 + $0x24] sm:$0xf] %vm5297, %v5242
      %5308 = vst.msk [vmem:[%s300 + $0x28] sm:$0xf] %vm5297, %v5243
      %5309 = vst.msk [vmem:[%s300 + $0x2c] sm:$0xf] %vm5297, %v5244
      %5310 = vst.msk [vmem:[%s300 + $0x30] sm:$0xf] %vm5297, %v5245
      %5311 = vst.msk [vmem:[%s300 + $0x34] sm:$0xf] %vm5297, %v5246
      %5312 = vst.msk [vmem:[%s300 + $0x38] sm:$0xf] %vm5297, %v5247
      %5313 = vst.msk [vmem:[%s300 + $0x3c] sm:$0xf] %vm5297, %v5248
      %5314 = vst.msk [vmem:[%s300 + $0x40] sm:$0xf] %vm5297, %v5249
      %5315 = vst.msk [vmem:[%s300 + $0x44] sm:$0xf] %vm5297, %v5250
      %5316 = vst.msk [vmem:[%s300 + $0x48] sm:$0xf] %vm5297, %v5251
      %5317 = vst.msk [vmem:[%s300 + $0x4c] sm:$0xf] %vm5297, %v5252
      %5318 = vst.msk [vmem:[%s300 + $0x50] sm:$0xf] %vm5297, %v5253
      %5319 = vst.msk [vmem:[%s300 + $0x54] sm:$0xf] %vm5297, %v5254
      %5320 = vst.msk [vmem:[%s300 + $0x58] sm:$0xf] %vm5297, %v5255
      %5321 = vst.msk [vmem:[%s300 + $0x5c] sm:$0xf] %vm5297, %v5256
      %5322 = vst.msk [vmem:[%s300 + $0x60] sm:$0xf] %vm5297, %v5257
      %5323 = vst.msk [vmem:[%s300 + $0x64] sm:$0xf] %vm5297, %v5258
      %5324 = vst.msk [vmem:[%s300 + $0x68] sm:$0xf] %vm5297, %v5259
      %5325 = vst.msk [vmem:[%s300 + $0x6c] sm:$0xf] %vm5297, %v5260
      %5326 = vst.msk [vmem:[%s300 + $0x70] sm:$0xf] %vm5297, %v5261
      %5327 = vst.msk [vmem:[%s300 + $0x74] sm:$0xf] %vm5297, %v5262
      %5328 = vst.msk [vmem:[%s300 + $0x78] sm:$0xf] %vm5297, %v5263
      %5329 = vst.msk [vmem:[%s300 + $0x7c] sm:$0xf] %vm5297, %v5264
      %s5330 = smul.u32 32, %s23
      %p5331 = scmp.lt.s32.totalorder %s22, 1
      %s5332 = scalar_select %p5331, %s22, 1
      %p5333 = scmp.lt.s32.totalorder %s5330, 31
      %s5334 = scalar_select %p5333, %s5330, 31
      %s5335 = smul.addr %s5332, 32
      %s5336 = sadd.s32 %s5334, %s5335
      %s5337 = smul.addr %s5336, 4
      %s5338 = scalar_lea.vmem %s7, %s5337
      // Predicated region
      $region65: #{tpu_custom_call.1} parent=47 // pred_check
        %p5339 = pneg %p202
      $region66: #{tpu_custom_call.1} parent=47 // pred_check_branch
        %5341 = sbr.rel (%p5339) target = $region68
      $region67: #{tpu_custom_call.1} parent=47 // pred_region
        %s5342 = smul.u32 32, %s23
      $region68: #{tpu_custom_call.1} parent=47 // pred_fallthru
        _
    $region48: #{tpu_custom_call.1} parent=5 // pred_fallthru
      _
    %p5343 = scmp.le.s32.totalorder 2, %s13
    // Predicated region
    $region69: #{tpu_custom_call.1} parent=5 // pred_check
      %p5344 = pneg %p5343
    $region70: #{tpu_custom_call.1} parent=5 // pred_check_branch
      %5346 = sbr.rel (%p5344) target = $region72
    $region71: #{tpu_custom_call.1} parent=5 // pred_region
      %s5347 = ssub.s32 %s13, 2
      // Predicated region
      $region73: #{tpu_custom_call.1} parent=71 // pred_check
        %p5348 = pneg %p208
      $region74: #{tpu_custom_call.1} parent=71 // pred_check_branch
        %5350 = sbr.rel (%p5348) target = $region76
      $region75: #{tpu_custom_call.1} parent=71 // pred_region
        %s5351 = smul.u32 32, %s25
        %p5352 = scmp.lt.s32.totalorder %s24, 1
        %s5353 = scalar_select %p5352, %s24, 1
        %p5354 = scmp.lt.s32.totalorder %s5351, 31
        %s5355 = scalar_select %p5354, %s5351, 31
        %s5356 = smul.addr %s5353, 32
        %s5357 = sadd.s32 %s5355, %s5356
        %s5358 = smul.addr %s5357, 4
        %s5359 = scalar_lea.vmem %s7, %s5358
      $region76: #{tpu_custom_call.1} parent=71 // pred_fallthru
        _
    $region72: #{tpu_custom_call.1} parent=5 // pred_fallthru
      _
  $region6: #{tpu_custom_call.1} parent=0 // loop_footer
    %s17 = sadd.s32 1, %s13
  $region7: #{tpu_custom_call.1} parent=0 // loop_footer_branch
    %12 = sbr.rel target = $region3
  $region8: #{tpu_custom_call.1} parent=0 // loop_exit
    _

</llo_original>
